<compile_context>
chip_gen: v5e
topology: v5e:2x2
jax: 0.10.0
libtpu: 0.0.40
codegen_flags: <defaults>
</compile_context>

<pallas_src>
import jax
import jax.numpy as jnp
from jax.experimental import pallas as pl
from jax.experimental.pallas import tpu as pltpu

# ----------------------------- model dims (small) -----------------------------
B = 2            # batch size
SRC_LEN = 8      # source sequence length
IN_VOCAB = 16    # input_dim (vocab)
EMB = 16         # emb_dim
HID = 32         # hidden_dim
N_LAYERS = 2     # n_layers

VMEM_SPEC = pl.BlockSpec(memory_space=pltpu.MemorySpace.VMEM)


# ----------------------------- fused Pallas kernel -----------------------------
def _encoder_kernel(src_ref, tbl0_ref, wih_ref, whh_ref, bias_ref, hid_ref):
    """Fused Encoder forward (single launch).

    src_ref  : [S, B]              int32 token ids (time-major)
    tbl0_ref : [3, V, H]           bf16  (emb @ W_ih0 per gate, biases folded)
    wih_ref  : [L-1, 3, H, H]      bf16  input->gate weights, layers >= 1
    whh_ref  : [L, 3, H, H]        bf16  hidden->gate weights
    bias_ref : [L, 4, 1, H]        f32   [b_r(ih+hh), b_z(ih+hh), b_in, b_hn]
    hid_ref  : [L, B, H]           f32   final hidden state per layer (output)
    """
    f32 = jnp.float32
    bf16 = jnp.bfloat16
    H = HID

    # --- embedding + layer-0 input projection: one hoisted one-hot matmul/gate ---
    ids = src_ref[...]                                                  # [S, B]
    vocab = jax.lax.broadcasted_iota(jnp.int32, (1, 1, IN_VOCAB), 2)    # [1, 1, V]
    onehot = (ids[:, :, None] == vocab).astype(f32).astype(bf16)        # [S, B, V]

    def in_proj0(g):
        return jax.lax.dot_general(
            onehot, tbl0_ref[g],
            dimension_numbers=(((2,), (0,)), ((), ())),
            preferred_element_type=f32)                                 # [S, B, H]

    gi0 = [in_proj0(g) for g in range(3)]        # r, z, n slabs (biases pre-folded)

    # --- hoist per-layer weights and bias broadcasts out of the recurrence ---
    whh = [[whh_ref[l, g] for g in range(3)] for l in range(N_LAYERS)]
    wih = [[wih_ref[l - 1, g] for g in range(3)] for l in range(1, N_LAYERS)]
    bhn = [jnp.broadcast_to(bias_ref[l, 3], (B, H)) for l in range(N_LAYERS)]
    br = [None] + [jnp.broadcast_to(bias_ref[l, 0], (B, H)) for l in range(1, N_LAYERS)]
    bz = [None] + [jnp.broadcast_to(bias_ref[l, 1], (B, H)) for l in range(1, N_LAYERS)]
    bn = [None] + [jnp.broadcast_to(bias_ref[l, 2], (B, H)) for l in range(1, N_LAYERS)]

    hs = [jnp.zeros((B, H), f32) for _ in range(N_LAYERS)]

    # Wavefront-friendly dataflow: layer l step t depends only on (l, t-1) and
    # (l-1, t), so consecutive layers' serial chains can overlap diagonally.
    for t in range(SRC_LEN):
        inp = None
        for l in range(N_LAYERS):
            if l == 0:
                gi_r, gi_z, gi_n = gi0[0][t], gi0[1][t], gi0[2][t]
            else:
                x_b = inp.astype(bf16)
                gi_r = jnp.dot(x_b, wih[l - 1][0], preferred_element_type=f32) + br[l]
                gi_z = jnp.dot(x_b, wih[l - 1][1], preferred_element_type=f32) + bz[l]
                gi_n = jnp.dot(x_b, wih[l - 1][2], preferred_element_type=f32) + bn[l]

            h = hs[l]
            h_b = h.astype(bf16)
            gh_r = jnp.dot(h_b, whh[l][0], preferred_element_type=f32)
            gh_z = jnp.dot(h_b, whh[l][1], preferred_element_type=f32)
            gh_n = jnp.dot(h_b, whh[l][2], preferred_element_type=f32)

            # PyTorch GRU gate order r, z, n (lane-dense per-gate tiles, no slicing)
            r = jax.nn.sigmoid(gi_r + gh_r)
            n = jnp.tanh(gi_n + r * (gh_n + bhn[l]))   # z's sigmoid hides behind tanh
            z = jax.nn.sigmoid(gi_z + gh_z)
            h = (1.0 - z) * n + z * h

            hs[l] = h
            inp = h

    for l in range(N_LAYERS):
        hid_ref[l, :, :] = hs[l]


# ----------------------------- parameters --------------------------------------
def init_params(key):
    """PyTorch-convention parameter shapes: w_ih [3H, in], w_hh [3H, H], b [3H]."""
    def nrm(k, shape, scale=0.1):
        return scale * jax.random.normal(k, shape, dtype=jnp.float32)

    ks = jax.random.split(key, 1 + 4 * N_LAYERS)
    p = {'emb': nrm(ks[0], (IN_VOCAB, EMB))}
    i = 1
    for l in range(N_LAYERS):
        in_l = EMB if l == 0 else HID
        p[f'w_ih_{l}'] = nrm(ks[i + 0], (3 * HID, in_l))
        p[f'w_hh_{l}'] = nrm(ks[i + 1], (3 * HID, HID))
        p[f'b_ih_{l}'] = nrm(ks[i + 2], (3 * HID,))
        p[f'b_hh_{l}'] = nrm(ks[i + 3], (3 * HID,))
        i += 4
    return p


def pack_params(p):
    """Pre-fuse embedding with layer-0 projection, split weights per gate, bf16."""
    H = HID
    f32 = jnp.float32

    # table0[g] = emb @ W_ih0[g].T + b_ih0[g] (+ b_hh0[g] for r,z gates).
    w_ih0, b_ih0, b_hh0 = p['w_ih_0'], p['b_ih_0'], p['b_hh_0']
    tbl = []
    for g in range(3):
        t = p['emb'] @ w_ih0[g * H:(g + 1) * H, :].T + b_ih0[g * H:(g + 1) * H]
        if g < 2:                       # n-gate keeps b_hn separate (inside r*(...))
            t = t + b_hh0[g * H:(g + 1) * H]
        tbl.append(t)
    tbl0 = jnp.stack(tbl, axis=0).astype(jnp.bfloat16)          # [3, V, H]

    n_hi = max(N_LAYERS - 1, 1)
    wih = jnp.zeros((n_hi, 3, H, H), f32)
    whh = jnp.zeros((N_LAYERS, 3, H, H), f32)
    bias = jnp.zeros((N_LAYERS, 4, 1, H), f32)
    bias = bias.at[0, 3, 0].set(b_hh0[2 * H:3 * H])
    for l in range(N_LAYERS):
        w_hh = p[f'w_hh_{l}']
        for g in range(3):
            whh = whh.at[l, g].set(w_hh[g * H:(g + 1) * H, :].T)
        if l >= 1:
            w_ih, b_ih, b_hh = p[f'w_ih_{l}'], p[f'b_ih_{l}'], p[f'b_hh_{l}']
            for g in range(3):
                wih = wih.at[l - 1, g].set(w_ih[g * H:(g + 1) * H, :].T)
            bias = bias.at[l, 0, 0].set(b_ih[0:H] + b_hh[0:H])
            bias = bias.at[l, 1, 0].set(b_ih[H:2 * H] + b_hh[H:2 * H])
            bias = bias.at[l, 2, 0].set(b_ih[2 * H:3 * H])
            bias = bias.at[l, 3, 0].set(b_hh[2 * H:3 * H])

    return {'tbl0': tbl0,
            'wih': wih.astype(jnp.bfloat16),
            'whh': whh.astype(jnp.bfloat16),
            'bias': bias}


# ----------------------------- forward (jit'ed, single launch) -----------------
@jax.jit
def encoder_forward(src, packed):
    """src: [B, S] int32 -> hidden [N_LAYERS, B, HID] (matches nn.GRU's `hidden`)."""
    src_t = src.T.astype(jnp.int32)       # time-major for leading-axis indexing
    return pl.pallas_call(
        _encoder_kernel,
        out_shape=jax.ShapeDtypeStruct((N_LAYERS, B, HID), jnp.float32),
        in_specs=[VMEM_SPEC] * 5,
        out_specs=VMEM_SPEC,
    )(src_t, packed['tbl0'], packed['wih'], packed['whh'], packed['bias'])


# ----------------------------- pure-JAX reference ------------------------------
def reference_forward(src, p):
    """Mirrors torch.nn.GRU(batch_first=True) in eval mode (f32 throughout)."""
    H = HID
    hi = jax.lax.Precision.HIGHEST
    x = p['emb'][src]                                                   # [B, S, E]
    finals = []
    for l in range(N_LAYERS):
        w_ih, w_hh = p[f'w_ih_{l}'], p[f'w_hh_{l}']
        b_ih, b_hh = p[f'b_ih_{l}'], p[f'b_hh_{l}']
        h = jnp.zeros((src.shape[0], H), jnp.float32)
        outs = []
        for t in range(src.shape[1]):
            gi = jnp.dot(x[:, t], w_ih.T, precision=hi) + b_ih
            gh = jnp.dot(h, w_hh.T, precision=hi) + b_hh
            r = jax.nn.sigmoid(gi[:, :H] + gh[:, :H])
            z = jax.nn.sigmoid(gi[:, H:2 * H] + gh[:, H:2 * H])
            n = jnp.tanh(gi[:, 2 * H:] + r * gh[:, 2 * H:])
            h = (1.0 - z) * n + z * h
            outs.append(h)
        x = jnp.stack(outs, axis=1)                                     # [B, S, H]
        finals.append(h)
    return jnp.stack(finals, axis=0)                                    # [L, B, H]


# ----------------------------- main ---------------------------------------------
if __name__ == "__main__":
    key = jax.random.PRNGKey(0)
    k_params, k_src = jax.random.split(key)

    params = init_params(k_params)
    packed = pack_params(params)
    src = jax.random.randint(k_src, (B, SRC_LEN), 0, IN_VOCAB, dtype=jnp.int32)

    hidden = jax.block_until_ready(encoder_forward(src, packed))

    assert hidden.shape == (N_LAYERS, B, HID), hidden.shape
    assert bool(jnp.all(jnp.isfinite(hidden)))

    # Kernel uses bf16 MXU operands (f32 accumulation); reference is pure f32,
    # so the tolerance is relaxed vs. an all-f32 kernel (typical max err ~1e-3).
    ref = reference_forward(src, params)
    max_err = float(jnp.max(jnp.abs(hidden - ref)))
    assert max_err < 2e-2, f"mismatch vs pure-JAX reference: {max_err}"

    print("KERNEL_OK")
</pallas_src>

<mosaic_0001>
module attributes {stable_mosaic.version = 11 : i64} {
  func.func @_encoder_kernel(%arg0: memref<8x2xi32, #tpu.memory_space<vmem>>, %arg1: memref<3x16x32xbf16, #tpu.memory_space<vmem>>, %arg2: memref<1x3x32x32xbf16, #tpu.memory_space<vmem>>, %arg3: memref<2x3x32x32xbf16, #tpu.memory_space<vmem>>, %arg4: memref<2x4x1x32xf32, #tpu.memory_space<vmem>>, %arg5: memref<2x2x32xf32, #tpu.memory_space<vmem>>) attributes {dimension_semantics = [], scalar_prefetch = 0 : i64, scratch_operands = 0 : i64, tpu.core_type = #tpu.core_type<tc>} {
    %c0 = arith.constant 0 : index
    %c0_0 = arith.constant 0 : index
    %0 = vector.load %arg0[%c0, %c0_0] : memref<8x2xi32, #tpu.memory_space<vmem>>, vector<8x2xi32>
    %1 = tpu.iota {dimensions = array<i32: 2>} : vector<1x1x16xi32>
    %2 = vector.shape_cast %0 : vector<8x2xi32> to vector<8x2x1xi32>
    %3 = vector.broadcast %2 : vector<8x2x1xi32> to vector<8x2x16xi32>
    %4 = vector.broadcast %1 : vector<1x1x16xi32> to vector<8x2x16xi32>
    %5 = arith.cmpi eq, %3, %4 : vector<8x2x16xi32>
    %6 = arith.extui %5 : vector<8x2x16xi1> to vector<8x2x16xi32>
    %7 = arith.sitofp %6 : vector<8x2x16xi32> to vector<8x2x16xf32>
    %8 = arith.truncf %7 : vector<8x2x16xf32> to vector<8x2x16xbf16>
    %c0_1 = arith.constant 0 : index
    %c0_2 = arith.constant 0 : index
    %c0_3 = arith.constant 0 : index
    %9 = vector.load %arg1[%c0_1, %c0_2, %c0_3] : memref<3x16x32xbf16, #tpu.memory_space<vmem>>, vector<1x16x32xbf16>
    %10 = vector.shape_cast %9 : vector<1x16x32xbf16> to vector<16x32xbf16>
    %cst = arith.constant dense<0.000000e+00> : vector<8x2x32xf32>
    %11 = tpu.matmul %8, %10, %cst {dimension_numbers = #tpu.dot_dimension_numbers<[2], [0], [0, 1], [1], [0, 0, 0, 1, 1, 1], [], []>} : vector<8x2x16xbf16>, vector<16x32xbf16>, vector<8x2x32xf32> -> vector<8x2x32xf32>
    %c1 = arith.constant 1 : index
    %c0_4 = arith.constant 0 : index
    %c0_5 = arith.constant 0 : index
    %12 = vector.load %arg1[%c1, %c0_4, %c0_5] : memref<3x16x32xbf16, #tpu.memory_space<vmem>>, vector<1x16x32xbf16>
    %13 = vector.shape_cast %12 : vector<1x16x32xbf16> to vector<16x32xbf16>
    %cst_6 = arith.constant dense<0.000000e+00> : vector<8x2x32xf32>
    %14 = tpu.matmul %8, %13, %cst_6 {dimension_numbers = #tpu.dot_dimension_numbers<[2], [0], [0, 1], [1], [0, 0, 0, 1, 1, 1], [], []>} : vector<8x2x16xbf16>, vector<16x32xbf16>, vector<8x2x32xf32> -> vector<8x2x32xf32>
    %c2 = arith.constant 2 : index
    %c0_7 = arith.constant 0 : index
    %c0_8 = arith.constant 0 : index
    %15 = vector.load %arg1[%c2, %c0_7, %c0_8] : memref<3x16x32xbf16, #tpu.memory_space<vmem>>, vector<1x16x32xbf16>
    %16 = vector.shape_cast %15 : vector<1x16x32xbf16> to vector<16x32xbf16>
    %cst_9 = arith.constant dense<0.000000e+00> : vector<8x2x32xf32>
    %17 = tpu.matmul %8, %16, %cst_9 {dimension_numbers = #tpu.dot_dimension_numbers<[2], [0], [0, 1], [1], [0, 0, 0, 1, 1, 1], [], []>} : vector<8x2x16xbf16>, vector<16x32xbf16>, vector<8x2x32xf32> -> vector<8x2x32xf32>
    %c0_10 = arith.constant 0 : index
    %c0_11 = arith.constant 0 : index
    %c0_12 = arith.constant 0 : index
    %c0_13 = arith.constant 0 : index
    %18 = vector.load %arg3[%c0_10, %c0_11, %c0_12, %c0_13] : memref<2x3x32x32xbf16, #tpu.memory_space<vmem>>, vector<1x1x32x32xbf16>
    %19 = vector.shape_cast %18 : vector<1x1x32x32xbf16> to vector<32x32xbf16>
    %c0_14 = arith.constant 0 : index
    %c1_15 = arith.constant 1 : index
    %c0_16 = arith.constant 0 : index
    %c0_17 = arith.constant 0 : index
    %20 = vector.load %arg3[%c0_14, %c1_15, %c0_16, %c0_17] : memref<2x3x32x32xbf16, #tpu.memory_space<vmem>>, vector<1x1x32x32xbf16>
    %21 = vector.shape_cast %20 : vector<1x1x32x32xbf16> to vector<32x32xbf16>
    %c0_18 = arith.constant 0 : index
    %c2_19 = arith.constant 2 : index
    %c0_20 = arith.constant 0 : index
    %c0_21 = arith.constant 0 : index
    %22 = vector.load %arg3[%c0_18, %c2_19, %c0_20, %c0_21] : memref<2x3x32x32xbf16, #tpu.memory_space<vmem>>, vector<1x1x32x32xbf16>
    %23 = vector.shape_cast %22 : vector<1x1x32x32xbf16> to vector<32x32xbf16>
    %c1_22 = arith.constant 1 : index
    %c0_23 = arith.constant 0 : index
    %c0_24 = arith.constant 0 : index
    %c0_25 = arith.constant 0 : index
    %24 = vector.load %arg3[%c1_22, %c0_23, %c0_24, %c0_25] : memref<2x3x32x32xbf16, #tpu.memory_space<vmem>>, vector<1x1x32x32xbf16>
    %25 = vector.shape_cast %24 : vector<1x1x32x32xbf16> to vector<32x32xbf16>
    %c1_26 = arith.constant 1 : index
    %c1_27 = arith.constant 1 : index
    %c0_28 = arith.constant 0 : index
    %c0_29 = arith.constant 0 : index
    %26 = vector.load %arg3[%c1_26, %c1_27, %c0_28, %c0_29] : memref<2x3x32x32xbf16, #tpu.memory_space<vmem>>, vector<1x1x32x32xbf16>
    %27 = vector.shape_cast %26 : vector<1x1x32x32xbf16> to vector<32x32xbf16>
    %c1_30 = arith.constant 1 : index
    %c2_31 = arith.constant 2 : index
    %c0_32 = arith.constant 0 : index
    %c0_33 = arith.constant 0 : index
    %28 = vector.load %arg3[%c1_30, %c2_31, %c0_32, %c0_33] : memref<2x3x32x32xbf16, #tpu.memory_space<vmem>>, vector<1x1x32x32xbf16>
    %29 = vector.shape_cast %28 : vector<1x1x32x32xbf16> to vector<32x32xbf16>
    %c0_34 = arith.constant 0 : index
    %c0_35 = arith.constant 0 : index
    %c0_36 = arith.constant 0 : index
    %c0_37 = arith.constant 0 : index
    %30 = vector.load %arg2[%c0_34, %c0_35, %c0_36, %c0_37] : memref<1x3x32x32xbf16, #tpu.memory_space<vmem>>, vector<1x1x32x32xbf16>
    %31 = vector.shape_cast %30 : vector<1x1x32x32xbf16> to vector<32x32xbf16>
    %c0_38 = arith.constant 0 : index
    %c1_39 = arith.constant 1 : index
    %c0_40 = arith.constant 0 : index
    %c0_41 = arith.constant 0 : index
    %32 = vector.load %arg2[%c0_38, %c1_39, %c0_40, %c0_41] : memref<1x3x32x32xbf16, #tpu.memory_space<vmem>>, vector<1x1x32x32xbf16>
    %33 = vector.shape_cast %32 : vector<1x1x32x32xbf16> to vector<32x32xbf16>
    %c0_42 = arith.constant 0 : index
    %c2_43 = arith.constant 2 : index
    %c0_44 = arith.constant 0 : index
    %c0_45 = arith.constant 0 : index
    %34 = vector.load %arg2[%c0_42, %c2_43, %c0_44, %c0_45] : memref<1x3x32x32xbf16, #tpu.memory_space<vmem>>, vector<1x1x32x32xbf16>
    %35 = vector.shape_cast %34 : vector<1x1x32x32xbf16> to vector<32x32xbf16>
    %c0_46 = arith.constant 0 : index
    %c3 = arith.constant 3 : index
    %c0_47 = arith.constant 0 : index
    %c0_48 = arith.constant 0 : index
    %36 = vector.load %arg4[%c0_46, %c3, %c0_47, %c0_48] : memref<2x4x1x32xf32, #tpu.memory_space<vmem>>, vector<1x1x1x32xf32>
    %37 = vector.shape_cast %36 : vector<1x1x1x32xf32> to vector<1x32xf32>
    %38 = vector.shape_cast %37 : vector<1x32xf32> to vector<1x32xf32>
    %39 = vector.broadcast %38 : vector<1x32xf32> to vector<2x32xf32>
    %c1_49 = arith.constant 1 : index
    %c3_50 = arith.constant 3 : index
    %c0_51 = arith.constant 0 : index
    %c0_52 = arith.constant 0 : index
    %40 = vector.load %arg4[%c1_49, %c3_50, %c0_51, %c0_52] : memref<2x4x1x32xf32, #tpu.memory_space<vmem>>, vector<1x1x1x32xf32>
    %41 = vector.shape_cast %40 : vector<1x1x1x32xf32> to vector<1x32xf32>
    %42 = vector.shape_cast %41 : vector<1x32xf32> to vector<1x32xf32>
    %43 = vector.broadcast %42 : vector<1x32xf32> to vector<2x32xf32>
    %c1_53 = arith.constant 1 : index
    %c0_54 = arith.constant 0 : index
    %c0_55 = arith.constant 0 : index
    %c0_56 = arith.constant 0 : index
    %44 = vector.load %arg4[%c1_53, %c0_54, %c0_55, %c0_56] : memref<2x4x1x32xf32, #tpu.memory_space<vmem>>, vector<1x1x1x32xf32>
    %45 = vector.shape_cast %44 : vector<1x1x1x32xf32> to vector<1x32xf32>
    %46 = vector.shape_cast %45 : vector<1x32xf32> to vector<1x32xf32>
    %47 = vector.broadcast %46 : vector<1x32xf32> to vector<2x32xf32>
    %c1_57 = arith.constant 1 : index
    %c1_58 = arith.constant 1 : index
    %c0_59 = arith.constant 0 : index
    %c0_60 = arith.constant 0 : index
    %48 = vector.load %arg4[%c1_57, %c1_58, %c0_59, %c0_60] : memref<2x4x1x32xf32, #tpu.memory_space<vmem>>, vector<1x1x1x32xf32>
    %49 = vector.shape_cast %48 : vector<1x1x1x32xf32> to vector<1x32xf32>
    %50 = vector.shape_cast %49 : vector<1x32xf32> to vector<1x32xf32>
    %51 = vector.broadcast %50 : vector<1x32xf32> to vector<2x32xf32>
    %c1_61 = arith.constant 1 : index
    %c2_62 = arith.constant 2 : index
    %c0_63 = arith.constant 0 : index
    %c0_64 = arith.constant 0 : index
    %52 = vector.load %arg4[%c1_61, %c2_62, %c0_63, %c0_64] : memref<2x4x1x32xf32, #tpu.memory_space<vmem>>, vector<1x1x1x32xf32>
    %53 = vector.shape_cast %52 : vector<1x1x1x32xf32> to vector<1x32xf32>
    %54 = vector.shape_cast %53 : vector<1x32xf32> to vector<1x32xf32>
    %55 = vector.broadcast %54 : vector<1x32xf32> to vector<2x32xf32>
    %cst_65 = arith.constant 0.000000e+00 : f32
    %56 = vector.broadcast %cst_65 : f32 to vector<2x32xf32>
    %cst_66 = arith.constant 0.000000e+00 : f32
    %57 = vector.broadcast %cst_66 : f32 to vector<2x32xf32>
    %58 = vector.extract_strided_slice %11 {offsets = [0, 0, 0], sizes = [1, 2, 32], strides = [1, 1, 1]} : vector<8x2x32xf32> to vector<1x2x32xf32>
    %59 = vector.shape_cast %58 : vector<1x2x32xf32> to vector<2x32xf32>
    %60 = vector.extract_strided_slice %14 {offsets = [0, 0, 0], sizes = [1, 2, 32], strides = [1, 1, 1]} : vector<8x2x32xf32> to vector<1x2x32xf32>
    %61 = vector.shape_cast %60 : vector<1x2x32xf32> to vector<2x32xf32>
    %62 = vector.extract_strided_slice %17 {offsets = [0, 0, 0], sizes = [1, 2, 32], strides = [1, 1, 1]} : vector<8x2x32xf32> to vector<1x2x32xf32>
    %63 = vector.shape_cast %62 : vector<1x2x32xf32> to vector<2x32xf32>
    %64 = arith.truncf %56 : vector<2x32xf32> to vector<2x32xbf16>
    %cst_67 = arith.constant dense<0.000000e+00> : vector<2x32xf32>
    %65 = tpu.matmul %64, %19, %cst_67 {dimension_numbers = #tpu.dot_dimension_numbers<[1], [0], [0], [1], [0, 0, 1, 1], [], []>} : vector<2x32xbf16>, vector<32x32xbf16>, vector<2x32xf32> -> vector<2x32xf32>
    %cst_68 = arith.constant dense<0.000000e+00> : vector<2x32xf32>
    %66 = tpu.matmul %64, %21, %cst_68 {dimension_numbers = #tpu.dot_dimension_numbers<[1], [0], [0], [1], [0, 0, 1, 1], [], []>} : vector<2x32xbf16>, vector<32x32xbf16>, vector<2x32xf32> -> vector<2x32xf32>
    %cst_69 = arith.constant dense<0.000000e+00> : vector<2x32xf32>
    %67 = tpu.matmul %64, %23, %cst_69 {dimension_numbers = #tpu.dot_dimension_numbers<[1], [0], [0], [1], [0, 0, 1, 1], [], []>} : vector<2x32xbf16>, vector<32x32xbf16>, vector<2x32xf32> -> vector<2x32xf32>
    %68 = arith.addf %59, %65 : vector<2x32xf32>
    %69 = arith.negf %68 : vector<2x32xf32>
    %70 = math.exp %69 : vector<2x32xf32>
    %cst_70 = arith.constant 1.000000e+00 : f32
    %71 = vector.broadcast %cst_70 : f32 to vector<2x32xf32>
    %72 = arith.addf %71, %70 : vector<2x32xf32>
    %73 = arith.divf %71, %72 : vector<2x32xf32>
    %74 = arith.addf %67, %39 : vector<2x32xf32>
    %75 = arith.mulf %73, %74 : vector<2x32xf32>
    %76 = arith.addf %63, %75 : vector<2x32xf32>
    %77 = math.tanh %76 : vector<2x32xf32>
    %78 = arith.addf %61, %66 : vector<2x32xf32>
    %79 = arith.negf %78 : vector<2x32xf32>
    %80 = math.exp %79 : vector<2x32xf32>
    %cst_71 = arith.constant 1.000000e+00 : f32
    %81 = vector.broadcast %cst_71 : f32 to vector<2x32xf32>
    %82 = arith.addf %81, %80 : vector<2x32xf32>
    %83 = arith.divf %81, %82 : vector<2x32xf32>
    %cst_72 = arith.constant 1.000000e+00 : f32
    %84 = vector.broadcast %cst_72 : f32 to vector<2x32xf32>
    %85 = arith.subf %84, %83 : vector<2x32xf32>
    %86 = arith.mulf %85, %77 : vector<2x32xf32>
    %87 = arith.mulf %83, %56 : vector<2x32xf32>
    %88 = arith.addf %86, %87 : vector<2x32xf32>
    %89 = arith.truncf %88 : vector<2x32xf32> to vector<2x32xbf16>
    %cst_73 = arith.constant dense<0.000000e+00> : vector<2x32xf32>
    %90 = tpu.matmul %89, %31, %cst_73 {dimension_numbers = #tpu.dot_dimension_numbers<[1], [0], [0], [1], [0, 0, 1, 1], [], []>} : vector<2x32xbf16>, vector<32x32xbf16>, vector<2x32xf32> -> vector<2x32xf32>
    %91 = arith.addf %90, %47 : vector<2x32xf32>
    %cst_74 = arith.constant dense<0.000000e+00> : vector<2x32xf32>
    %92 = tpu.matmul %89, %33, %cst_74 {dimension_numbers = #tpu.dot_dimension_numbers<[1], [0], [0], [1], [0, 0, 1, 1], [], []>} : vector<2x32xbf16>, vector<32x32xbf16>, vector<2x32xf32> -> vector<2x32xf32>
    %93 = arith.addf %92, %51 : vector<2x32xf32>
    %cst_75 = arith.constant dense<0.000000e+00> : vector<2x32xf32>
    %94 = tpu.matmul %89, %35, %cst_75 {dimension_numbers = #tpu.dot_dimension_numbers<[1], [0], [0], [1], [0, 0, 1, 1], [], []>} : vector<2x32xbf16>, vector<32x32xbf16>, vector<2x32xf32> -> vector<2x32xf32>
    %95 = arith.addf %94, %55 : vector<2x32xf32>
    %96 = arith.truncf %57 : vector<2x32xf32> to vector<2x32xbf16>
    %cst_76 = arith.constant dense<0.000000e+00> : vector<2x32xf32>
    %97 = tpu.matmul %96, %25, %cst_76 {dimension_numbers = #tpu.dot_dimension_numbers<[1], [0], [0], [1], [0, 0, 1, 1], [], []>} : vector<2x32xbf16>, vector<32x32xbf16>, vector<2x32xf32> -> vector<2x32xf32>
    %cst_77 = arith.constant dense<0.000000e+00> : vector<2x32xf32>
    %98 = tpu.matmul %96, %27, %cst_77 {dimension_numbers = #tpu.dot_dimension_numbers<[1], [0], [0], [1], [0, 0, 1, 1], [], []>} : vector<2x32xbf16>, vector<32x32xbf16>, vector<2x32xf32> -> vector<2x32xf32>
    %cst_78 = arith.constant dense<0.000000e+00> : vector<2x32xf32>
    %99 = tpu.matmul %96, %29, %cst_78 {dimension_numbers = #tpu.dot_dimension_numbers<[1], [0], [0], [1], [0, 0, 1, 1], [], []>} : vector<2x32xbf16>, vector<32x32xbf16>, vector<2x32xf32> -> vector<2x32xf32>
    %100 = arith.addf %91, %97 : vector<2x32xf32>
    %101 = arith.negf %100 : vector<2x32xf32>
    %102 = math.exp %101 : vector<2x32xf32>
    %cst_79 = arith.constant 1.000000e+00 : f32
    %103 = vector.broadcast %cst_79 : f32 to vector<2x32xf32>
    %104 = arith.addf %103, %102 : vector<2x32xf32>
    %105 = arith.divf %103, %104 : vector<2x32xf32>
    %106 = arith.addf %99, %43 : vector<2x32xf32>
    %107 = arith.mulf %105, %106 : vector<2x32xf32>
    %108 = arith.addf %95, %107 : vector<2x32xf32>
    %109 = math.tanh %108 : vector<2x32xf32>
    %110 = arith.addf %93, %98 : vector<2x32xf32>
    %111 = arith.negf %110 : vector<2x32xf32>
    %112 = math.exp %111 : vector<2x32xf32>
    %cst_80 = arith.constant 1.000000e+00 : f32
    %113 = vector.broadcast %cst_80 : f32 to vector<2x32xf32>
    %114 = arith.addf %113, %112 : vector<2x32xf32>
    %115 = arith.divf %113, %114 : vector<2x32xf32>
    %cst_81 = arith.constant 1.000000e+00 : f32
    %116 = vector.broadcast %cst_81 : f32 to vector<2x32xf32>
    %117 = arith.subf %116, %115 : vector<2x32xf32>
    %118 = arith.mulf %117, %109 : vector<2x32xf32>
    %119 = arith.mulf %115, %57 : vector<2x32xf32>
    %120 = arith.addf %118, %119 : vector<2x32xf32>
    %121 = vector.extract_strided_slice %11 {offsets = [1, 0, 0], sizes = [1, 2, 32], strides = [1, 1, 1]} : vector<8x2x32xf32> to vector<1x2x32xf32>
    %122 = vector.shape_cast %121 : vector<1x2x32xf32> to vector<2x32xf32>
    %123 = vector.extract_strided_slice %14 {offsets = [1, 0, 0], sizes = [1, 2, 32], strides = [1, 1, 1]} : vector<8x2x32xf32> to vector<1x2x32xf32>
    %124 = vector.shape_cast %123 : vector<1x2x32xf32> to vector<2x32xf32>
    %125 = vector.extract_strided_slice %17 {offsets = [1, 0, 0], sizes = [1, 2, 32], strides = [1, 1, 1]} : vector<8x2x32xf32> to vector<1x2x32xf32>
    %126 = vector.shape_cast %125 : vector<1x2x32xf32> to vector<2x32xf32>
    %127 = arith.truncf %88 : vector<2x32xf32> to vector<2x32xbf16>
    %cst_82 = arith.constant dense<0.000000e+00> : vector<2x32xf32>
    %128 = tpu.matmul %127, %19, %cst_82 {dimension_numbers = #tpu.dot_dimension_numbers<[1], [0], [0], [1], [0, 0, 1, 1], [], []>} : vector<2x32xbf16>, vector<32x32xbf16>, vector<2x32xf32> -> vector<2x32xf32>
    %cst_83 = arith.constant dense<0.000000e+00> : vector<2x32xf32>
    %129 = tpu.matmul %127, %21, %cst_83 {dimension_numbers = #tpu.dot_dimension_numbers<[1], [0], [0], [1], [0, 0, 1, 1], [], []>} : vector<2x32xbf16>, vector<32x32xbf16>, vector<2x32xf32> -> vector<2x32xf32>
    %cst_84 = arith.constant dense<0.000000e+00> : vector<2x32xf32>
    %130 = tpu.matmul %127, %23, %cst_84 {dimension_numbers = #tpu.dot_dimension_numbers<[1], [0], [0], [1], [0, 0, 1, 1], [], []>} : vector<2x32xbf16>, vector<32x32xbf16>, vector<2x32xf32> -> vector<2x32xf32>
    %131 = arith.addf %122, %128 : vector<2x32xf32>
    %132 = arith.negf %131 : vector<2x32xf32>
    %133 = math.exp %132 : vector<2x32xf32>
    %cst_85 = arith.constant 1.000000e+00 : f32
    %134 = vector.broadcast %cst_85 : f32 to vector<2x32xf32>
    %135 = arith.addf %134, %133 : vector<2x32xf32>
    %136 = arith.divf %134, %135 : vector<2x32xf32>
    %137 = arith.addf %130, %39 : vector<2x32xf32>
    %138 = arith.mulf %136, %137 : vector<2x32xf32>
    %139 = arith.addf %126, %138 : vector<2x32xf32>
    %140 = math.tanh %139 : vector<2x32xf32>
    %141 = arith.addf %124, %129 : vector<2x32xf32>
    %142 = arith.negf %141 : vector<2x32xf32>
    %143 = math.exp %142 : vector<2x32xf32>
    %cst_86 = arith.constant 1.000000e+00 : f32
    %144 = vector.broadcast %cst_86 : f32 to vector<2x32xf32>
    %145 = arith.addf %144, %143 : vector<2x32xf32>
    %146 = arith.divf %144, %145 : vector<2x32xf32>
    %cst_87 = arith.constant 1.000000e+00 : f32
    %147 = vector.broadcast %cst_87 : f32 to vector<2x32xf32>
    %148 = arith.subf %147, %146 : vector<2x32xf32>
    %149 = arith.mulf %148, %140 : vector<2x32xf32>
    %150 = arith.mulf %146, %88 : vector<2x32xf32>
    %151 = arith.addf %149, %150 : vector<2x32xf32>
    %152 = arith.truncf %151 : vector<2x32xf32> to vector<2x32xbf16>
    %cst_88 = arith.constant dense<0.000000e+00> : vector<2x32xf32>
    %153 = tpu.matmul %152, %31, %cst_88 {dimension_numbers = #tpu.dot_dimension_numbers<[1], [0], [0], [1], [0, 0, 1, 1], [], []>} : vector<2x32xbf16>, vector<32x32xbf16>, vector<2x32xf32> -> vector<2x32xf32>
    %154 = arith.addf %153, %47 : vector<2x32xf32>
    %cst_89 = arith.constant dense<0.000000e+00> : vector<2x32xf32>
    %155 = tpu.matmul %152, %33, %cst_89 {dimension_numbers = #tpu.dot_dimension_numbers<[1], [0], [0], [1], [0, 0, 1, 1], [], []>} : vector<2x32xbf16>, vector<32x32xbf16>, vector<2x32xf32> -> vector<2x32xf32>
    %156 = arith.addf %155, %51 : vector<2x32xf32>
    %cst_90 = arith.constant dense<0.000000e+00> : vector<2x32xf32>
    %157 = tpu.matmul %152, %35, %cst_90 {dimension_numbers = #tpu.dot_dimension_numbers<[1], [0], [0], [1], [0, 0, 1, 1], [], []>} : vector<2x32xbf16>, vector<32x32xbf16>, vector<2x32xf32> -> vector<2x32xf32>
    %158 = arith.addf %157, %55 : vector<2x32xf32>
    %159 = arith.truncf %120 : vector<2x32xf32> to vector<2x32xbf16>
    %cst_91 = arith.constant dense<0.000000e+00> : vector<2x32xf32>
    %160 = tpu.matmul %159, %25, %cst_91 {dimension_numbers = #tpu.dot_dimension_numbers<[1], [0], [0], [1], [0, 0, 1, 1], [], []>} : vector<2x32xbf16>, vector<32x32xbf16>, vector<2x32xf32> -> vector<2x32xf32>
    %cst_92 = arith.constant dense<0.000000e+00> : vector<2x32xf32>
    %161 = tpu.matmul %159, %27, %cst_92 {dimension_numbers = #tpu.dot_dimension_numbers<[1], [0], [0], [1], [0, 0, 1, 1], [], []>} : vector<2x32xbf16>, vector<32x32xbf16>, vector<2x32xf32> -> vector<2x32xf32>
    %cst_93 = arith.constant dense<0.000000e+00> : vector<2x32xf32>
    %162 = tpu.matmul %159, %29, %cst_93 {dimension_numbers = #tpu.dot_dimension_numbers<[1], [0], [0], [1], [0, 0, 1, 1], [], []>} : vector<2x32xbf16>, vector<32x32xbf16>, vector<2x32xf32> -> vector<2x32xf32>
    %163 = arith.addf %154, %160 : vector<2x32xf32>
    %164 = arith.negf %163 : vector<2x32xf32>
    %165 = math.exp %164 : vector<2x32xf32>
    %cst_94 = arith.constant 1.000000e+00 : f32
    %166 = vector.broadcast %cst_94 : f32 to vector<2x32xf32>
    %167 = arith.addf %166, %165 : vector<2x32xf32>
    %168 = arith.divf %166, %167 : vector<2x32xf32>
    %169 = arith.addf %162, %43 : vector<2x32xf32>
    %170 = arith.mulf %168, %169 : vector<2x32xf32>
    %171 = arith.addf %158, %170 : vector<2x32xf32>
    %172 = math.tanh %171 : vector<2x32xf32>
    %173 = arith.addf %156, %161 : vector<2x32xf32>
    %174 = arith.negf %173 : vector<2x32xf32>
    %175 = math.exp %174 : vector<2x32xf32>
    %cst_95 = arith.constant 1.000000e+00 : f32
    %176 = vector.broadcast %cst_95 : f32 to vector<2x32xf32>
    %177 = arith.addf %176, %175 : vector<2x32xf32>
    %178 = arith.divf %176, %177 : vector<2x32xf32>
    %cst_96 = arith.constant 1.000000e+00 : f32
    %179 = vector.broadcast %cst_96 : f32 to vector<2x32xf32>
    %180 = arith.subf %179, %178 : vector<2x32xf32>
    %181 = arith.mulf %180, %172 : vector<2x32xf32>
    %182 = arith.mulf %178, %120 : vector<2x32xf32>
    %183 = arith.addf %181, %182 : vector<2x32xf32>
    %184 = vector.extract_strided_slice %11 {offsets = [2, 0, 0], sizes = [1, 2, 32], strides = [1, 1, 1]} : vector<8x2x32xf32> to vector<1x2x32xf32>
    %185 = vector.shape_cast %184 : vector<1x2x32xf32> to vector<2x32xf32>
    %186 = vector.extract_strided_slice %14 {offsets = [2, 0, 0], sizes = [1, 2, 32], strides = [1, 1, 1]} : vector<8x2x32xf32> to vector<1x2x32xf32>
    %187 = vector.shape_cast %186 : vector<1x2x32xf32> to vector<2x32xf32>
    %188 = vector.extract_strided_slice %17 {offsets = [2, 0, 0], sizes = [1, 2, 32], strides = [1, 1, 1]} : vector<8x2x32xf32> to vector<1x2x32xf32>
    %189 = vector.shape_cast %188 : vector<1x2x32xf32> to vector<2x32xf32>
    %190 = arith.truncf %151 : vector<2x32xf32> to vector<2x32xbf16>
    %cst_97 = arith.constant dense<0.000000e+00> : vector<2x32xf32>
    %191 = tpu.matmul %190, %19, %cst_97 {dimension_numbers = #tpu.dot_dimension_numbers<[1], [0], [0], [1], [0, 0, 1, 1], [], []>} : vector<2x32xbf16>, vector<32x32xbf16>, vector<2x32xf32> -> vector<2x32xf32>
    %cst_98 = arith.constant dense<0.000000e+00> : vector<2x32xf32>
    %192 = tpu.matmul %190, %21, %cst_98 {dimension_numbers = #tpu.dot_dimension_numbers<[1], [0], [0], [1], [0, 0, 1, 1], [], []>} : vector<2x32xbf16>, vector<32x32xbf16>, vector<2x32xf32> -> vector<2x32xf32>
    %cst_99 = arith.constant dense<0.000000e+00> : vector<2x32xf32>
    %193 = tpu.matmul %190, %23, %cst_99 {dimension_numbers = #tpu.dot_dimension_numbers<[1], [0], [0], [1], [0, 0, 1, 1], [], []>} : vector<2x32xbf16>, vector<32x32xbf16>, vector<2x32xf32> -> vector<2x32xf32>
    %194 = arith.addf %185, %191 : vector<2x32xf32>
    %195 = arith.negf %194 : vector<2x32xf32>
    %196 = math.exp %195 : vector<2x32xf32>
    %cst_100 = arith.constant 1.000000e+00 : f32
    %197 = vector.broadcast %cst_100 : f32 to vector<2x32xf32>
    %198 = arith.addf %197, %196 : vector<2x32xf32>
    %199 = arith.divf %197, %198 : vector<2x32xf32>
    %200 = arith.addf %193, %39 : vector<2x32xf32>
    %201 = arith.mulf %199, %200 : vector<2x32xf32>
    %202 = arith.addf %189, %201 : vector<2x32xf32>
    %203 = math.tanh %202 : vector<2x32xf32>
    %204 = arith.addf %187, %192 : vector<2x32xf32>
    %205 = arith.negf %204 : vector<2x32xf32>
    %206 = math.exp %205 : vector<2x32xf32>
    %cst_101 = arith.constant 1.000000e+00 : f32
    %207 = vector.broadcast %cst_101 : f32 to vector<2x32xf32>
    %208 = arith.addf %207, %206 : vector<2x32xf32>
    %209 = arith.divf %207, %208 : vector<2x32xf32>
    %cst_102 = arith.constant 1.000000e+00 : f32
    %210 = vector.broadcast %cst_102 : f32 to vector<2x32xf32>
    %211 = arith.subf %210, %209 : vector<2x32xf32>
    %212 = arith.mulf %211, %203 : vector<2x32xf32>
    %213 = arith.mulf %209, %151 : vector<2x32xf32>
    %214 = arith.addf %212, %213 : vector<2x32xf32>
    %215 = arith.truncf %214 : vector<2x32xf32> to vector<2x32xbf16>
    %cst_103 = arith.constant dense<0.000000e+00> : vector<2x32xf32>
    %216 = tpu.matmul %215, %31, %cst_103 {dimension_numbers = #tpu.dot_dimension_numbers<[1], [0], [0], [1], [0, 0, 1, 1], [], []>} : vector<2x32xbf16>, vector<32x32xbf16>, vector<2x32xf32> -> vector<2x32xf32>
    %217 = arith.addf %216, %47 : vector<2x32xf32>
    %cst_104 = arith.constant dense<0.000000e+00> : vector<2x32xf32>
    %218 = tpu.matmul %215, %33, %cst_104 {dimension_numbers = #tpu.dot_dimension_numbers<[1], [0], [0], [1], [0, 0, 1, 1], [], []>} : vector<2x32xbf16>, vector<32x32xbf16>, vector<2x32xf32> -> vector<2x32xf32>
    %219 = arith.addf %218, %51 : vector<2x32xf32>
    %cst_105 = arith.constant dense<0.000000e+00> : vector<2x32xf32>
    %220 = tpu.matmul %215, %35, %cst_105 {dimension_numbers = #tpu.dot_dimension_numbers<[1], [0], [0], [1], [0, 0, 1, 1], [], []>} : vector<2x32xbf16>, vector<32x32xbf16>, vector<2x32xf32> -> vector<2x32xf32>
    %221 = arith.addf %220, %55 : vector<2x32xf32>
    %222 = arith.truncf %183 : vector<2x32xf32> to vector<2x32xbf16>
    %cst_106 = arith.constant dense<0.000000e+00> : vector<2x32xf32>
    %223 = tpu.matmul %222, %25, %cst_106 {dimension_numbers = #tpu.dot_dimension_numbers<[1], [0], [0], [1], [0, 0, 1, 1], [], []>} : vector<2x32xbf16>, vector<32x32xbf16>, vector<2x32xf32> -> vector<2x32xf32>
    %cst_107 = arith.constant dense<0.000000e+00> : vector<2x32xf32>
    %224 = tpu.matmul %222, %27, %cst_107 {dimension_numbers = #tpu.dot_dimension_numbers<[1], [0], [0], [1], [0, 0, 1, 1], [], []>} : vector<2x32xbf16>, vector<32x32xbf16>, vector<2x32xf32> -> vector<2x32xf32>
    %cst_108 = arith.constant dense<0.000000e+00> : vector<2x32xf32>
    %225 = tpu.matmul %222, %29, %cst_108 {dimension_numbers = #tpu.dot_dimension_numbers<[1], [0], [0], [1], [0, 0, 1, 1], [], []>} : vector<2x32xbf16>, vector<32x32xbf16>, vector<2x32xf32> -> vector<2x32xf32>
    %226 = arith.addf %217, %223 : vector<2x32xf32>
    %227 = arith.negf %226 : vector<2x32xf32>
    %228 = math.exp %227 : vector<2x32xf32>
    %cst_109 = arith.constant 1.000000e+00 : f32
    %229 = vector.broadcast %cst_109 : f32 to vector<2x32xf32>
    %230 = arith.addf %229, %228 : vector<2x32xf32>
    %231 = arith.divf %229, %230 : vector<2x32xf32>
    %232 = arith.addf %225, %43 : vector<2x32xf32>
    %233 = arith.mulf %231, %232 : vector<2x32xf32>
    %234 = arith.addf %221, %233 : vector<2x32xf32>
    %235 = math.tanh %234 : vector<2x32xf32>
    %236 = arith.addf %219, %224 : vector<2x32xf32>
    %237 = arith.negf %236 : vector<2x32xf32>
    %238 = math.exp %237 : vector<2x32xf32>
    %cst_110 = arith.constant 1.000000e+00 : f32
    %239 = vector.broadcast %cst_110 : f32 to vector<2x32xf32>
    %240 = arith.addf %239, %238 : vector<2x32xf32>
    %241 = arith.divf %239, %240 : vector<2x32xf32>
    %cst_111 = arith.constant 1.000000e+00 : f32
    %242 = vector.broadcast %cst_111 : f32 to vector<2x32xf32>
    %243 = arith.subf %242, %241 : vector<2x32xf32>
    %244 = arith.mulf %243, %235 : vector<2x32xf32>
    %245 = arith.mulf %241, %183 : vector<2x32xf32>
    %246 = arith.addf %244, %245 : vector<2x32xf32>
    %247 = vector.extract_strided_slice %11 {offsets = [3, 0, 0], sizes = [1, 2, 32], strides = [1, 1, 1]} : vector<8x2x32xf32> to vector<1x2x32xf32>
    %248 = vector.shape_cast %247 : vector<1x2x32xf32> to vector<2x32xf32>
    %249 = vector.extract_strided_slice %14 {offsets = [3, 0, 0], sizes = [1, 2, 32], strides = [1, 1, 1]} : vector<8x2x32xf32> to vector<1x2x32xf32>
    %250 = vector.shape_cast %249 : vector<1x2x32xf32> to vector<2x32xf32>
    %251 = vector.extract_strided_slice %17 {offsets = [3, 0, 0], sizes = [1, 2, 32], strides = [1, 1, 1]} : vector<8x2x32xf32> to vector<1x2x32xf32>
    %252 = vector.shape_cast %251 : vector<1x2x32xf32> to vector<2x32xf32>
    %253 = arith.truncf %214 : vector<2x32xf32> to vector<2x32xbf16>
    %cst_112 = arith.constant dense<0.000000e+00> : vector<2x32xf32>
    %254 = tpu.matmul %253, %19, %cst_112 {dimension_numbers = #tpu.dot_dimension_numbers<[1], [0], [0], [1], [0, 0, 1, 1], [], []>} : vector<2x32xbf16>, vector<32x32xbf16>, vector<2x32xf32> -> vector<2x32xf32>
    %cst_113 = arith.constant dense<0.000000e+00> : vector<2x32xf32>
    %255 = tpu.matmul %253, %21, %cst_113 {dimension_numbers = #tpu.dot_dimension_numbers<[1], [0], [0], [1], [0, 0, 1, 1], [], []>} : vector<2x32xbf16>, vector<32x32xbf16>, vector<2x32xf32> -> vector<2x32xf32>
    %cst_114 = arith.constant dense<0.000000e+00> : vector<2x32xf32>
    %256 = tpu.matmul %253, %23, %cst_114 {dimension_numbers = #tpu.dot_dimension_numbers<[1], [0], [0], [1], [0, 0, 1, 1], [], []>} : vector<2x32xbf16>, vector<32x32xbf16>, vector<2x32xf32> -> vector<2x32xf32>
    %257 = arith.addf %248, %254 : vector<2x32xf32>
    %258 = arith.negf %257 : vector<2x32xf32>
    %259 = math.exp %258 : vector<2x32xf32>
    %cst_115 = arith.constant 1.000000e+00 : f32
    %260 = vector.broadcast %cst_115 : f32 to vector<2x32xf32>
    %261 = arith.addf %260, %259 : vector<2x32xf32>
    %262 = arith.divf %260, %261 : vector<2x32xf32>
    %263 = arith.addf %256, %39 : vector<2x32xf32>
    %264 = arith.mulf %262, %263 : vector<2x32xf32>
    %265 = arith.addf %252, %264 : vector<2x32xf32>
    %266 = math.tanh %265 : vector<2x32xf32>
    %267 = arith.addf %250, %255 : vector<2x32xf32>
    %268 = arith.negf %267 : vector<2x32xf32>
    %269 = math.exp %268 : vector<2x32xf32>
    %cst_116 = arith.constant 1.000000e+00 : f32
    %270 = vector.broadcast %cst_116 : f32 to vector<2x32xf32>
    %271 = arith.addf %270, %269 : vector<2x32xf32>
    %272 = arith.divf %270, %271 : vector<2x32xf32>
    %cst_117 = arith.constant 1.000000e+00 : f32
    %273 = vector.broadcast %cst_117 : f32 to vector<2x32xf32>
    %274 = arith.subf %273, %272 : vector<2x32xf32>
    %275 = arith.mulf %274, %266 : vector<2x32xf32>
    %276 = arith.mulf %272, %214 : vector<2x32xf32>
    %277 = arith.addf %275, %276 : vector<2x32xf32>
    %278 = arith.truncf %277 : vector<2x32xf32> to vector<2x32xbf16>
    %cst_118 = arith.constant dense<0.000000e+00> : vector<2x32xf32>
    %279 = tpu.matmul %278, %31, %cst_118 {dimension_numbers = #tpu.dot_dimension_numbers<[1], [0], [0], [1], [0, 0, 1, 1], [], []>} : vector<2x32xbf16>, vector<32x32xbf16>, vector<2x32xf32> -> vector<2x32xf32>
    %280 = arith.addf %279, %47 : vector<2x32xf32>
    %cst_119 = arith.constant dense<0.000000e+00> : vector<2x32xf32>
    %281 = tpu.matmul %278, %33, %cst_119 {dimension_numbers = #tpu.dot_dimension_numbers<[1], [0], [0], [1], [0, 0, 1, 1], [], []>} : vector<2x32xbf16>, vector<32x32xbf16>, vector<2x32xf32> -> vector<2x32xf32>
    %282 = arith.addf %281, %51 : vector<2x32xf32>
    %cst_120 = arith.constant dense<0.000000e+00> : vector<2x32xf32>
    %283 = tpu.matmul %278, %35, %cst_120 {dimension_numbers = #tpu.dot_dimension_numbers<[1], [0], [0], [1], [0, 0, 1, 1], [], []>} : vector<2x32xbf16>, vector<32x32xbf16>, vector<2x32xf32> -> vector<2x32xf32>
    %284 = arith.addf %283, %55 : vector<2x32xf32>
    %285 = arith.truncf %246 : vector<2x32xf32> to vector<2x32xbf16>
    %cst_121 = arith.constant dense<0.000000e+00> : vector<2x32xf32>
    %286 = tpu.matmul %285, %25, %cst_121 {dimension_numbers = #tpu.dot_dimension_numbers<[1], [0], [0], [1], [0, 0, 1, 1], [], []>} : vector<2x32xbf16>, vector<32x32xbf16>, vector<2x32xf32> -> vector<2x32xf32>
    %cst_122 = arith.constant dense<0.000000e+00> : vector<2x32xf32>
    %287 = tpu.matmul %285, %27, %cst_122 {dimension_numbers = #tpu.dot_dimension_numbers<[1], [0], [0], [1], [0, 0, 1, 1], [], []>} : vector<2x32xbf16>, vector<32x32xbf16>, vector<2x32xf32> -> vector<2x32xf32>
    %cst_123 = arith.constant dense<0.000000e+00> : vector<2x32xf32>
    %288 = tpu.matmul %285, %29, %cst_123 {dimension_numbers = #tpu.dot_dimension_numbers<[1], [0], [0], [1], [0, 0, 1, 1], [], []>} : vector<2x32xbf16>, vector<32x32xbf16>, vector<2x32xf32> -> vector<2x32xf32>
    %289 = arith.addf %280, %286 : vector<2x32xf32>
    %290 = arith.negf %289 : vector<2x32xf32>
    %291 = math.exp %290 : vector<2x32xf32>
    %cst_124 = arith.constant 1.000000e+00 : f32
    %292 = vector.broadcast %cst_124 : f32 to vector<2x32xf32>
    %293 = arith.addf %292, %291 : vector<2x32xf32>
    %294 = arith.divf %292, %293 : vector<2x32xf32>
    %295 = arith.addf %288, %43 : vector<2x32xf32>
    %296 = arith.mulf %294, %295 : vector<2x32xf32>
    %297 = arith.addf %284, %296 : vector<2x32xf32>
    %298 = math.tanh %297 : vector<2x32xf32>
    %299 = arith.addf %282, %287 : vector<2x32xf32>
    %300 = arith.negf %299 : vector<2x32xf32>
    %301 = math.exp %300 : vector<2x32xf32>
    %cst_125 = arith.constant 1.000000e+00 : f32
    %302 = vector.broadcast %cst_125 : f32 to vector<2x32xf32>
    %303 = arith.addf %302, %301 : vector<2x32xf32>
    %304 = arith.divf %302, %303 : vector<2x32xf32>
    %cst_126 = arith.constant 1.000000e+00 : f32
    %305 = vector.broadcast %cst_126 : f32 to vector<2x32xf32>
    %306 = arith.subf %305, %304 : vector<2x32xf32>
    %307 = arith.mulf %306, %298 : vector<2x32xf32>
    %308 = arith.mulf %304, %246 : vector<2x32xf32>
    %309 = arith.addf %307, %308 : vector<2x32xf32>
    %310 = vector.extract_strided_slice %11 {offsets = [4, 0, 0], sizes = [1, 2, 32], strides = [1, 1, 1]} : vector<8x2x32xf32> to vector<1x2x32xf32>
    %311 = vector.shape_cast %310 : vector<1x2x32xf32> to vector<2x32xf32>
    %312 = vector.extract_strided_slice %14 {offsets = [4, 0, 0], sizes = [1, 2, 32], strides = [1, 1, 1]} : vector<8x2x32xf32> to vector<1x2x32xf32>
    %313 = vector.shape_cast %312 : vector<1x2x32xf32> to vector<2x32xf32>
    %314 = vector.extract_strided_slice %17 {offsets = [4, 0, 0], sizes = [1, 2, 32], strides = [1, 1, 1]} : vector<8x2x32xf32> to vector<1x2x32xf32>
    %315 = vector.shape_cast %314 : vector<1x2x32xf32> to vector<2x32xf32>
    %316 = arith.truncf %277 : vector<2x32xf32> to vector<2x32xbf16>
    %cst_127 = arith.constant dense<0.000000e+00> : vector<2x32xf32>
    %317 = tpu.matmul %316, %19, %cst_127 {dimension_numbers = #tpu.dot_dimension_numbers<[1], [0], [0], [1], [0, 0, 1, 1], [], []>} : vector<2x32xbf16>, vector<32x32xbf16>, vector<2x32xf32> -> vector<2x32xf32>
    %cst_128 = arith.constant dense<0.000000e+00> : vector<2x32xf32>
    %318 = tpu.matmul %316, %21, %cst_128 {dimension_numbers = #tpu.dot_dimension_numbers<[1], [0], [0], [1], [0, 0, 1, 1], [], []>} : vector<2x32xbf16>, vector<32x32xbf16>, vector<2x32xf32> -> vector<2x32xf32>
    %cst_129 = arith.constant dense<0.000000e+00> : vector<2x32xf32>
    %319 = tpu.matmul %316, %23, %cst_129 {dimension_numbers = #tpu.dot_dimension_numbers<[1], [0], [0], [1], [0, 0, 1, 1], [], []>} : vector<2x32xbf16>, vector<32x32xbf16>, vector<2x32xf32> -> vector<2x32xf32>
    %320 = arith.addf %311, %317 : vector<2x32xf32>
    %321 = arith.negf %320 : vector<2x32xf32>
    %322 = math.exp %321 : vector<2x32xf32>
    %cst_130 = arith.constant 1.000000e+00 : f32
    %323 = vector.broadcast %cst_130 : f32 to vector<2x32xf32>
    %324 = arith.addf %323, %322 : vector<2x32xf32>
    %325 = arith.divf %323, %324 : vector<2x32xf32>
    %326 = arith.addf %319, %39 : vector<2x32xf32>
    %327 = arith.mulf %325, %326 : vector<2x32xf32>
    %328 = arith.addf %315, %327 : vector<2x32xf32>
    %329 = math.tanh %328 : vector<2x32xf32>
    %330 = arith.addf %313, %318 : vector<2x32xf32>
    %331 = arith.negf %330 : vector<2x32xf32>
    %332 = math.exp %331 : vector<2x32xf32>
    %cst_131 = arith.constant 1.000000e+00 : f32
    %333 = vector.broadcast %cst_131 : f32 to vector<2x32xf32>
    %334 = arith.addf %333, %332 : vector<2x32xf32>
    %335 = arith.divf %333, %334 : vector<2x32xf32>
    %cst_132 = arith.constant 1.000000e+00 : f32
    %336 = vector.broadcast %cst_132 : f32 to vector<2x32xf32>
    %337 = arith.subf %336, %335 : vector<2x32xf32>
    %338 = arith.mulf %337, %329 : vector<2x32xf32>
    %339 = arith.mulf %335, %277 : vector<2x32xf32>
    %340 = arith.addf %338, %339 : vector<2x32xf32>
    %341 = arith.truncf %340 : vector<2x32xf32> to vector<2x32xbf16>
    %cst_133 = arith.constant dense<0.000000e+00> : vector<2x32xf32>
    %342 = tpu.matmul %341, %31, %cst_133 {dimension_numbers = #tpu.dot_dimension_numbers<[1], [0], [0], [1], [0, 0, 1, 1], [], []>} : vector<2x32xbf16>, vector<32x32xbf16>, vector<2x32xf32> -> vector<2x32xf32>
    %343 = arith.addf %342, %47 : vector<2x32xf32>
    %cst_134 = arith.constant dense<0.000000e+00> : vector<2x32xf32>
    %344 = tpu.matmul %341, %33, %cst_134 {dimension_numbers = #tpu.dot_dimension_numbers<[1], [0], [0], [1], [0, 0, 1, 1], [], []>} : vector<2x32xbf16>, vector<32x32xbf16>, vector<2x32xf32> -> vector<2x32xf32>
    %345 = arith.addf %344, %51 : vector<2x32xf32>
    %cst_135 = arith.constant dense<0.000000e+00> : vector<2x32xf32>
    %346 = tpu.matmul %341, %35, %cst_135 {dimension_numbers = #tpu.dot_dimension_numbers<[1], [0], [0], [1], [0, 0, 1, 1], [], []>} : vector<2x32xbf16>, vector<32x32xbf16>, vector<2x32xf32> -> vector<2x32xf32>
    %347 = arith.addf %346, %55 : vector<2x32xf32>
    %348 = arith.truncf %309 : vector<2x32xf32> to vector<2x32xbf16>
    %cst_136 = arith.constant dense<0.000000e+00> : vector<2x32xf32>
    %349 = tpu.matmul %348, %25, %cst_136 {dimension_numbers = #tpu.dot_dimension_numbers<[1], [0], [0], [1], [0, 0, 1, 1], [], []>} : vector<2x32xbf16>, vector<32x32xbf16>, vector<2x32xf32> -> vector<2x32xf32>
    %cst_137 = arith.constant dense<0.000000e+00> : vector<2x32xf32>
    %350 = tpu.matmul %348, %27, %cst_137 {dimension_numbers = #tpu.dot_dimension_numbers<[1], [0], [0], [1], [0, 0, 1, 1], [], []>} : vector<2x32xbf16>, vector<32x32xbf16>, vector<2x32xf32> -> vector<2x32xf32>
    %cst_138 = arith.constant dense<0.000000e+00> : vector<2x32xf32>
    %351 = tpu.matmul %348, %29, %cst_138 {dimension_numbers = #tpu.dot_dimension_numbers<[1], [0], [0], [1], [0, 0, 1, 1], [], []>} : vector<2x32xbf16>, vector<32x32xbf16>, vector<2x32xf32> -> vector<2x32xf32>
    %352 = arith.addf %343, %349 : vector<2x32xf32>
    %353 = arith.negf %352 : vector<2x32xf32>
    %354 = math.exp %353 : vector<2x32xf32>
    %cst_139 = arith.constant 1.000000e+00 : f32
    %355 = vector.broadcast %cst_139 : f32 to vector<2x32xf32>
    %356 = arith.addf %355, %354 : vector<2x32xf32>
    %357 = arith.divf %355, %356 : vector<2x32xf32>
    %358 = arith.addf %351, %43 : vector<2x32xf32>
    %359 = arith.mulf %357, %358 : vector<2x32xf32>
    %360 = arith.addf %347, %359 : vector<2x32xf32>
    %361 = math.tanh %360 : vector<2x32xf32>
    %362 = arith.addf %345, %350 : vector<2x32xf32>
    %363 = arith.negf %362 : vector<2x32xf32>
    %364 = math.exp %363 : vector<2x32xf32>
    %cst_140 = arith.constant 1.000000e+00 : f32
    %365 = vector.broadcast %cst_140 : f32 to vector<2x32xf32>
    %366 = arith.addf %365, %364 : vector<2x32xf32>
    %367 = arith.divf %365, %366 : vector<2x32xf32>
    %cst_141 = arith.constant 1.000000e+00 : f32
    %368 = vector.broadcast %cst_141 : f32 to vector<2x32xf32>
    %369 = arith.subf %368, %367 : vector<2x32xf32>
    %370 = arith.mulf %369, %361 : vector<2x32xf32>
    %371 = arith.mulf %367, %309 : vector<2x32xf32>
    %372 = arith.addf %370, %371 : vector<2x32xf32>
    %373 = vector.extract_strided_slice %11 {offsets = [5, 0, 0], sizes = [1, 2, 32], strides = [1, 1, 1]} : vector<8x2x32xf32> to vector<1x2x32xf32>
    %374 = vector.shape_cast %373 : vector<1x2x32xf32> to vector<2x32xf32>
    %375 = vector.extract_strided_slice %14 {offsets = [5, 0, 0], sizes = [1, 2, 32], strides = [1, 1, 1]} : vector<8x2x32xf32> to vector<1x2x32xf32>
    %376 = vector.shape_cast %375 : vector<1x2x32xf32> to vector<2x32xf32>
    %377 = vector.extract_strided_slice %17 {offsets = [5, 0, 0], sizes = [1, 2, 32], strides = [1, 1, 1]} : vector<8x2x32xf32> to vector<1x2x32xf32>
    %378 = vector.shape_cast %377 : vector<1x2x32xf32> to vector<2x32xf32>
    %379 = arith.truncf %340 : vector<2x32xf32> to vector<2x32xbf16>
    %cst_142 = arith.constant dense<0.000000e+00> : vector<2x32xf32>
    %380 = tpu.matmul %379, %19, %cst_142 {dimension_numbers = #tpu.dot_dimension_numbers<[1], [0], [0], [1], [0, 0, 1, 1], [], []>} : vector<2x32xbf16>, vector<32x32xbf16>, vector<2x32xf32> -> vector<2x32xf32>
    %cst_143 = arith.constant dense<0.000000e+00> : vector<2x32xf32>
    %381 = tpu.matmul %379, %21, %cst_143 {dimension_numbers = #tpu.dot_dimension_numbers<[1], [0], [0], [1], [0, 0, 1, 1], [], []>} : vector<2x32xbf16>, vector<32x32xbf16>, vector<2x32xf32> -> vector<2x32xf32>
    %cst_144 = arith.constant dense<0.000000e+00> : vector<2x32xf32>
    %382 = tpu.matmul %379, %23, %cst_144 {dimension_numbers = #tpu.dot_dimension_numbers<[1], [0], [0], [1], [0, 0, 1, 1], [], []>} : vector<2x32xbf16>, vector<32x32xbf16>, vector<2x32xf32> -> vector<2x32xf32>
    %383 = arith.addf %374, %380 : vector<2x32xf32>
    %384 = arith.negf %383 : vector<2x32xf32>
    %385 = math.exp %384 : vector<2x32xf32>
    %cst_145 = arith.constant 1.000000e+00 : f32
    %386 = vector.broadcast %cst_145 : f32 to vector<2x32xf32>
    %387 = arith.addf %386, %385 : vector<2x32xf32>
    %388 = arith.divf %386, %387 : vector<2x32xf32>
    %389 = arith.addf %382, %39 : vector<2x32xf32>
    %390 = arith.mulf %388, %389 : vector<2x32xf32>
    %391 = arith.addf %378, %390 : vector<2x32xf32>
    %392 = math.tanh %391 : vector<2x32xf32>
    %393 = arith.addf %376, %381 : vector<2x32xf32>
    %394 = arith.negf %393 : vector<2x32xf32>
    %395 = math.exp %394 : vector<2x32xf32>
    %cst_146 = arith.constant 1.000000e+00 : f32
    %396 = vector.broadcast %cst_146 : f32 to vector<2x32xf32>
    %397 = arith.addf %396, %395 : vector<2x32xf32>
    %398 = arith.divf %396, %397 : vector<2x32xf32>
    %cst_147 = arith.constant 1.000000e+00 : f32
    %399 = vector.broadcast %cst_147 : f32 to vector<2x32xf32>
    %400 = arith.subf %399, %398 : vector<2x32xf32>
    %401 = arith.mulf %400, %392 : vector<2x32xf32>
    %402 = arith.mulf %398, %340 : vector<2x32xf32>
    %403 = arith.addf %401, %402 : vector<2x32xf32>
    %404 = arith.truncf %403 : vector<2x32xf32> to vector<2x32xbf16>
    %cst_148 = arith.constant dense<0.000000e+00> : vector<2x32xf32>
    %405 = tpu.matmul %404, %31, %cst_148 {dimension_numbers = #tpu.dot_dimension_numbers<[1], [0], [0], [1], [0, 0, 1, 1], [], []>} : vector<2x32xbf16>, vector<32x32xbf16>, vector<2x32xf32> -> vector<2x32xf32>
    %406 = arith.addf %405, %47 : vector<2x32xf32>
    %cst_149 = arith.constant dense<0.000000e+00> : vector<2x32xf32>
    %407 = tpu.matmul %404, %33, %cst_149 {dimension_numbers = #tpu.dot_dimension_numbers<[1], [0], [0], [1], [0, 0, 1, 1], [], []>} : vector<2x32xbf16>, vector<32x32xbf16>, vector<2x32xf32> -> vector<2x32xf32>
    %408 = arith.addf %407, %51 : vector<2x32xf32>
    %cst_150 = arith.constant dense<0.000000e+00> : vector<2x32xf32>
    %409 = tpu.matmul %404, %35, %cst_150 {dimension_numbers = #tpu.dot_dimension_numbers<[1], [0], [0], [1], [0, 0, 1, 1], [], []>} : vector<2x32xbf16>, vector<32x32xbf16>, vector<2x32xf32> -> vector<2x32xf32>
    %410 = arith.addf %409, %55 : vector<2x32xf32>
    %411 = arith.truncf %372 : vector<2x32xf32> to vector<2x32xbf16>
    %cst_151 = arith.constant dense<0.000000e+00> : vector<2x32xf32>
    %412 = tpu.matmul %411, %25, %cst_151 {dimension_numbers = #tpu.dot_dimension_numbers<[1], [0], [0], [1], [0, 0, 1, 1], [], []>} : vector<2x32xbf16>, vector<32x32xbf16>, vector<2x32xf32> -> vector<2x32xf32>
    %cst_152 = arith.constant dense<0.000000e+00> : vector<2x32xf32>
    %413 = tpu.matmul %411, %27, %cst_152 {dimension_numbers = #tpu.dot_dimension_numbers<[1], [0], [0], [1], [0, 0, 1, 1], [], []>} : vector<2x32xbf16>, vector<32x32xbf16>, vector<2x32xf32> -> vector<2x32xf32>
    %cst_153 = arith.constant dense<0.000000e+00> : vector<2x32xf32>
    %414 = tpu.matmul %411, %29, %cst_153 {dimension_numbers = #tpu.dot_dimension_numbers<[1], [0], [0], [1], [0, 0, 1, 1], [], []>} : vector<2x32xbf16>, vector<32x32xbf16>, vector<2x32xf32> -> vector<2x32xf32>
    %415 = arith.addf %406, %412 : vector<2x32xf32>
    %416 = arith.negf %415 : vector<2x32xf32>
    %417 = math.exp %416 : vector<2x32xf32>
    %cst_154 = arith.constant 1.000000e+00 : f32
    %418 = vector.broadcast %cst_154 : f32 to vector<2x32xf32>
    %419 = arith.addf %418, %417 : vector<2x32xf32>
    %420 = arith.divf %418, %419 : vector<2x32xf32>
    %421 = arith.addf %414, %43 : vector<2x32xf32>
    %422 = arith.mulf %420, %421 : vector<2x32xf32>
    %423 = arith.addf %410, %422 : vector<2x32xf32>
    %424 = math.tanh %423 : vector<2x32xf32>
    %425 = arith.addf %408, %413 : vector<2x32xf32>
    %426 = arith.negf %425 : vector<2x32xf32>
    %427 = math.exp %426 : vector<2x32xf32>
    %cst_155 = arith.constant 1.000000e+00 : f32
    %428 = vector.broadcast %cst_155 : f32 to vector<2x32xf32>
    %429 = arith.addf %428, %427 : vector<2x32xf32>
    %430 = arith.divf %428, %429 : vector<2x32xf32>
    %cst_156 = arith.constant 1.000000e+00 : f32
    %431 = vector.broadcast %cst_156 : f32 to vector<2x32xf32>
    %432 = arith.subf %431, %430 : vector<2x32xf32>
    %433 = arith.mulf %432, %424 : vector<2x32xf32>
    %434 = arith.mulf %430, %372 : vector<2x32xf32>
    %435 = arith.addf %433, %434 : vector<2x32xf32>
    %436 = vector.extract_strided_slice %11 {offsets = [6, 0, 0], sizes = [1, 2, 32], strides = [1, 1, 1]} : vector<8x2x32xf32> to vector<1x2x32xf32>
    %437 = vector.shape_cast %436 : vector<1x2x32xf32> to vector<2x32xf32>
    %438 = vector.extract_strided_slice %14 {offsets = [6, 0, 0], sizes = [1, 2, 32], strides = [1, 1, 1]} : vector<8x2x32xf32> to vector<1x2x32xf32>
    %439 = vector.shape_cast %438 : vector<1x2x32xf32> to vector<2x32xf32>
    %440 = vector.extract_strided_slice %17 {offsets = [6, 0, 0], sizes = [1, 2, 32], strides = [1, 1, 1]} : vector<8x2x32xf32> to vector<1x2x32xf32>
    %441 = vector.shape_cast %440 : vector<1x2x32xf32> to vector<2x32xf32>
    %442 = arith.truncf %403 : vector<2x32xf32> to vector<2x32xbf16>
    %cst_157 = arith.constant dense<0.000000e+00> : vector<2x32xf32>
    %443 = tpu.matmul %442, %19, %cst_157 {dimension_numbers = #tpu.dot_dimension_numbers<[1], [0], [0], [1], [0, 0, 1, 1], [], []>} : vector<2x32xbf16>, vector<32x32xbf16>, vector<2x32xf32> -> vector<2x32xf32>
    %cst_158 = arith.constant dense<0.000000e+00> : vector<2x32xf32>
    %444 = tpu.matmul %442, %21, %cst_158 {dimension_numbers = #tpu.dot_dimension_numbers<[1], [0], [0], [1], [0, 0, 1, 1], [], []>} : vector<2x32xbf16>, vector<32x32xbf16>, vector<2x32xf32> -> vector<2x32xf32>
    %cst_159 = arith.constant dense<0.000000e+00> : vector<2x32xf32>
    %445 = tpu.matmul %442, %23, %cst_159 {dimension_numbers = #tpu.dot_dimension_numbers<[1], [0], [0], [1], [0, 0, 1, 1], [], []>} : vector<2x32xbf16>, vector<32x32xbf16>, vector<2x32xf32> -> vector<2x32xf32>
    %446 = arith.addf %437, %443 : vector<2x32xf32>
    %447 = arith.negf %446 : vector<2x32xf32>
    %448 = math.exp %447 : vector<2x32xf32>
    %cst_160 = arith.constant 1.000000e+00 : f32
    %449 = vector.broadcast %cst_160 : f32 to vector<2x32xf32>
    %450 = arith.addf %449, %448 : vector<2x32xf32>
    %451 = arith.divf %449, %450 : vector<2x32xf32>
    %452 = arith.addf %445, %39 : vector<2x32xf32>
    %453 = arith.mulf %451, %452 : vector<2x32xf32>
    %454 = arith.addf %441, %453 : vector<2x32xf32>
    %455 = math.tanh %454 : vector<2x32xf32>
    %456 = arith.addf %439, %444 : vector<2x32xf32>
    %457 = arith.negf %456 : vector<2x32xf32>
    %458 = math.exp %457 : vector<2x32xf32>
    %cst_161 = arith.constant 1.000000e+00 : f32
    %459 = vector.broadcast %cst_161 : f32 to vector<2x32xf32>
    %460 = arith.addf %459, %458 : vector<2x32xf32>
    %461 = arith.divf %459, %460 : vector<2x32xf32>
    %cst_162 = arith.constant 1.000000e+00 : f32
    %462 = vector.broadcast %cst_162 : f32 to vector<2x32xf32>
    %463 = arith.subf %462, %461 : vector<2x32xf32>
    %464 = arith.mulf %463, %455 : vector<2x32xf32>
    %465 = arith.mulf %461, %403 : vector<2x32xf32>
    %466 = arith.addf %464, %465 : vector<2x32xf32>
    %467 = arith.truncf %466 : vector<2x32xf32> to vector<2x32xbf16>
    %cst_163 = arith.constant dense<0.000000e+00> : vector<2x32xf32>
    %468 = tpu.matmul %467, %31, %cst_163 {dimension_numbers = #tpu.dot_dimension_numbers<[1], [0], [0], [1], [0, 0, 1, 1], [], []>} : vector<2x32xbf16>, vector<32x32xbf16>, vector<2x32xf32> -> vector<2x32xf32>
    %469 = arith.addf %468, %47 : vector<2x32xf32>
    %cst_164 = arith.constant dense<0.000000e+00> : vector<2x32xf32>
    %470 = tpu.matmul %467, %33, %cst_164 {dimension_numbers = #tpu.dot_dimension_numbers<[1], [0], [0], [1], [0, 0, 1, 1], [], []>} : vector<2x32xbf16>, vector<32x32xbf16>, vector<2x32xf32> -> vector<2x32xf32>
    %471 = arith.addf %470, %51 : vector<2x32xf32>
    %cst_165 = arith.constant dense<0.000000e+00> : vector<2x32xf32>
    %472 = tpu.matmul %467, %35, %cst_165 {dimension_numbers = #tpu.dot_dimension_numbers<[1], [0], [0], [1], [0, 0, 1, 1], [], []>} : vector<2x32xbf16>, vector<32x32xbf16>, vector<2x32xf32> -> vector<2x32xf32>
    %473 = arith.addf %472, %55 : vector<2x32xf32>
    %474 = arith.truncf %435 : vector<2x32xf32> to vector<2x32xbf16>
    %cst_166 = arith.constant dense<0.000000e+00> : vector<2x32xf32>
    %475 = tpu.matmul %474, %25, %cst_166 {dimension_numbers = #tpu.dot_dimension_numbers<[1], [0], [0], [1], [0, 0, 1, 1], [], []>} : vector<2x32xbf16>, vector<32x32xbf16>, vector<2x32xf32> -> vector<2x32xf32>
    %cst_167 = arith.constant dense<0.000000e+00> : vector<2x32xf32>
    %476 = tpu.matmul %474, %27, %cst_167 {dimension_numbers = #tpu.dot_dimension_numbers<[1], [0], [0], [1], [0, 0, 1, 1], [], []>} : vector<2x32xbf16>, vector<32x32xbf16>, vector<2x32xf32> -> vector<2x32xf32>
    %cst_168 = arith.constant dense<0.000000e+00> : vector<2x32xf32>
    %477 = tpu.matmul %474, %29, %cst_168 {dimension_numbers = #tpu.dot_dimension_numbers<[1], [0], [0], [1], [0, 0, 1, 1], [], []>} : vector<2x32xbf16>, vector<32x32xbf16>, vector<2x32xf32> -> vector<2x32xf32>
    %478 = arith.addf %469, %475 : vector<2x32xf32>
    %479 = arith.negf %478 : vector<2x32xf32>
    %480 = math.exp %479 : vector<2x32xf32>
    %cst_169 = arith.constant 1.000000e+00 : f32
    %481 = vector.broadcast %cst_169 : f32 to vector<2x32xf32>
    %482 = arith.addf %481, %480 : vector<2x32xf32>
    %483 = arith.divf %481, %482 : vector<2x32xf32>
    %484 = arith.addf %477, %43 : vector<2x32xf32>
    %485 = arith.mulf %483, %484 : vector<2x32xf32>
    %486 = arith.addf %473, %485 : vector<2x32xf32>
    %487 = math.tanh %486 : vector<2x32xf32>
    %488 = arith.addf %471, %476 : vector<2x32xf32>
    %489 = arith.negf %488 : vector<2x32xf32>
    %490 = math.exp %489 : vector<2x32xf32>
    %cst_170 = arith.constant 1.000000e+00 : f32
    %491 = vector.broadcast %cst_170 : f32 to vector<2x32xf32>
    %492 = arith.addf %491, %490 : vector<2x32xf32>
    %493 = arith.divf %491, %492 : vector<2x32xf32>
    %cst_171 = arith.constant 1.000000e+00 : f32
    %494 = vector.broadcast %cst_171 : f32 to vector<2x32xf32>
    %495 = arith.subf %494, %493 : vector<2x32xf32>
    %496 = arith.mulf %495, %487 : vector<2x32xf32>
    %497 = arith.mulf %493, %435 : vector<2x32xf32>
    %498 = arith.addf %496, %497 : vector<2x32xf32>
    %499 = vector.extract_strided_slice %11 {offsets = [7, 0, 0], sizes = [1, 2, 32], strides = [1, 1, 1]} : vector<8x2x32xf32> to vector<1x2x32xf32>
    %500 = vector.shape_cast %499 : vector<1x2x32xf32> to vector<2x32xf32>
    %501 = vector.extract_strided_slice %14 {offsets = [7, 0, 0], sizes = [1, 2, 32], strides = [1, 1, 1]} : vector<8x2x32xf32> to vector<1x2x32xf32>
    %502 = vector.shape_cast %501 : vector<1x2x32xf32> to vector<2x32xf32>
    %503 = vector.extract_strided_slice %17 {offsets = [7, 0, 0], sizes = [1, 2, 32], strides = [1, 1, 1]} : vector<8x2x32xf32> to vector<1x2x32xf32>
    %504 = vector.shape_cast %503 : vector<1x2x32xf32> to vector<2x32xf32>
    %505 = arith.truncf %466 : vector<2x32xf32> to vector<2x32xbf16>
    %cst_172 = arith.constant dense<0.000000e+00> : vector<2x32xf32>
    %506 = tpu.matmul %505, %19, %cst_172 {dimension_numbers = #tpu.dot_dimension_numbers<[1], [0], [0], [1], [0, 0, 1, 1], [], []>} : vector<2x32xbf16>, vector<32x32xbf16>, vector<2x32xf32> -> vector<2x32xf32>
    %cst_173 = arith.constant dense<0.000000e+00> : vector<2x32xf32>
    %507 = tpu.matmul %505, %21, %cst_173 {dimension_numbers = #tpu.dot_dimension_numbers<[1], [0], [0], [1], [0, 0, 1, 1], [], []>} : vector<2x32xbf16>, vector<32x32xbf16>, vector<2x32xf32> -> vector<2x32xf32>
    %cst_174 = arith.constant dense<0.000000e+00> : vector<2x32xf32>
    %508 = tpu.matmul %505, %23, %cst_174 {dimension_numbers = #tpu.dot_dimension_numbers<[1], [0], [0], [1], [0, 0, 1, 1], [], []>} : vector<2x32xbf16>, vector<32x32xbf16>, vector<2x32xf32> -> vector<2x32xf32>
    %509 = arith.addf %500, %506 : vector<2x32xf32>
    %510 = arith.negf %509 : vector<2x32xf32>
    %511 = math.exp %510 : vector<2x32xf32>
    %cst_175 = arith.constant 1.000000e+00 : f32
    %512 = vector.broadcast %cst_175 : f32 to vector<2x32xf32>
    %513 = arith.addf %512, %511 : vector<2x32xf32>
    %514 = arith.divf %512, %513 : vector<2x32xf32>
    %515 = arith.addf %508, %39 : vector<2x32xf32>
    %516 = arith.mulf %514, %515 : vector<2x32xf32>
    %517 = arith.addf %504, %516 : vector<2x32xf32>
    %518 = math.tanh %517 : vector<2x32xf32>
    %519 = arith.addf %502, %507 : vector<2x32xf32>
    %520 = arith.negf %519 : vector<2x32xf32>
    %521 = math.exp %520 : vector<2x32xf32>
    %cst_176 = arith.constant 1.000000e+00 : f32
    %522 = vector.broadcast %cst_176 : f32 to vector<2x32xf32>
    %523 = arith.addf %522, %521 : vector<2x32xf32>
    %524 = arith.divf %522, %523 : vector<2x32xf32>
    %cst_177 = arith.constant 1.000000e+00 : f32
    %525 = vector.broadcast %cst_177 : f32 to vector<2x32xf32>
    %526 = arith.subf %525, %524 : vector<2x32xf32>
    %527 = arith.mulf %526, %518 : vector<2x32xf32>
    %528 = arith.mulf %524, %466 : vector<2x32xf32>
    %529 = arith.addf %527, %528 : vector<2x32xf32>
    %530 = arith.truncf %529 : vector<2x32xf32> to vector<2x32xbf16>
    %cst_178 = arith.constant dense<0.000000e+00> : vector<2x32xf32>
    %531 = tpu.matmul %530, %31, %cst_178 {dimension_numbers = #tpu.dot_dimension_numbers<[1], [0], [0], [1], [0, 0, 1, 1], [], []>} : vector<2x32xbf16>, vector<32x32xbf16>, vector<2x32xf32> -> vector<2x32xf32>
    %532 = arith.addf %531, %47 : vector<2x32xf32>
    %cst_179 = arith.constant dense<0.000000e+00> : vector<2x32xf32>
    %533 = tpu.matmul %530, %33, %cst_179 {dimension_numbers = #tpu.dot_dimension_numbers<[1], [0], [0], [1], [0, 0, 1, 1], [], []>} : vector<2x32xbf16>, vector<32x32xbf16>, vector<2x32xf32> -> vector<2x32xf32>
    %534 = arith.addf %533, %51 : vector<2x32xf32>
    %cst_180 = arith.constant dense<0.000000e+00> : vector<2x32xf32>
    %535 = tpu.matmul %530, %35, %cst_180 {dimension_numbers = #tpu.dot_dimension_numbers<[1], [0], [0], [1], [0, 0, 1, 1], [], []>} : vector<2x32xbf16>, vector<32x32xbf16>, vector<2x32xf32> -> vector<2x32xf32>
    %536 = arith.addf %535, %55 : vector<2x32xf32>
    %537 = arith.truncf %498 : vector<2x32xf32> to vector<2x32xbf16>
    %cst_181 = arith.constant dense<0.000000e+00> : vector<2x32xf32>
    %538 = tpu.matmul %537, %25, %cst_181 {dimension_numbers = #tpu.dot_dimension_numbers<[1], [0], [0], [1], [0, 0, 1, 1], [], []>} : vector<2x32xbf16>, vector<32x32xbf16>, vector<2x32xf32> -> vector<2x32xf32>
    %cst_182 = arith.constant dense<0.000000e+00> : vector<2x32xf32>
    %539 = tpu.matmul %537, %27, %cst_182 {dimension_numbers = #tpu.dot_dimension_numbers<[1], [0], [0], [1], [0, 0, 1, 1], [], []>} : vector<2x32xbf16>, vector<32x32xbf16>, vector<2x32xf32> -> vector<2x32xf32>
    %cst_183 = arith.constant dense<0.000000e+00> : vector<2x32xf32>
    %540 = tpu.matmul %537, %29, %cst_183 {dimension_numbers = #tpu.dot_dimension_numbers<[1], [0], [0], [1], [0, 0, 1, 1], [], []>} : vector<2x32xbf16>, vector<32x32xbf16>, vector<2x32xf32> -> vector<2x32xf32>
    %541 = arith.addf %532, %538 : vector<2x32xf32>
    %542 = arith.negf %541 : vector<2x32xf32>
    %543 = math.exp %542 : vector<2x32xf32>
    %cst_184 = arith.constant 1.000000e+00 : f32
    %544 = vector.broadcast %cst_184 : f32 to vector<2x32xf32>
    %545 = arith.addf %544, %543 : vector<2x32xf32>
    %546 = arith.divf %544, %545 : vector<2x32xf32>
    %547 = arith.addf %540, %43 : vector<2x32xf32>
    %548 = arith.mulf %546, %547 : vector<2x32xf32>
    %549 = arith.addf %536, %548 : vector<2x32xf32>
    %550 = math.tanh %549 : vector<2x32xf32>
    %551 = arith.addf %534, %539 : vector<2x32xf32>
    %552 = arith.negf %551 : vector<2x32xf32>
    %553 = math.exp %552 : vector<2x32xf32>
    %cst_185 = arith.constant 1.000000e+00 : f32
    %554 = vector.broadcast %cst_185 : f32 to vector<2x32xf32>
    %555 = arith.addf %554, %553 : vector<2x32xf32>
    %556 = arith.divf %554, %555 : vector<2x32xf32>
    %cst_186 = arith.constant 1.000000e+00 : f32
    %557 = vector.broadcast %cst_186 : f32 to vector<2x32xf32>
    %558 = arith.subf %557, %556 : vector<2x32xf32>
    %559 = arith.mulf %558, %550 : vector<2x32xf32>
    %560 = arith.mulf %556, %498 : vector<2x32xf32>
    %561 = arith.addf %559, %560 : vector<2x32xf32>
    %c0_187 = arith.constant 0 : index
    %c0_188 = arith.constant 0 : index
    %c0_189 = arith.constant 0 : index
    %562 = vector.load %arg5[%c0_187, %c0_188, %c0_189] : memref<2x2x32xf32, #tpu.memory_space<vmem>>, vector<1x2x32xf32>
    %563 = vector.shape_cast %562 : vector<1x2x32xf32> to vector<2x32xf32>
    %564 = vector.shape_cast %529 : vector<2x32xf32> to vector<1x2x32xf32>
    tpu.vector_store %arg5[%c0_187, %c0_188, %c0_189], %564 {strides = array<i32>} : memref<2x2x32xf32, #tpu.memory_space<vmem>>, vector<1x2x32xf32>,
    %c1_190 = arith.constant 1 : index
    %c0_191 = arith.constant 0 : index
    %c0_192 = arith.constant 0 : index
    %565 = vector.load %arg5[%c1_190, %c0_191, %c0_192] : memref<2x2x32xf32, #tpu.memory_space<vmem>>, vector<1x2x32xf32>
    %566 = vector.shape_cast %565 : vector<1x2x32xf32> to vector<2x32xf32>
    %567 = vector.shape_cast %561 : vector<2x32xf32> to vector<1x2x32xf32>
    tpu.vector_store %arg5[%c1_190, %c0_191, %c0_192], %567 {strides = array<i32>} : memref<2x2x32xf32, #tpu.memory_space<vmem>>, vector<1x2x32xf32>,
    return
  }
}

</mosaic_0001>

<llo_original>
// kernel: encoder_forward.1
$region0: #{encoder_forward.1}
  #allocation0 [shape = 'u32[]', space=smem, size = 0x4, offset = 0x4, fixed_abs, tag = 'smem constant byte address 0x4 - core index']
  #allocation1 [shape = 'u32[72,128]{1,0:T(1,128)}', space=vmem, size = 0x9000, scoped, tag = 'internal scratch']
  %s0 = inlined_call_operand.vmem [shape: s32[8,2], index: 0, kind: input, shape index: {}]
  %s1 = inlined_call_operand.hbm [shape: bf16[3,16,32], index: 1, kind: input, shape index: {}]
  %s2 = inlined_call_operand.hbm [shape: bf16[1,3,32,32], index: 2, kind: input, shape index: {}]
  %s3 = inlined_call_operand.hbm [shape: bf16[2,3,32,32], index: 3, kind: input, shape index: {}]
  %s4 = inlined_call_operand.vmem [shape: f32[2,4,1,32], index: 4, kind: input, shape index: {}]
  %s5 = inlined_call_operand.hbm [shape: f32[2,2,32], index: 5, kind: output, shape index: {}]
  %s6 = sld [smem:[#allocation0]]
  $region42: #{encoder_forward.1} parent=0
    _
  %s8 = ssub.s32 1, %s6
  %s9 = scalar_select 0, %s8, %s6
  $region1: #{encoder_forward.1} parent=0
    #allocation2 [shape = 'u8[12288]{0}', space=vmem, size = 0x3000, scoped, tag = 'input window, operand 1, single buffered']
    #allocation3 [shape = 's32[1]{0}', space=sflag, size = 0x4, scoped, tag = 'scoped memory for encoder_forward.1']
    #allocation4 [shape = 's32[1]{0}', space=sflag, size = 0x4, scoped, tag = 'scoped memory for encoder_forward.1']
    #allocation5 [shape = 'u8[24576]{0}', space=vmem, size = 0x6000, scoped, tag = 'input window, operand 2, single buffered']
    #allocation6 [shape = 's32[1]{0}', space=sflag, size = 0x4, scoped, tag = 'scoped memory for encoder_forward.1']
    #allocation7 [shape = 'u8[49152]{0}', space=vmem, size = 0xc000, scoped, tag = 'input window, operand 3, single buffered']
    #allocation8 [shape = 'u8[2048]{0}', space=vmem, size = 0x800, scoped, tag = 'output window, operand 0, single buffered']
    %10 = vsyncpa [#allocation3], 0
    %11 = vsyncpa [#allocation6], 0
    %12 = vsyncpa [#allocation4], 0
    // Predicated region
    $region2: #{encoder_forward.1} parent=1 // pred_check
      _
    $region3: #{encoder_forward.1} parent=1 // pred_check_branch
      %14 = sbr.rel (0) target = $region5
    $region4: #{encoder_forward.1} parent=1 // pred_region
      _
    $region5: #{encoder_forward.1} parent=1 // pred_fallthru
      _
    // Predicated region
    $region6: #{encoder_forward.1} parent=1 // pred_check
      _
    $region7: #{encoder_forward.1} parent=1 // pred_check_branch
      %16 = sbr.rel (0) target = $region9
    $region8: #{encoder_forward.1} parent=1 // pred_region
      %18 = vsyncadd [#allocation3], 0
      %s19 = sshll.u32 %s1, 4
      %s20 = int_to_ptr.hbm [resolvable:$true] %s19
      %s21 = sshll.u32 [#allocation2], 4
      %s22 = int_to_ptr.vmem [resolvable:$true] %s21
      %27 = dma.hbm_to_vmem [thread:$0]  %s20, 384, %s22, [#allocation3], 64, 64, 4
    $region9: #{encoder_forward.1} parent=1 // pred_fallthru
      _
    // Predicated region
    $region10: #{encoder_forward.1} parent=1 // pred_check
      _
    $region11: #{encoder_forward.1} parent=1 // pred_check_branch
      %29 = sbr.rel (0) target = $region13
    $region12: #{encoder_forward.1} parent=1 // pred_region
      %31 = vsyncadd [#allocation6], 0
      %s32 = sshll.u32 %s2, 4
      %s33 = int_to_ptr.hbm [resolvable:$true] %s32
      %s34 = sshll.u32 [#allocation5], 4
      %s35 = int_to_ptr.vmem [resolvable:$true] %s34
      %40 = dma.hbm_to_vmem [thread:$0]  %s33, 768, %s35, [#allocation6], 64, 64, 4
    $region13: #{encoder_forward.1} parent=1 // pred_fallthru
      _
    // Predicated region
    $region14: #{encoder_forward.1} parent=1 // pred_check
      _
    $region15: #{encoder_forward.1} parent=1 // pred_check_branch
      %42 = sbr.rel (0) target = $region17
    $region16: #{encoder_forward.1} parent=1 // pred_region
      %44 = vsyncadd [#allocation6], 0
      %s45 = sshll.u32 %s3, 4
      %s46 = int_to_ptr.hbm [resolvable:$true] %s45
      %s47 = sshll.u32 [#allocation7], 4
      %s48 = int_to_ptr.vmem [resolvable:$true] %s47
      %53 = dma.hbm_to_vmem [thread:$0]  %s46, 1536, %s48, [#allocation6], 64, 64, 4
    $region17: #{encoder_forward.1} parent=1 // pred_fallthru
      _
    // Predicated region
    $region18: #{encoder_forward.1} parent=1 // pred_check
      _
    $region19: #{encoder_forward.1} parent=1 // pred_check_branch
      %55 = sbr.rel (0) target = $region21
    $region20: #{encoder_forward.1} parent=1 // pred_region
      _
    $region21: #{encoder_forward.1} parent=1 // pred_fallthru
      _
    // Predicated region
    $region22: #{encoder_forward.1} parent=1 // pred_check
      _
    $region23: #{encoder_forward.1} parent=1 // pred_check_branch
      %57 = sbr.rel (0) target = $region25
    $region24: #{encoder_forward.1} parent=1 // pred_region
      %59 = dma.done [#allocation3], 384
    $region25: #{encoder_forward.1} parent=1 // pred_fallthru
      _
    // Predicated region
    $region26: #{encoder_forward.1} parent=1 // pred_check
      _
    $region27: #{encoder_forward.1} parent=1 // pred_check_branch
      %61 = sbr.rel (0) target = $region29
    $region28: #{encoder_forward.1} parent=1 // pred_region
      %63 = dma.done [#allocation6], 768
    $region29: #{encoder_forward.1} parent=1 // pred_fallthru
      _
    // Predicated region
    $region30: #{encoder_forward.1} parent=1 // pred_check
      _
    $region31: #{encoder_forward.1} parent=1 // pred_check_branch
      %65 = sbr.rel (0) target = $region33
    $region32: #{encoder_forward.1} parent=1 // pred_region
      %67 = dma.done [#allocation6], 1536
    $region33: #{encoder_forward.1} parent=1 // pred_fallthru
      _
    %v69 = vld [vmem:[%s0] sm:$0xff]
    %v70 = vlaneseq
    %v71 = vand.u32 %v70, 127
    %v72 = vperm.slane %v69, 0
    %v73 = vlaneseq
    %v74 = vshrl.u32 %v73, 7
    %76 = vset.pattern.permute.xlu0 %v74
    %77 = vperm.xlu0 %76, %v72
    %v78 = vpop.permute.xlu0 %77
    %v79 = vperm.slane %v69, 1
    %v80 = vlaneseq
    %v81 = vshrl.u32 %v80, 7
    %83 = vset.pattern.permute.xlu0 %v81
    %84 = vperm.xlu0 %83, %v79
    %v85 = vpop.permute.xlu0 %84
    %v86 = vperm.slane %v69, 2
    %v87 = vlaneseq
    %v88 = vshrl.u32 %v87, 7
    %90 = vset.pattern.permute.xlu0 %v88
    %91 = vperm.xlu0 %90, %v86
    %v92 = vpop.permute.xlu0 %91
    %v93 = vperm.slane %v69, 3
    %v94 = vlaneseq
    %v95 = vshrl.u32 %v94, 7
    %97 = vset.pattern.permute.xlu0 %v95
    %98 = vperm.xlu0 %97, %v93
    %v99 = vpop.permute.xlu0 %98
    %v100 = vperm.slane %v69, 4
    %v101 = vlaneseq
    %v102 = vshrl.u32 %v101, 7
    %104 = vset.pattern.permute.xlu0 %v102
    %105 = vperm.xlu0 %104, %v100
    %v106 = vpop.permute.xlu0 %105
    %v107 = vperm.slane %v69, 5
    %v108 = vlaneseq
    %v109 = vshrl.u32 %v108, 7
    %111 = vset.pattern.permute.xlu0 %v109
    %112 = vperm.xlu0 %111, %v107
    %v113 = vpop.permute.xlu0 %112
    %v114 = vperm.slane %v69, 6
    %v115 = vlaneseq
    %v116 = vshrl.u32 %v115, 7
    %118 = vset.pattern.permute.xlu0 %v116
    %119 = vperm.xlu0 %118, %v114
    %v120 = vpop.permute.xlu0 %119
    %v121 = vperm.slane %v69, 7
    %v122 = vlaneseq
    %v123 = vshrl.u32 %v122, 7
    %125 = vset.pattern.permute.xlu0 %v123
    %126 = vperm.xlu0 %125, %v121
    %v127 = vpop.permute.xlu0 %126
    %vm128 = vcmp.eq.s32.totalorder %v78, %v71
    %vm129 = vcmp.eq.s32.totalorder %v85, %v71
    %vm130 = vcmp.eq.s32.totalorder %v92, %v71
    %vm131 = vcmp.eq.s32.totalorder %v99, %v71
    %vm132 = vcmp.eq.s32.totalorder %v106, %v71
    %vm133 = vcmp.eq.s32.totalorder %v113, %v71
    %vm134 = vcmp.eq.s32.totalorder %v120, %v71
    %vm135 = vcmp.eq.s32.totalorder %v127, %v71
    %v136 = vsel %vm128, 1, 0
    %v137 = vsel %vm129, 1, 0
    %v138 = vsel %vm130, 1, 0
    %v139 = vsel %vm131, 1, 0
    %v140 = vsel %vm132, 1, 0
    %v141 = vsel %vm133, 1, 0
    %v142 = vsel %vm134, 1, 0
    %v143 = vsel %vm135, 1, 0
    %v144 = vcvt.s32.f32 %v136
    %v145 = vcvt.s32.f32 %v137
    %v146 = vcvt.s32.f32 %v138
    %v147 = vcvt.s32.f32 %v139
    %v148 = vcvt.s32.f32 %v140
    %v149 = vcvt.s32.f32 %v141
    %v150 = vcvt.s32.f32 %v142
    %v151 = vcvt.s32.f32 %v143
    %v152 = vpack.c.bf16 %v144, %v144
    %v153 = vpack.c.bf16 %v145, %v145
    %v154 = vpack.c.bf16 %v146, %v146
    %v155 = vpack.c.bf16 %v147, %v147
    %v156 = vpack.c.bf16 %v148, %v148
    %v157 = vpack.c.bf16 %v149, %v149
    %v158 = vpack.c.bf16 %v150, %v150
    %v159 = vpack.c.bf16 %v151, %v151
    %v160 = vld [vmem:[#allocation2] sm:$0xf]
    %v161 = vld [vmem:[#allocation2 + $0x4] sm:$0xf]
    %163 = vst [vmem:[#allocation1] ss:$9 sm:$0xff] %v152
    %s165 = scalar_lea.vmem [#allocation1], 1
    %166 = vst [vmem:[%s165] ss:$9 sm:$0xff] %v153
    %s168 = scalar_lea.vmem [#allocation1], 2
    %169 = vst [vmem:[%s168] ss:$9 sm:$0xff] %v154
    %s171 = scalar_lea.vmem [#allocation1], 3
    %172 = vst [vmem:[%s171] ss:$9 sm:$0xff] %v155
    %s174 = scalar_lea.vmem [#allocation1], 4
    %175 = vst [vmem:[%s174] ss:$9 sm:$0xff] %v156
    %s177 = scalar_lea.vmem [#allocation1], 5
    %178 = vst [vmem:[%s177] ss:$9 sm:$0xff] %v157
    %s180 = scalar_lea.vmem [#allocation1], 6
    %181 = vst [vmem:[%s180] ss:$9 sm:$0xff] %v158
    %s183 = scalar_lea.vmem [#allocation1], 7
    %184 = vst [vmem:[%s183] ss:$9 sm:$0xff] %v159
    %v185 = vld [vmem:[#allocation1] sm:$0xff]
    %v188 = vunpack.c.l.b16 %v160
    %v189 = vunpack.c.l.b16 %v161
    %v190 = vpack.c.b16 %v189, %v188
    %vm192 = vcmask 130048
    %v193 = vsel %vm192, %v185, 0
    %195 = vmatpush.bf16.msra.mxu0 0
    %196 = vmatpush.bf16.msra.mxu0 0
    %197 = vmatpush.bf16.msra.mxu0 0
    %198 = vmatpush.bf16.msra.mxu0 0
    %199 = vmatpush.bf16.msra.mxu0 0
    %200 = vmatpush.bf16.msra.mxu0 0
    %201 = vmatpush.bf16.msra.mxu0 0
    %202 = vmatpush.bf16.msra.mxu0 %v190
    %203 = vmatmul.bf16.gmra.mxu0 %v193
    %v204 = vpop.f32.mrf.mxu0
    %v205 = vadd.f32 0.0, %v204
    %v206 = vpop.f32.mrf.mxu0
    %v207 = vadd.f32 0.0, %v206
    %208 = vdwg.mxu0
    %v211 = vrot.slane %v205, 2
    %v212 = vrot.slane %v205, 4
    %v213 = vrot.slane %v205, 6
    %v214 = vrot.slane %v207, 2
    %v215 = vrot.slane %v207, 4
    %v216 = vrot.slane %v207, 6
    %s223 = scalar_lea.vmem [#allocation2], 8
    %v224 = vld [vmem:[%s223] sm:$0xf]
    %v225 = vld [vmem:[%s223 + $0x4] sm:$0xf]
    %226 = vst [vmem:[#allocation1] ss:$9 sm:$0xff] %v152
    %s227 = scalar_lea.vmem [#allocation1], 1
    %228 = vst [vmem:[%s227] ss:$9 sm:$0xff] %v153
    %s229 = scalar_lea.vmem [#allocation1], 2
    %230 = vst [vmem:[%s229] ss:$9 sm:$0xff] %v154
    %s231 = scalar_lea.vmem [#allocation1], 3
    %232 = vst [vmem:[%s231] ss:$9 sm:$0xff] %v155
    %s233 = scalar_lea.vmem [#allocation1], 4
    %234 = vst [vmem:[%s233] ss:$9 sm:$0xff] %v156
    %s235 = scalar_lea.vmem [#allocation1], 5
    %236 = vst [vmem:[%s235] ss:$9 sm:$0xff] %v157
    %s237 = scalar_lea.vmem [#allocation1], 6
    %238 = vst [vmem:[%s237] ss:$9 sm:$0xff] %v158
    %s239 = scalar_lea.vmem [#allocation1], 7
    %240 = vst [vmem:[%s239] ss:$9 sm:$0xff] %v159
    %v241 = vld [vmem:[#allocation1] sm:$0xff]
    %v244 = vunpack.c.l.b16 %v224
    %v245 = vunpack.c.l.b16 %v225
    %v246 = vpack.c.b16 %v245, %v244
    %v248 = vsel %vm192, %v241, 0
    %250 = vmatpush.bf16.msra.mxu0 0
    %251 = vmatpush.bf16.msra.mxu0 0
    %252 = vmatpush.bf16.msra.mxu0 0
    %253 = vmatpush.bf16.msra.mxu0 0
    %254 = vmatpush.bf16.msra.mxu0 0
    %255 = vmatpush.bf16.msra.mxu0 0
    %256 = vmatpush.bf16.msra.mxu0 0
    %257 = vmatpush.bf16.msra.mxu0 %v246
    %258 = vmatmul.bf16.gmra.mxu0 %v248
    %v259 = vpop.f32.mrf.mxu0
    %v260 = vadd.f32 0.0, %v259
    %v261 = vpop.f32.mrf.mxu0
    %v262 = vadd.f32 0.0, %v261
    %263 = vdwg.mxu0
    %v266 = vrot.slane %v260, 2
    %v267 = vrot.slane %v260, 4
    %v268 = vrot.slane %v260, 6
    %v269 = vrot.slane %v262, 2
    %v270 = vrot.slane %v262, 4
    %v271 = vrot.slane %v262, 6
    %s278 = scalar_lea.vmem [#allocation2], 16
    %v279 = vld [vmem:[%s278] sm:$0xf]
    %v280 = vld [vmem:[%s278 + $0x4] sm:$0xf]
    %281 = vst [vmem:[#allocation1] ss:$9 sm:$0xff] %v152
    %s282 = scalar_lea.vmem [#allocation1], 1
    %283 = vst [vmem:[%s282] ss:$9 sm:$0xff] %v153
    %s284 = scalar_lea.vmem [#allocation1], 2
    %285 = vst [vmem:[%s284] ss:$9 sm:$0xff] %v154
    %s286 = scalar_lea.vmem [#allocation1], 3
    %287 = vst [vmem:[%s286] ss:$9 sm:$0xff] %v155
    %s288 = scalar_lea.vmem [#allocation1], 4
    %289 = vst [vmem:[%s288] ss:$9 sm:$0xff] %v156
    %s290 = scalar_lea.vmem [#allocation1], 5
    %291 = vst [vmem:[%s290] ss:$9 sm:$0xff] %v157
    %s292 = scalar_lea.vmem [#allocation1], 6
    %293 = vst [vmem:[%s292] ss:$9 sm:$0xff] %v158
    %s294 = scalar_lea.vmem [#allocation1], 7
    %295 = vst [vmem:[%s294] ss:$9 sm:$0xff] %v159
    %v296 = vld [vmem:[#allocation1] sm:$0xff]
    %v299 = vunpack.c.l.b16 %v279
    %v300 = vunpack.c.l.b16 %v280
    %v301 = vpack.c.b16 %v300, %v299
    %v303 = vsel %vm192, %v296, 0
    %305 = vmatpush.bf16.msra.mxu0 0
    %306 = vmatpush.bf16.msra.mxu0 0
    %307 = vmatpush.bf16.msra.mxu0 0
    %308 = vmatpush.bf16.msra.mxu0 0
    %309 = vmatpush.bf16.msra.mxu0 0
    %310 = vmatpush.bf16.msra.mxu0 0
    %311 = vmatpush.bf16.msra.mxu0 0
    %312 = vmatpush.bf16.msra.mxu0 %v301
    %313 = vmatmul.bf16.gmra.mxu0 %v303
    %v314 = vpop.f32.mrf.mxu0
    %v315 = vadd.f32 0.0, %v314
    %v316 = vpop.f32.mrf.mxu0
    %v317 = vadd.f32 0.0, %v316
    %318 = vdwg.mxu0
    %v321 = vrot.slane %v315, 2
    %v322 = vrot.slane %v315, 4
    %v323 = vrot.slane %v315, 6
    %v324 = vrot.slane %v317, 2
    %v325 = vrot.slane %v317, 4
    %v326 = vrot.slane %v317, 6
    %v333 = vld [vmem:[#allocation7] sm:$0xf]
    %v334 = vld [vmem:[#allocation7 + $0x4] sm:$0xf]
    %v335 = vld [vmem:[#allocation7 + $0x8] sm:$0xf]
    %v336 = vld [vmem:[#allocation7 + $0xc] sm:$0xf]
    %s337 = scalar_lea.vmem [#allocation7], 16
    %v338 = vld [vmem:[%s337] sm:$0xf]
    %v339 = vld [vmem:[%s337 + $0x4] sm:$0xf]
    %v340 = vld [vmem:[%s337 + $0x8] sm:$0xf]
    %v341 = vld [vmem:[%s337 + $0xc] sm:$0xf]
    %s342 = scalar_lea.vmem [#allocation7], 32
    %v343 = vld [vmem:[%s342] sm:$0xf]
    %v344 = vld [vmem:[%s342 + $0x4] sm:$0xf]
    %v345 = vld [vmem:[%s342 + $0x8] sm:$0xf]
    %v346 = vld [vmem:[%s342 + $0xc] sm:$0xf]
    %s347 = scalar_lea.vmem [#allocation7], 48
    %v348 = vld [vmem:[%s347] sm:$0xf]
    %v349 = vld [vmem:[%s347 + $0x4] sm:$0xf]
    %v350 = vld [vmem:[%s347 + $0x8] sm:$0xf]
    %v351 = vld [vmem:[%s347 + $0xc] sm:$0xf]
    %s352 = scalar_lea.vmem [#allocation7], 64
    %v353 = vld [vmem:[%s352] sm:$0xf]
    %v354 = vld [vmem:[%s352 + $0x4] sm:$0xf]
    %v355 = vld [vmem:[%s352 + $0x8] sm:$0xf]
    %v356 = vld [vmem:[%s352 + $0xc] sm:$0xf]
    %s357 = scalar_lea.vmem [#allocation7], 80
    %v358 = vld [vmem:[%s357] sm:$0xf]
    %v359 = vld [vmem:[%s357 + $0x4] sm:$0xf]
    %v360 = vld [vmem:[%s357 + $0x8] sm:$0xf]
    %v361 = vld [vmem:[%s357 + $0xc] sm:$0xf]
    %v362 = vld [vmem:[#allocation5] sm:$0xf]
    %v363 = vld [vmem:[#allocation5 + $0x4] sm:$0xf]
    %v364 = vld [vmem:[#allocation5 + $0x8] sm:$0xf]
    %v365 = vld [vmem:[#allocation5 + $0xc] sm:$0xf]
    %s366 = scalar_lea.vmem [#allocation5], 16
    %v367 = vld [vmem:[%s366] sm:$0xf]
    %v368 = vld [vmem:[%s366 + $0x4] sm:$0xf]
    %v369 = vld [vmem:[%s366 + $0x8] sm:$0xf]
    %v370 = vld [vmem:[%s366 + $0xc] sm:$0xf]
    %s371 = scalar_lea.vmem [#allocation5], 32
    %v372 = vld [vmem:[%s371] sm:$0xf]
    %v373 = vld [vmem:[%s371 + $0x4] sm:$0xf]
    %v374 = vld [vmem:[%s371 + $0x8] sm:$0xf]
    %v375 = vld [vmem:[%s371 + $0xc] sm:$0xf]
    %s376 = scalar_lea.vmem %s4, 3
    %v377 = vld [vmem:[%s376] sm:$0x1]
    %v379 = vperm.slane %v377, 0
    %s381 = scalar_lea.vmem %s4, 7
    %v382 = vld [vmem:[%s381] sm:$0x1]
    %v384 = vperm.slane %v382, 0
    %s386 = scalar_lea.vmem %s4, 4
    %v387 = vld [vmem:[%s386] sm:$0x1]
    %v389 = vperm.slane %v387, 0
    %s391 = scalar_lea.vmem %s4, 5
    %v392 = vld [vmem:[%s391] sm:$0x1]
    %v394 = vperm.slane %v392, 0
    %s396 = scalar_lea.vmem %s4, 6
    %v397 = vld [vmem:[%s396] sm:$0x1]
    %v399 = vperm.slane %v397, 0
    %v405 = vunpack.c.l.b16 %v333
    %v406 = vunpack.c.l.b16 %v334
    %v407 = vunpack.c.l.b16 %v335
    %v408 = vunpack.c.l.b16 %v336
    %v409 = vpack.c.b16 %v406, %v405
    %v410 = vpack.c.b16 %v408, %v407
    %vm413 = vcmask 261120
    %v415 = vsel %vm413, 0, 0
    %417 = vmatpush.bf16.msra.mxu0 0
    %418 = vmatpush.bf16.msra.mxu0 0
    %419 = vmatpush.bf16.msra.mxu0 0
    %420 = vmatpush.bf16.msra.mxu0 0
    %421 = vmatpush.bf16.msra.mxu0 0
    %422 = vmatpush.bf16.msra.mxu0 0
    %423 = vmatpush.bf16.msra.mxu0 %v410
    %424 = vmatpush.bf16.msra.mxu0 %v409
    %425 = vmatmul.bf16.gmra.mxu0 %v415
    %v426 = vpop.f32.mrf.mxu0
    %v427 = vadd.f32 0.0, %v426
    %v428 = vpop.f32.mrf.mxu0
    %429 = vdwg.mxu0
    %v434 = vunpack.c.l.b16 %v338
    %v435 = vunpack.c.l.b16 %v339
    %v436 = vunpack.c.l.b16 %v340
    %v437 = vunpack.c.l.b16 %v341
    %v438 = vpack.c.b16 %v435, %v434
    %v439 = vpack.c.b16 %v437, %v436
    %442 = vmatpush.bf16.msra.mxu0 0
    %443 = vmatpush.bf16.msra.mxu0 0
    %444 = vmatpush.bf16.msra.mxu0 0
    %445 = vmatpush.bf16.msra.mxu0 0
    %446 = vmatpush.bf16.msra.mxu0 0
    %447 = vmatpush.bf16.msra.mxu0 0
    %448 = vmatpush.bf16.msra.mxu0 %v439
    %449 = vmatpush.bf16.msra.mxu0 %v438
    %450 = vmatmul.bf16.gmra.mxu0 %v415
    %v451 = vpop.f32.mrf.mxu0
    %v452 = vadd.f32 0.0, %v451
    %v453 = vpop.f32.mrf.mxu0
    %454 = vdwg.mxu0
    %v455 = vadd.f32 %v205, %v427
    %v456 = vxor.u32 %v455, 2147483648
    %v457 = vmul.f32 %v456, 1.442695
    %v458 = vpow.pop %v457
    %v459 = vadd.f32 %v458, 1.0
    %v460 = vrcp.pop %v459
    %v461 = vmul.f32 %v459, %v460
    %v462 = vsub.f32 1.0, %v461
    %v463 = vmul.f32 %v460, %v462
    %v464 = vadd.f32 %v460, %v463
    %vm465 = vweird.f32 %v459
    %vm466 = vweird.f32 %v460
    %vm467 = vmor %vm465, %vm466
    %v468 = vsel %vm467, %v460, %v464
    %v469 = vand.u32 2147483647, %v459
    %vm470 = vcmp.eq.f32.partialorder %v469, 8.507059e+37
    %v471 = vand.u32 %v459, 2147483648
    %v472 = vor.u32 1.1754944e-38, %v471
    %v473 = vsel %vm470, %v472, %v468
    %v474 = vmul.f32 1.0, %v473
    %v479 = vunpack.c.l.b16 %v343
    %v480 = vunpack.c.l.b16 %v344
    %v481 = vunpack.c.l.b16 %v345
    %v482 = vunpack.c.l.b16 %v346
    %v483 = vpack.c.b16 %v480, %v479
    %v484 = vpack.c.b16 %v482, %v481
    %487 = vmatpush.bf16.msra.mxu0 0
    %488 = vmatpush.bf16.msra.mxu0 0
    %489 = vmatpush.bf16.msra.mxu0 0
    %490 = vmatpush.bf16.msra.mxu0 0
    %491 = vmatpush.bf16.msra.mxu0 0
    %492 = vmatpush.bf16.msra.mxu0 0
    %493 = vmatpush.bf16.msra.mxu0 %v484
    %494 = vmatpush.bf16.msra.mxu0 %v483
    %495 = vmatmul.bf16.gmra.mxu0 %v415
    %v496 = vpop.f32.mrf.mxu0
    %v497 = vadd.f32 %v379, %v496
    %v498 = vpop.f32.mrf.mxu0
    %499 = vdwg.mxu0
    %v500 = vmul.f32 %v474, %v497
    %v501 = vadd.f32 %v315, %v500
    %v502 = vtanh.pop %v501
    %v503 = vadd.f32 %v260, %v452
    %v504 = vxor.u32 %v503, 2147483648
    %v505 = vmul.f32 %v504, 1.442695
    %v506 = vpow.pop %v505
    %v507 = vadd.f32 %v506, 1.0
    %v508 = vrcp.pop %v507
    %v509 = vmul.f32 %v507, %v508
    %v510 = vsub.f32 1.0, %v509
    %v511 = vmul.f32 %v508, %v510
    %v512 = vadd.f32 %v508, %v511
    %vm513 = vweird.f32 %v507
    %vm514 = vweird.f32 %v508
    %vm515 = vmor %vm513, %vm514
    %v516 = vsel %vm515, %v508, %v512
    %v517 = vand.u32 2147483647, %v507
    %vm518 = vcmp.eq.f32.partialorder %v517, 8.507059e+37
    %v519 = vand.u32 %v507, 2147483648
    %v520 = vor.u32 1.1754944e-38, %v519
    %v521 = vsel %vm518, %v520, %v516
    %v522 = vmul.f32 1.0, %v521
    %v523 = vsub.f32 1.0, %v522
    %v524 = vmul.f32 %v523, %v502
    %v525 = vmul.f32 %v522, 0.0
    %v526 = vadd.f32 %v524, %v525
    %v527 = vpack.c.bf16 %v526, %v526
    %v532 = vunpack.c.l.b16 %v362
    %v533 = vunpack.c.l.b16 %v363
    %v534 = vunpack.c.l.b16 %v364
    %v535 = vunpack.c.l.b16 %v365
    %v536 = vpack.c.b16 %v533, %v532
    %v537 = vpack.c.b16 %v535, %v534
    %v541 = vsel %vm413, %v527, 0
    %543 = vmatpush.bf16.msra.mxu0 0
    %544 = vmatpush.bf16.msra.mxu0 0
    %545 = vmatpush.bf16.msra.mxu0 0
    %546 = vmatpush.bf16.msra.mxu0 0
    %547 = vmatpush.bf16.msra.mxu0 0
    %548 = vmatpush.bf16.msra.mxu0 0
    %549 = vmatpush.bf16.msra.mxu0 %v537
    %550 = vmatpush.bf16.msra.mxu0 %v536
    %551 = vmatmul.bf16.gmra.mxu0 %v541
    %v552 = vpop.f32.mrf.mxu0
    %v553 = vadd.f32 %v389, %v552
    %v554 = vpop.f32.mrf.mxu0
    %555 = vdwg.mxu0
    %v560 = vunpack.c.l.b16 %v367
    %v561 = vunpack.c.l.b16 %v368
    %v562 = vunpack.c.l.b16 %v369
    %v563 = vunpack.c.l.b16 %v370
    %v564 = vpack.c.b16 %v561, %v560
    %v565 = vpack.c.b16 %v563, %v562
    %568 = vmatpush.bf16.msra.mxu0 0
    %569 = vmatpush.bf16.msra.mxu0 0
    %570 = vmatpush.bf16.msra.mxu0 0
    %571 = vmatpush.bf16.msra.mxu0 0
    %572 = vmatpush.bf16.msra.mxu0 0
    %573 = vmatpush.bf16.msra.mxu0 0
    %574 = vmatpush.bf16.msra.mxu0 %v565
    %575 = vmatpush.bf16.msra.mxu0 %v564
    %576 = vmatmul.bf16.gmra.mxu0 %v541
    %v577 = vpop.f32.mrf.mxu0
    %v578 = vadd.f32 %v394, %v577
    %v579 = vpop.f32.mrf.mxu0
    %580 = vdwg.mxu0
    %v585 = vunpack.c.l.b16 %v372
    %v586 = vunpack.c.l.b16 %v373
    %v587 = vunpack.c.l.b16 %v374
    %v588 = vunpack.c.l.b16 %v375
    %v589 = vpack.c.b16 %v586, %v585
    %v590 = vpack.c.b16 %v588, %v587
    %593 = vmatpush.bf16.msra.mxu0 0
    %594 = vmatpush.bf16.msra.mxu0 0
    %595 = vmatpush.bf16.msra.mxu0 0
    %596 = vmatpush.bf16.msra.mxu0 0
    %597 = vmatpush.bf16.msra.mxu0 0
    %598 = vmatpush.bf16.msra.mxu0 0
    %599 = vmatpush.bf16.msra.mxu0 %v590
    %600 = vmatpush.bf16.msra.mxu0 %v589
    %601 = vmatmul.bf16.gmra.mxu0 %v541
    %v602 = vpop.f32.mrf.mxu0
    %v603 = vadd.f32 %v399, %v602
    %v604 = vpop.f32.mrf.mxu0
    %605 = vdwg.mxu0
    %v610 = vunpack.c.l.b16 %v348
    %v611 = vunpack.c.l.b16 %v349
    %v612 = vunpack.c.l.b16 %v350
    %v613 = vunpack.c.l.b16 %v351
    %v614 = vpack.c.b16 %v611, %v610
    %v615 = vpack.c.b16 %v613, %v612
    %618 = vmatpush.bf16.msra.mxu0 0
    %619 = vmatpush.bf16.msra.mxu0 0
    %620 = vmatpush.bf16.msra.mxu0 0
    %621 = vmatpush.bf16.msra.mxu0 0
    %622 = vmatpush.bf16.msra.mxu0 0
    %623 = vmatpush.bf16.msra.mxu0 0
    %624 = vmatpush.bf16.msra.mxu0 %v615
    %625 = vmatpush.bf16.msra.mxu0 %v614
    %626 = vmatmul.bf16.gmra.mxu0 %v415
    %v627 = vpop.f32.mrf.mxu0
    %v628 = vadd.f32 0.0, %v627
    %v629 = vpop.f32.mrf.mxu0
    %630 = vdwg.mxu0
    %v635 = vunpack.c.l.b16 %v353
    %v636 = vunpack.c.l.b16 %v354
    %v637 = vunpack.c.l.b16 %v355
    %v638 = vunpack.c.l.b16 %v356
    %v639 = vpack.c.b16 %v636, %v635
    %v640 = vpack.c.b16 %v638, %v637
    %643 = vmatpush.bf16.msra.mxu0 0
    %644 = vmatpush.bf16.msra.mxu0 0
    %645 = vmatpush.bf16.msra.mxu0 0
    %646 = vmatpush.bf16.msra.mxu0 0
    %647 = vmatpush.bf16.msra.mxu0 0
    %648 = vmatpush.bf16.msra.mxu0 0
    %649 = vmatpush.bf16.msra.mxu0 %v640
    %650 = vmatpush.bf16.msra.mxu0 %v639
    %651 = vmatmul.bf16.gmra.mxu0 %v415
    %v652 = vpop.f32.mrf.mxu0
    %v653 = vadd.f32 0.0, %v652
    %v654 = vpop.f32.mrf.mxu0
    %655 = vdwg.mxu0
    %v656 = vadd.f32 %v553, %v628
    %v657 = vxor.u32 %v656, 2147483648
    %v658 = vmul.f32 %v657, 1.442695
    %v659 = vpow.pop %v658
    %v660 = vadd.f32 %v659, 1.0
    %v661 = vrcp.pop %v660
    %v662 = vmul.f32 %v660, %v661
    %v663 = vsub.f32 1.0, %v662
    %v664 = vmul.f32 %v661, %v663
    %v665 = vadd.f32 %v661, %v664
    %vm666 = vweird.f32 %v660
    %vm667 = vweird.f32 %v661
    %vm668 = vmor %vm666, %vm667
    %v669 = vsel %vm668, %v661, %v665
    %v670 = vand.u32 2147483647, %v660
    %vm671 = vcmp.eq.f32.partialorder %v670, 8.507059e+37
    %v672 = vand.u32 %v660, 2147483648
    %v673 = vor.u32 1.1754944e-38, %v672
    %v674 = vsel %vm671, %v673, %v669
    %v675 = vmul.f32 1.0, %v674
    %v680 = vunpack.c.l.b16 %v358
    %v681 = vunpack.c.l.b16 %v359
    %v682 = vunpack.c.l.b16 %v360
    %v683 = vunpack.c.l.b16 %v361
    %v684 = vpack.c.b16 %v681, %v680
    %v685 = vpack.c.b16 %v683, %v682
    %688 = vmatpush.bf16.msra.mxu0 0
    %689 = vmatpush.bf16.msra.mxu0 0
    %690 = vmatpush.bf16.msra.mxu0 0
    %691 = vmatpush.bf16.msra.mxu0 0
    %692 = vmatpush.bf16.msra.mxu0 0
    %693 = vmatpush.bf16.msra.mxu0 0
    %694 = vmatpush.bf16.msra.mxu0 %v685
    %695 = vmatpush.bf16.msra.mxu0 %v684
    %696 = vmatmul.bf16.gmra.mxu0 %v415
    %v697 = vpop.f32.mrf.mxu0
    %v698 = vadd.f32 %v384, %v697
    %v699 = vpop.f32.mrf.mxu0
    %700 = vdwg.mxu0
    %v701 = vmul.f32 %v675, %v698
    %v702 = vadd.f32 %v603, %v701
    %v703 = vtanh.pop %v702
    %v704 = vadd.f32 %v578, %v653
    %v705 = vxor.u32 %v704, 2147483648
    %v706 = vmul.f32 %v705, 1.442695
    %v707 = vpow.pop %v706
    %v708 = vadd.f32 %v707, 1.0
    %v709 = vrcp.pop %v708
    %v710 = vmul.f32 %v708, %v709
    %v711 = vsub.f32 1.0, %v710
    %v712 = vmul.f32 %v709, %v711
    %v713 = vadd.f32 %v709, %v712
    %vm714 = vweird.f32 %v708
    %vm715 = vweird.f32 %v709
    %vm716 = vmor %vm714, %vm715
    %v717 = vsel %vm716, %v709, %v713
    %v718 = vand.u32 2147483647, %v708
    %vm719 = vcmp.eq.f32.partialorder %v718, 8.507059e+37
    %v720 = vand.u32 %v708, 2147483648
    %v721 = vor.u32 1.1754944e-38, %v720
    %v722 = vsel %vm719, %v721, %v717
    %v723 = vmul.f32 1.0, %v722
    %v724 = vsub.f32 1.0, %v723
    %v725 = vmul.f32 %v724, %v703
    %v726 = vmul.f32 %v723, 0.0
    %v727 = vadd.f32 %v725, %v726
    %728 = vmatpush.bf16.msra.mxu0 0
    %729 = vmatpush.bf16.msra.mxu0 0
    %730 = vmatpush.bf16.msra.mxu0 0
    %731 = vmatpush.bf16.msra.mxu0 0
    %732 = vmatpush.bf16.msra.mxu0 0
    %733 = vmatpush.bf16.msra.mxu0 0
    %734 = vmatpush.bf16.msra.mxu0 %v410
    %735 = vmatpush.bf16.msra.mxu0 %v409
    %736 = vmatmul.bf16.gmra.mxu0 %v541
    %v737 = vpop.f32.mrf.mxu0
    %v738 = vadd.f32 0.0, %v737
    %v739 = vpop.f32.mrf.mxu0
    %740 = vdwg.mxu0
    %741 = vmatpush.bf16.msra.mxu0 0
    %742 = vmatpush.bf16.msra.mxu0 0
    %743 = vmatpush.bf16.msra.mxu0 0
    %744 = vmatpush.bf16.msra.mxu0 0
    %745 = vmatpush.bf16.msra.mxu0 0
    %746 = vmatpush.bf16.msra.mxu0 0
    %747 = vmatpush.bf16.msra.mxu0 %v439
    %748 = vmatpush.bf16.msra.mxu0 %v438
    %749 = vmatmul.bf16.gmra.mxu0 %v541
    %v750 = vpop.f32.mrf.mxu0
    %v751 = vadd.f32 0.0, %v750
    %v752 = vpop.f32.mrf.mxu0
    %753 = vdwg.mxu0
    %v754 = vadd.f32 %v211, %v738
    %v755 = vxor.u32 %v754, 2147483648
    %v756 = vmul.f32 %v755, 1.442695
    %v757 = vpow.pop %v756
    %v758 = vadd.f32 %v757, 1.0
    %v759 = vrcp.pop %v758
    %v760 = vmul.f32 %v758, %v759
    %v761 = vsub.f32 1.0, %v760
    %v762 = vmul.f32 %v759, %v761
    %v763 = vadd.f32 %v759, %v762
    %vm764 = vweird.f32 %v758
    %vm765 = vweird.f32 %v759
    %vm766 = vmor %vm764, %vm765
    %v767 = vsel %vm766, %v759, %v763
    %v768 = vand.u32 2147483647, %v758
    %vm769 = vcmp.eq.f32.partialorder %v768, 8.507059e+37
    %v770 = vand.u32 %v758, 2147483648
    %v771 = vor.u32 1.1754944e-38, %v770
    %v772 = vsel %vm769, %v771, %v767
    %v773 = vmul.f32 1.0, %v772
    %774 = vmatpush.bf16.msra.mxu0 0
    %775 = vmatpush.bf16.msra.mxu0 0
    %776 = vmatpush.bf16.msra.mxu0 0
    %777 = vmatpush.bf16.msra.mxu0 0
    %778 = vmatpush.bf16.msra.mxu0 0
    %779 = vmatpush.bf16.msra.mxu0 0
    %780 = vmatpush.bf16.msra.mxu0 %v484
    %781 = vmatpush.bf16.msra.mxu0 %v483
    %782 = vmatmul.bf16.gmra.mxu0 %v541
    %v783 = vpop.f32.mrf.mxu0
    %v784 = vadd.f32 %v379, %v783
    %v785 = vpop.f32.mrf.mxu0
    %786 = vdwg.mxu0
    %v787 = vmul.f32 %v773, %v784
    %v788 = vadd.f32 %v321, %v787
    %v789 = vtanh.pop %v788
    %v790 = vadd.f32 %v266, %v751
    %v791 = vxor.u32 %v790, 2147483648
    %v792 = vmul.f32 %v791, 1.442695
    %v793 = vpow.pop %v792
    %v794 = vadd.f32 %v793, 1.0
    %v795 = vrcp.pop %v794
    %v796 = vmul.f32 %v794, %v795
    %v797 = vsub.f32 1.0, %v796
    %v798 = vmul.f32 %v795, %v797
    %v799 = vadd.f32 %v795, %v798
    %vm800 = vweird.f32 %v794
    %vm801 = vweird.f32 %v795
    %vm802 = vmor %vm800, %vm801
    %v803 = vsel %vm802, %v795, %v799
    %v804 = vand.u32 2147483647, %v794
    %vm805 = vcmp.eq.f32.partialorder %v804, 8.507059e+37
    %v806 = vand.u32 %v794, 2147483648
    %v807 = vor.u32 1.1754944e-38, %v806
    %v808 = vsel %vm805, %v807, %v803
    %v809 = vmul.f32 1.0, %v808
    %v810 = vsub.f32 1.0, %v809
    %v811 = vmul.f32 %v810, %v789
    %v812 = vmul.f32 %v809, %v526
    %v813 = vadd.f32 %v811, %v812
    %v814 = vpack.c.bf16 %v813, %v813
    %v816 = vsel %vm413, %v814, 0
    %818 = vmatpush.bf16.msra.mxu0 0
    %819 = vmatpush.bf16.msra.mxu0 0
    %820 = vmatpush.bf16.msra.mxu0 0
    %821 = vmatpush.bf16.msra.mxu0 0
    %822 = vmatpush.bf16.msra.mxu0 0
    %823 = vmatpush.bf16.msra.mxu0 0
    %824 = vmatpush.bf16.msra.mxu0 %v537
    %825 = vmatpush.bf16.msra.mxu0 %v536
    %826 = vmatmul.bf16.gmra.mxu0 %v816
    %v827 = vpop.f32.mrf.mxu0
    %v828 = vadd.f32 %v389, %v827
    %v829 = vpop.f32.mrf.mxu0
    %830 = vdwg.mxu0
    %831 = vmatpush.bf16.msra.mxu0 0
    %832 = vmatpush.bf16.msra.mxu0 0
    %833 = vmatpush.bf16.msra.mxu0 0
    %834 = vmatpush.bf16.msra.mxu0 0
    %835 = vmatpush.bf16.msra.mxu0 0
    %836 = vmatpush.bf16.msra.mxu0 0
    %837 = vmatpush.bf16.msra.mxu0 %v565
    %838 = vmatpush.bf16.msra.mxu0 %v564
    %839 = vmatmul.bf16.gmra.mxu0 %v816
    %v840 = vpop.f32.mrf.mxu0
    %v841 = vadd.f32 %v394, %v840
    %v842 = vpop.f32.mrf.mxu0
    %843 = vdwg.mxu0
    %844 = vmatpush.bf16.msra.mxu0 0
    %845 = vmatpush.bf16.msra.mxu0 0
    %846 = vmatpush.bf16.msra.mxu0 0
    %847 = vmatpush.bf16.msra.mxu0 0
    %848 = vmatpush.bf16.msra.mxu0 0
    %849 = vmatpush.bf16.msra.mxu0 0
    %850 = vmatpush.bf16.msra.mxu0 %v590
    %851 = vmatpush.bf16.msra.mxu0 %v589
    %852 = vmatmul.bf16.gmra.mxu0 %v816
    %v853 = vpop.f32.mrf.mxu0
    %v854 = vadd.f32 %v399, %v853
    %v855 = vpop.f32.mrf.mxu0
    %856 = vdwg.mxu0
    %v857 = vpack.c.bf16 %v727, %v727
    %v859 = vsel %vm413, %v857, 0
    %861 = vmatpush.bf16.msra.mxu0 0
    %862 = vmatpush.bf16.msra.mxu0 0
    %863 = vmatpush.bf16.msra.mxu0 0
    %864 = vmatpush.bf16.msra.mxu0 0
    %865 = vmatpush.bf16.msra.mxu0 0
    %866 = vmatpush.bf16.msra.mxu0 0
    %867 = vmatpush.bf16.msra.mxu0 %v615
    %868 = vmatpush.bf16.msra.mxu0 %v614
    %869 = vmatmul.bf16.gmra.mxu0 %v859
    %v870 = vpop.f32.mrf.mxu0
    %v871 = vadd.f32 0.0, %v870
    %v872 = vpop.f32.mrf.mxu0
    %873 = vdwg.mxu0
    %874 = vmatpush.bf16.msra.mxu0 0
    %875 = vmatpush.bf16.msra.mxu0 0
    %876 = vmatpush.bf16.msra.mxu0 0
    %877 = vmatpush.bf16.msra.mxu0 0
    %878 = vmatpush.bf16.msra.mxu0 0
    %879 = vmatpush.bf16.msra.mxu0 0
    %880 = vmatpush.bf16.msra.mxu0 %v640
    %881 = vmatpush.bf16.msra.mxu0 %v639
    %882 = vmatmul.bf16.gmra.mxu0 %v859
    %v883 = vpop.f32.mrf.mxu0
    %v884 = vadd.f32 0.0, %v883
    %v885 = vpop.f32.mrf.mxu0
    %886 = vdwg.mxu0
    %v887 = vadd.f32 %v828, %v871
    %v888 = vxor.u32 %v887, 2147483648
    %v889 = vmul.f32 %v888, 1.442695
    %v890 = vpow.pop %v889
    %v891 = vadd.f32 %v890, 1.0
    %v892 = vrcp.pop %v891
    %v893 = vmul.f32 %v891, %v892
    %v894 = vsub.f32 1.0, %v893
    %v895 = vmul.f32 %v892, %v894
    %v896 = vadd.f32 %v892, %v895
    %vm897 = vweird.f32 %v891
    %vm898 = vweird.f32 %v892
    %vm899 = vmor %vm897, %vm898
    %v900 = vsel %vm899, %v892, %v896
    %v901 = vand.u32 2147483647, %v891
    %vm902 = vcmp.eq.f32.partialorder %v901, 8.507059e+37
    %v903 = vand.u32 %v891, 2147483648
    %v904 = vor.u32 1.1754944e-38, %v903
    %v905 = vsel %vm902, %v904, %v900
    %v906 = vmul.f32 1.0, %v905
    %907 = vmatpush.bf16.msra.mxu0 0
    %908 = vmatpush.bf16.msra.mxu0 0
    %909 = vmatpush.bf16.msra.mxu0 0
    %910 = vmatpush.bf16.msra.mxu0 0
    %911 = vmatpush.bf16.msra.mxu0 0
    %912 = vmatpush.bf16.msra.mxu0 0
    %913 = vmatpush.bf16.msra.mxu0 %v685
    %914 = vmatpush.bf16.msra.mxu0 %v684
    %915 = vmatmul.bf16.gmra.mxu0 %v859
    %v916 = vpop.f32.mrf.mxu0
    %v917 = vadd.f32 %v384, %v916
    %v918 = vpop.f32.mrf.mxu0
    %919 = vdwg.mxu0
    %v920 = vmul.f32 %v906, %v917
    %v921 = vadd.f32 %v854, %v920
    %v922 = vtanh.pop %v921
    %v923 = vadd.f32 %v841, %v884
    %v924 = vxor.u32 %v923, 2147483648
    %v925 = vmul.f32 %v924, 1.442695
    %v926 = vpow.pop %v925
    %v927 = vadd.f32 %v926, 1.0
    %v928 = vrcp.pop %v927
    %v929 = vmul.f32 %v927, %v928
    %v930 = vsub.f32 1.0, %v929
    %v931 = vmul.f32 %v928, %v930
    %v932 = vadd.f32 %v928, %v931
    %vm933 = vweird.f32 %v927
    %vm934 = vweird.f32 %v928
    %vm935 = vmor %vm933, %vm934
    %v936 = vsel %vm935, %v928, %v932
    %v937 = vand.u32 2147483647, %v927
    %vm938 = vcmp.eq.f32.partialorder %v937, 8.507059e+37
    %v939 = vand.u32 %v927, 2147483648
    %v940 = vor.u32 1.1754944e-38, %v939
    %v941 = vsel %vm938, %v940, %v936
    %v942 = vmul.f32 1.0, %v941
    %v943 = vsub.f32 1.0, %v942
    %v944 = vmul.f32 %v943, %v922
    %v945 = vmul.f32 %v942, %v727
    %v946 = vadd.f32 %v944, %v945
    %947 = vmatpush.bf16.msra.mxu0 0
    %948 = vmatpush.bf16.msra.mxu0 0
    %949 = vmatpush.bf16.msra.mxu0 0
    %950 = vmatpush.bf16.msra.mxu0 0
    %951 = vmatpush.bf16.msra.mxu0 0
    %952 = vmatpush.bf16.msra.mxu0 0
    %953 = vmatpush.bf16.msra.mxu0 %v410
    %954 = vmatpush.bf16.msra.mxu0 %v409
    %955 = vmatmul.bf16.gmra.mxu0 %v816
    %v956 = vpop.f32.mrf.mxu0
    %v957 = vadd.f32 0.0, %v956
    %v958 = vpop.f32.mrf.mxu0
    %959 = vdwg.mxu0
    %960 = vmatpush.bf16.msra.mxu0 0
    %961 = vmatpush.bf16.msra.mxu0 0
    %962 = vmatpush.bf16.msra.mxu0 0
    %963 = vmatpush.bf16.msra.mxu0 0
    %964 = vmatpush.bf16.msra.mxu0 0
    %965 = vmatpush.bf16.msra.mxu0 0
    %966 = vmatpush.bf16.msra.mxu0 %v439
    %967 = vmatpush.bf16.msra.mxu0 %v438
    %968 = vmatmul.bf16.gmra.mxu0 %v816
    %v969 = vpop.f32.mrf.mxu0
    %v970 = vadd.f32 0.0, %v969
    %v971 = vpop.f32.mrf.mxu0
    %972 = vdwg.mxu0
    %v973 = vadd.f32 %v212, %v957
    %v974 = vxor.u32 %v973, 2147483648
    %v975 = vmul.f32 %v974, 1.442695
    %v976 = vpow.pop %v975
    %v977 = vadd.f32 %v976, 1.0
    %v978 = vrcp.pop %v977
    %v979 = vmul.f32 %v977, %v978
    %v980 = vsub.f32 1.0, %v979
    %v981 = vmul.f32 %v978, %v980
    %v982 = vadd.f32 %v978, %v981
    %vm983 = vweird.f32 %v977
    %vm984 = vweird.f32 %v978
    %vm985 = vmor %vm983, %vm984
    %v986 = vsel %vm985, %v978, %v982
    %v987 = vand.u32 2147483647, %v977
    %vm988 = vcmp.eq.f32.partialorder %v987, 8.507059e+37
    %v989 = vand.u32 %v977, 2147483648
    %v990 = vor.u32 1.1754944e-38, %v989
    %v991 = vsel %vm988, %v990, %v986
    %v992 = vmul.f32 1.0, %v991
    %993 = vmatpush.bf16.msra.mxu0 0
    %994 = vmatpush.bf16.msra.mxu0 0
    %995 = vmatpush.bf16.msra.mxu0 0
    %996 = vmatpush.bf16.msra.mxu0 0
    %997 = vmatpush.bf16.msra.mxu0 0
    %998 = vmatpush.bf16.msra.mxu0 0
    %999 = vmatpush.bf16.msra.mxu0 %v484
    %1000 = vmatpush.bf16.msra.mxu0 %v483
    %1001 = vmatmul.bf16.gmra.mxu0 %v816
    %v1002 = vpop.f32.mrf.mxu0
    %v1003 = vadd.f32 %v379, %v1002
    %v1004 = vpop.f32.mrf.mxu0
    %1005 = vdwg.mxu0
    %v1006 = vmul.f32 %v992, %v1003
    %v1007 = vadd.f32 %v322, %v1006
    %v1008 = vtanh.pop %v1007
    %v1009 = vadd.f32 %v267, %v970
    %v1010 = vxor.u32 %v1009, 2147483648
    %v1011 = vmul.f32 %v1010, 1.442695
    %v1012 = vpow.pop %v1011
    %v1013 = vadd.f32 %v1012, 1.0
    %v1014 = vrcp.pop %v1013
    %v1015 = vmul.f32 %v1013, %v1014
    %v1016 = vsub.f32 1.0, %v1015
    %v1017 = vmul.f32 %v1014, %v1016
    %v1018 = vadd.f32 %v1014, %v1017
    %vm1019 = vweird.f32 %v1013
    %vm1020 = vweird.f32 %v1014
    %vm1021 = vmor %vm1019, %vm1020
    %v1022 = vsel %vm1021, %v1014, %v1018
    %v1023 = vand.u32 2147483647, %v1013
    %vm1024 = vcmp.eq.f32.partialorder %v1023, 8.507059e+37
    %v1025 = vand.u32 %v1013, 2147483648
    %v1026 = vor.u32 1.1754944e-38, %v1025
    %v1027 = vsel %vm1024, %v1026, %v1022
    %v1028 = vmul.f32 1.0, %v1027
    %v1029 = vsub.f32 1.0, %v1028
    %v1030 = vmul.f32 %v1029, %v1008
    %v1031 = vmul.f32 %v1028, %v813
    %v1032 = vadd.f32 %v1030, %v1031
    %v1033 = vpack.c.bf16 %v1032, %v1032
    %v1035 = vsel %vm413, %v1033, 0
    %1037 = vmatpush.bf16.msra.mxu0 0
    %1038 = vmatpush.bf16.msra.mxu0 0
    %1039 = vmatpush.bf16.msra.mxu0 0
    %1040 = vmatpush.bf16.msra.mxu0 0
    %1041 = vmatpush.bf16.msra.mxu0 0
    %1042 = vmatpush.bf16.msra.mxu0 0
    %1043 = vmatpush.bf16.msra.mxu0 %v537
    %1044 = vmatpush.bf16.msra.mxu0 %v536
    %1045 = vmatmul.bf16.gmra.mxu0 %v1035
    %v1046 = vpop.f32.mrf.mxu0
    %v1047 = vadd.f32 %v389, %v1046
    %v1048 = vpop.f32.mrf.mxu0
    %1049 = vdwg.mxu0
    %1050 = vmatpush.bf16.msra.mxu0 0
    %1051 = vmatpush.bf16.msra.mxu0 0
    %1052 = vmatpush.bf16.msra.mxu0 0
    %1053 = vmatpush.bf16.msra.mxu0 0
    %1054 = vmatpush.bf16.msra.mxu0 0
    %1055 = vmatpush.bf16.msra.mxu0 0
    %1056 = vmatpush.bf16.msra.mxu0 %v565
    %1057 = vmatpush.bf16.msra.mxu0 %v564
    %1058 = vmatmul.bf16.gmra.mxu0 %v1035
    %v1059 = vpop.f32.mrf.mxu0
    %v1060 = vadd.f32 %v394, %v1059
    %v1061 = vpop.f32.mrf.mxu0
    %1062 = vdwg.mxu0
    %1063 = vmatpush.bf16.msra.mxu0 0
    %1064 = vmatpush.bf16.msra.mxu0 0
    %1065 = vmatpush.bf16.msra.mxu0 0
    %1066 = vmatpush.bf16.msra.mxu0 0
    %1067 = vmatpush.bf16.msra.mxu0 0
    %1068 = vmatpush.bf16.msra.mxu0 0
    %1069 = vmatpush.bf16.msra.mxu0 %v590
    %1070 = vmatpush.bf16.msra.mxu0 %v589
    %1071 = vmatmul.bf16.gmra.mxu0 %v1035
    %v1072 = vpop.f32.mrf.mxu0
    %v1073 = vadd.f32 %v399, %v1072
    %v1074 = vpop.f32.mrf.mxu0
    %1075 = vdwg.mxu0
    %v1076 = vpack.c.bf16 %v946, %v946
    %v1078 = vsel %vm413, %v1076, 0
    %1080 = vmatpush.bf16.msra.mxu0 0
    %1081 = vmatpush.bf16.msra.mxu0 0
    %1082 = vmatpush.bf16.msra.mxu0 0
    %1083 = vmatpush.bf16.msra.mxu0 0
    %1084 = vmatpush.bf16.msra.mxu0 0
    %1085 = vmatpush.bf16.msra.mxu0 0
    %1086 = vmatpush.bf16.msra.mxu0 %v615
    %1087 = vmatpush.bf16.msra.mxu0 %v614
    %1088 = vmatmul.bf16.gmra.mxu0 %v1078
    %v1089 = vpop.f32.mrf.mxu0
    %v1090 = vadd.f32 0.0, %v1089
    %v1091 = vpop.f32.mrf.mxu0
    %1092 = vdwg.mxu0
    %1093 = vmatpush.bf16.msra.mxu0 0
    %1094 = vmatpush.bf16.msra.mxu0 0
    %1095 = vmatpush.bf16.msra.mxu0 0
    %1096 = vmatpush.bf16.msra.mxu0 0
    %1097 = vmatpush.bf16.msra.mxu0 0
    %1098 = vmatpush.bf16.msra.mxu0 0
    %1099 = vmatpush.bf16.msra.mxu0 %v640
    %1100 = vmatpush.bf16.msra.mxu0 %v639
    %1101 = vmatmul.bf16.gmra.mxu0 %v1078
    %v1102 = vpop.f32.mrf.mxu0
    %v1103 = vadd.f32 0.0, %v1102
    %v1104 = vpop.f32.mrf.mxu0
    %1105 = vdwg.mxu0
    %v1106 = vadd.f32 %v1047, %v1090
    %v1107 = vxor.u32 %v1106, 2147483648
    %v1108 = vmul.f32 %v1107, 1.442695
    %v1109 = vpow.pop %v1108
    %v1110 = vadd.f32 %v1109, 1.0
    %v1111 = vrcp.pop %v1110
    %v1112 = vmul.f32 %v1110, %v1111
    %v1113 = vsub.f32 1.0, %v1112
    %v1114 = vmul.f32 %v1111, %v1113
    %v1115 = vadd.f32 %v1111, %v1114
    %vm1116 = vweird.f32 %v1110
    %vm1117 = vweird.f32 %v1111
    %vm1118 = vmor %vm1116, %vm1117
    %v1119 = vsel %vm1118, %v1111, %v1115
    %v1120 = vand.u32 2147483647, %v1110
    %vm1121 = vcmp.eq.f32.partialorder %v1120, 8.507059e+37
    %v1122 = vand.u32 %v1110, 2147483648
    %v1123 = vor.u32 1.1754944e-38, %v1122
    %v1124 = vsel %vm1121, %v1123, %v1119
    %v1125 = vmul.f32 1.0, %v1124
    %1126 = vmatpush.bf16.msra.mxu0 0
    %1127 = vmatpush.bf16.msra.mxu0 0
    %1128 = vmatpush.bf16.msra.mxu0 0
    %1129 = vmatpush.bf16.msra.mxu0 0
    %1130 = vmatpush.bf16.msra.mxu0 0
    %1131 = vmatpush.bf16.msra.mxu0 0
    %1132 = vmatpush.bf16.msra.mxu0 %v685
    %1133 = vmatpush.bf16.msra.mxu0 %v684
    %1134 = vmatmul.bf16.gmra.mxu0 %v1078
    %v1135 = vpop.f32.mrf.mxu0
    %v1136 = vadd.f32 %v384, %v1135
    %v1137 = vpop.f32.mrf.mxu0
    %1138 = vdwg.mxu0
    %v1139 = vmul.f32 %v1125, %v1136
    %v1140 = vadd.f32 %v1073, %v1139
    %v1141 = vtanh.pop %v1140
    %v1142 = vadd.f32 %v1060, %v1103
    %v1143 = vxor.u32 %v1142, 2147483648
    %v1144 = vmul.f32 %v1143, 1.442695
    %v1145 = vpow.pop %v1144
    %v1146 = vadd.f32 %v1145, 1.0
    %v1147 = vrcp.pop %v1146
    %v1148 = vmul.f32 %v1146, %v1147
    %v1149 = vsub.f32 1.0, %v1148
    %v1150 = vmul.f32 %v1147, %v1149
    %v1151 = vadd.f32 %v1147, %v1150
    %vm1152 = vweird.f32 %v1146
    %vm1153 = vweird.f32 %v1147
    %vm1154 = vmor %vm1152, %vm1153
    %v1155 = vsel %vm1154, %v1147, %v1151
    %v1156 = vand.u32 2147483647, %v1146
    %vm1157 = vcmp.eq.f32.partialorder %v1156, 8.507059e+37
    %v1158 = vand.u32 %v1146, 2147483648
    %v1159 = vor.u32 1.1754944e-38, %v1158
    %v1160 = vsel %vm1157, %v1159, %v1155
    %v1161 = vmul.f32 1.0, %v1160
    %v1162 = vsub.f32 1.0, %v1161
    %v1163 = vmul.f32 %v1162, %v1141
    %v1164 = vmul.f32 %v1161, %v946
    %v1165 = vadd.f32 %v1163, %v1164
    %1166 = vmatpush.bf16.msra.mxu0 0
    %1167 = vmatpush.bf16.msra.mxu0 0
    %1168 = vmatpush.bf16.msra.mxu0 0
    %1169 = vmatpush.bf16.msra.mxu0 0
    %1170 = vmatpush.bf16.msra.mxu0 0
    %1171 = vmatpush.bf16.msra.mxu0 0
    %1172 = vmatpush.bf16.msra.mxu0 %v410
    %1173 = vmatpush.bf16.msra.mxu0 %v409
    %1174 = vmatmul.bf16.gmra.mxu0 %v1035
    %v1175 = vpop.f32.mrf.mxu0
    %v1176 = vadd.f32 0.0, %v1175
    %v1177 = vpop.f32.mrf.mxu0
    %1178 = vdwg.mxu0
    %1179 = vmatpush.bf16.msra.mxu0 0
    %1180 = vmatpush.bf16.msra.mxu0 0
    %1181 = vmatpush.bf16.msra.mxu0 0
    %1182 = vmatpush.bf16.msra.mxu0 0
    %1183 = vmatpush.bf16.msra.mxu0 0
    %1184 = vmatpush.bf16.msra.mxu0 0
    %1185 = vmatpush.bf16.msra.mxu0 %v439
    %1186 = vmatpush.bf16.msra.mxu0 %v438
    %1187 = vmatmul.bf16.gmra.mxu0 %v1035
    %v1188 = vpop.f32.mrf.mxu0
    %v1189 = vadd.f32 0.0, %v1188
    %v1190 = vpop.f32.mrf.mxu0
    %1191 = vdwg.mxu0
    %v1192 = vadd.f32 %v213, %v1176
    %v1193 = vxor.u32 %v1192, 2147483648
    %v1194 = vmul.f32 %v1193, 1.442695
    %v1195 = vpow.pop %v1194
    %v1196 = vadd.f32 %v1195, 1.0
    %v1197 = vrcp.pop %v1196
    %v1198 = vmul.f32 %v1196, %v1197
    %v1199 = vsub.f32 1.0, %v1198
    %v1200 = vmul.f32 %v1197, %v1199
    %v1201 = vadd.f32 %v1197, %v1200
    %vm1202 = vweird.f32 %v1196
    %vm1203 = vweird.f32 %v1197
    %vm1204 = vmor %vm1202, %vm1203
    %v1205 = vsel %vm1204, %v1197, %v1201
    %v1206 = vand.u32 2147483647, %v1196
    %vm1207 = vcmp.eq.f32.partialorder %v1206, 8.507059e+37
    %v1208 = vand.u32 %v1196, 2147483648
    %v1209 = vor.u32 1.1754944e-38, %v1208
    %v1210 = vsel %vm1207, %v1209, %v1205
    %v1211 = vmul.f32 1.0, %v1210
    %1212 = vmatpush.bf16.msra.mxu0 0
    %1213 = vmatpush.bf16.msra.mxu0 0
    %1214 = vmatpush.bf16.msra.mxu0 0
    %1215 = vmatpush.bf16.msra.mxu0 0
    %1216 = vmatpush.bf16.msra.mxu0 0
    %1217 = vmatpush.bf16.msra.mxu0 0
    %1218 = vmatpush.bf16.msra.mxu0 %v484
    %1219 = vmatpush.bf16.msra.mxu0 %v483
    %1220 = vmatmul.bf16.gmra.mxu0 %v1035
    %v1221 = vpop.f32.mrf.mxu0
    %v1222 = vadd.f32 %v379, %v1221
    %v1223 = vpop.f32.mrf.mxu0
    %1224 = vdwg.mxu0
    %v1225 = vmul.f32 %v1211, %v1222
    %v1226 = vadd.f32 %v323, %v1225
    %v1227 = vtanh.pop %v1226
    %v1228 = vadd.f32 %v268, %v1189
    %v1229 = vxor.u32 %v1228, 2147483648
    %v1230 = vmul.f32 %v1229, 1.442695
    %v1231 = vpow.pop %v1230
    %v1232 = vadd.f32 %v1231, 1.0
    %v1233 = vrcp.pop %v1232
    %v1234 = vmul.f32 %v1232, %v1233
    %v1235 = vsub.f32 1.0, %v1234
    %v1236 = vmul.f32 %v1233, %v1235
    %v1237 = vadd.f32 %v1233, %v1236
    %vm1238 = vweird.f32 %v1232
    %vm1239 = vweird.f32 %v1233
    %vm1240 = vmor %vm1238, %vm1239
    %v1241 = vsel %vm1240, %v1233, %v1237
    %v1242 = vand.u32 2147483647, %v1232
    %vm1243 = vcmp.eq.f32.partialorder %v1242, 8.507059e+37
    %v1244 = vand.u32 %v1232, 2147483648
    %v1245 = vor.u32 1.1754944e-38, %v1244
    %v1246 = vsel %vm1243, %v1245, %v1241
    %v1247 = vmul.f32 1.0, %v1246
    %v1248 = vsub.f32 1.0, %v1247
    %v1249 = vmul.f32 %v1248, %v1227
    %v1250 = vmul.f32 %v1247, %v1032
    %v1251 = vadd.f32 %v1249, %v1250
    %v1252 = vpack.c.bf16 %v1251, %v1251
    %v1254 = vsel %vm413, %v1252, 0
    %1256 = vmatpush.bf16.msra.mxu0 0
    %1257 = vmatpush.bf16.msra.mxu0 0
    %1258 = vmatpush.bf16.msra.mxu0 0
    %1259 = vmatpush.bf16.msra.mxu0 0
    %1260 = vmatpush.bf16.msra.mxu0 0
    %1261 = vmatpush.bf16.msra.mxu0 0
    %1262 = vmatpush.bf16.msra.mxu0 %v537
    %1263 = vmatpush.bf16.msra.mxu0 %v536
    %1264 = vmatmul.bf16.gmra.mxu0 %v1254
    %v1265 = vpop.f32.mrf.mxu0
    %v1266 = vadd.f32 %v389, %v1265
    %v1267 = vpop.f32.mrf.mxu0
    %1268 = vdwg.mxu0
    %1269 = vmatpush.bf16.msra.mxu0 0
    %1270 = vmatpush.bf16.msra.mxu0 0
    %1271 = vmatpush.bf16.msra.mxu0 0
    %1272 = vmatpush.bf16.msra.mxu0 0
    %1273 = vmatpush.bf16.msra.mxu0 0
    %1274 = vmatpush.bf16.msra.mxu0 0
    %1275 = vmatpush.bf16.msra.mxu0 %v565
    %1276 = vmatpush.bf16.msra.mxu0 %v564
    %1277 = vmatmul.bf16.gmra.mxu0 %v1254
    %v1278 = vpop.f32.mrf.mxu0
    %v1279 = vadd.f32 %v394, %v1278
    %v1280 = vpop.f32.mrf.mxu0
    %1281 = vdwg.mxu0
    %1282 = vmatpush.bf16.msra.mxu0 0
    %1283 = vmatpush.bf16.msra.mxu0 0
    %1284 = vmatpush.bf16.msra.mxu0 0
    %1285 = vmatpush.bf16.msra.mxu0 0
    %1286 = vmatpush.bf16.msra.mxu0 0
    %1287 = vmatpush.bf16.msra.mxu0 0
    %1288 = vmatpush.bf16.msra.mxu0 %v590
    %1289 = vmatpush.bf16.msra.mxu0 %v589
    %1290 = vmatmul.bf16.gmra.mxu0 %v1254
    %v1291 = vpop.f32.mrf.mxu0
    %v1292 = vadd.f32 %v399, %v1291
    %v1293 = vpop.f32.mrf.mxu0
    %1294 = vdwg.mxu0
    %v1295 = vpack.c.bf16 %v1165, %v1165
    %v1297 = vsel %vm413, %v1295, 0
    %1299 = vmatpush.bf16.msra.mxu0 0
    %1300 = vmatpush.bf16.msra.mxu0 0
    %1301 = vmatpush.bf16.msra.mxu0 0
    %1302 = vmatpush.bf16.msra.mxu0 0
    %1303 = vmatpush.bf16.msra.mxu0 0
    %1304 = vmatpush.bf16.msra.mxu0 0
    %1305 = vmatpush.bf16.msra.mxu0 %v615
    %1306 = vmatpush.bf16.msra.mxu0 %v614
    %1307 = vmatmul.bf16.gmra.mxu0 %v1297
    %v1308 = vpop.f32.mrf.mxu0
    %v1309 = vadd.f32 0.0, %v1308
    %v1310 = vpop.f32.mrf.mxu0
    %1311 = vdwg.mxu0
    %1312 = vmatpush.bf16.msra.mxu0 0
    %1313 = vmatpush.bf16.msra.mxu0 0
    %1314 = vmatpush.bf16.msra.mxu0 0
    %1315 = vmatpush.bf16.msra.mxu0 0
    %1316 = vmatpush.bf16.msra.mxu0 0
    %1317 = vmatpush.bf16.msra.mxu0 0
    %1318 = vmatpush.bf16.msra.mxu0 %v640
    %1319 = vmatpush.bf16.msra.mxu0 %v639
    %1320 = vmatmul.bf16.gmra.mxu0 %v1297
    %v1321 = vpop.f32.mrf.mxu0
    %v1322 = vadd.f32 0.0, %v1321
    %v1323 = vpop.f32.mrf.mxu0
    %1324 = vdwg.mxu0
    %v1325 = vadd.f32 %v1266, %v1309
    %v1326 = vxor.u32 %v1325, 2147483648
    %v1327 = vmul.f32 %v1326, 1.442695
    %v1328 = vpow.pop %v1327
    %v1329 = vadd.f32 %v1328, 1.0
    %v1330 = vrcp.pop %v1329
    %v1331 = vmul.f32 %v1329, %v1330
    %v1332 = vsub.f32 1.0, %v1331
    %v1333 = vmul.f32 %v1330, %v1332
    %v1334 = vadd.f32 %v1330, %v1333
    %vm1335 = vweird.f32 %v1329
    %vm1336 = vweird.f32 %v1330
    %vm1337 = vmor %vm1335, %vm1336
    %v1338 = vsel %vm1337, %v1330, %v1334
    %v1339 = vand.u32 2147483647, %v1329
    %vm1340 = vcmp.eq.f32.partialorder %v1339, 8.507059e+37
    %v1341 = vand.u32 %v1329, 2147483648
    %v1342 = vor.u32 1.1754944e-38, %v1341
    %v1343 = vsel %vm1340, %v1342, %v1338
    %v1344 = vmul.f32 1.0, %v1343
    %1345 = vmatpush.bf16.msra.mxu0 0
    %1346 = vmatpush.bf16.msra.mxu0 0
    %1347 = vmatpush.bf16.msra.mxu0 0
    %1348 = vmatpush.bf16.msra.mxu0 0
    %1349 = vmatpush.bf16.msra.mxu0 0
    %1350 = vmatpush.bf16.msra.mxu0 0
    %1351 = vmatpush.bf16.msra.mxu0 %v685
    %1352 = vmatpush.bf16.msra.mxu0 %v684
    %1353 = vmatmul.bf16.gmra.mxu0 %v1297
    %v1354 = vpop.f32.mrf.mxu0
    %v1355 = vadd.f32 %v384, %v1354
    %v1356 = vpop.f32.mrf.mxu0
    %1357 = vdwg.mxu0
    %v1358 = vmul.f32 %v1344, %v1355
    %v1359 = vadd.f32 %v1292, %v1358
    %v1360 = vtanh.pop %v1359
    %v1361 = vadd.f32 %v1279, %v1322
    %v1362 = vxor.u32 %v1361, 2147483648
    %v1363 = vmul.f32 %v1362, 1.442695
    %v1364 = vpow.pop %v1363
    %v1365 = vadd.f32 %v1364, 1.0
    %v1366 = vrcp.pop %v1365
    %v1367 = vmul.f32 %v1365, %v1366
    %v1368 = vsub.f32 1.0, %v1367
    %v1369 = vmul.f32 %v1366, %v1368
    %v1370 = vadd.f32 %v1366, %v1369
    %vm1371 = vweird.f32 %v1365
    %vm1372 = vweird.f32 %v1366
    %vm1373 = vmor %vm1371, %vm1372
    %v1374 = vsel %vm1373, %v1366, %v1370
    %v1375 = vand.u32 2147483647, %v1365
    %vm1376 = vcmp.eq.f32.partialorder %v1375, 8.507059e+37
    %v1377 = vand.u32 %v1365, 2147483648
    %v1378 = vor.u32 1.1754944e-38, %v1377
    %v1379 = vsel %vm1376, %v1378, %v1374
    %v1380 = vmul.f32 1.0, %v1379
    %v1381 = vsub.f32 1.0, %v1380
    %v1382 = vmul.f32 %v1381, %v1360
    %v1383 = vmul.f32 %v1380, %v1165
    %v1384 = vadd.f32 %v1382, %v1383
    %1385 = vmatpush.bf16.msra.mxu0 0
    %1386 = vmatpush.bf16.msra.mxu0 0
    %1387 = vmatpush.bf16.msra.mxu0 0
    %1388 = vmatpush.bf16.msra.mxu0 0
    %1389 = vmatpush.bf16.msra.mxu0 0
    %1390 = vmatpush.bf16.msra.mxu0 0
    %1391 = vmatpush.bf16.msra.mxu0 %v410
    %1392 = vmatpush.bf16.msra.mxu0 %v409
    %1393 = vmatmul.bf16.gmra.mxu0 %v1254
    %v1394 = vpop.f32.mrf.mxu0
    %v1395 = vadd.f32 0.0, %v1394
    %v1396 = vpop.f32.mrf.mxu0
    %1397 = vdwg.mxu0
    %1398 = vmatpush.bf16.msra.mxu0 0
    %1399 = vmatpush.bf16.msra.mxu0 0
    %1400 = vmatpush.bf16.msra.mxu0 0
    %1401 = vmatpush.bf16.msra.mxu0 0
    %1402 = vmatpush.bf16.msra.mxu0 0
    %1403 = vmatpush.bf16.msra.mxu0 0
    %1404 = vmatpush.bf16.msra.mxu0 %v439
    %1405 = vmatpush.bf16.msra.mxu0 %v438
    %1406 = vmatmul.bf16.gmra.mxu0 %v1254
    %v1407 = vpop.f32.mrf.mxu0
    %v1408 = vadd.f32 0.0, %v1407
    %v1409 = vpop.f32.mrf.mxu0
    %1410 = vdwg.mxu0
    %v1411 = vadd.f32 %v207, %v1395
    %v1412 = vxor.u32 %v1411, 2147483648
    %v1413 = vmul.f32 %v1412, 1.442695
    %v1414 = vpow.pop %v1413
    %v1415 = vadd.f32 %v1414, 1.0
    %v1416 = vrcp.pop %v1415
    %v1417 = vmul.f32 %v1415, %v1416
    %v1418 = vsub.f32 1.0, %v1417
    %v1419 = vmul.f32 %v1416, %v1418
    %v1420 = vadd.f32 %v1416, %v1419
    %vm1421 = vweird.f32 %v1415
    %vm1422 = vweird.f32 %v1416
    %vm1423 = vmor %vm1421, %vm1422
    %v1424 = vsel %vm1423, %v1416, %v1420
    %v1425 = vand.u32 2147483647, %v1415
    %vm1426 = vcmp.eq.f32.partialorder %v1425, 8.507059e+37
    %v1427 = vand.u32 %v1415, 2147483648
    %v1428 = vor.u32 1.1754944e-38, %v1427
    %v1429 = vsel %vm1426, %v1428, %v1424
    %v1430 = vmul.f32 1.0, %v1429
    %1431 = vmatpush.bf16.msra.mxu0 0
    %1432 = vmatpush.bf16.msra.mxu0 0
    %1433 = vmatpush.bf16.msra.mxu0 0
    %1434 = vmatpush.bf16.msra.mxu0 0
    %1435 = vmatpush.bf16.msra.mxu0 0
    %1436 = vmatpush.bf16.msra.mxu0 0
    %1437 = vmatpush.bf16.msra.mxu0 %v484
    %1438 = vmatpush.bf16.msra.mxu0 %v483
    %1439 = vmatmul.bf16.gmra.mxu0 %v1254
    %v1440 = vpop.f32.mrf.mxu0
    %v1441 = vadd.f32 %v379, %v1440
    %v1442 = vpop.f32.mrf.mxu0
    %1443 = vdwg.mxu0
    %v1444 = vmul.f32 %v1430, %v1441
    %v1445 = vadd.f32 %v317, %v1444
    %v1446 = vtanh.pop %v1445
    %v1447 = vadd.f32 %v262, %v1408
    %v1448 = vxor.u32 %v1447, 2147483648
    %v1449 = vmul.f32 %v1448, 1.442695
    %v1450 = vpow.pop %v1449
    %v1451 = vadd.f32 %v1450, 1.0
    %v1452 = vrcp.pop %v1451
    %v1453 = vmul.f32 %v1451, %v1452
    %v1454 = vsub.f32 1.0, %v1453
    %v1455 = vmul.f32 %v1452, %v1454
    %v1456 = vadd.f32 %v1452, %v1455
    %vm1457 = vweird.f32 %v1451
    %vm1458 = vweird.f32 %v1452
    %vm1459 = vmor %vm1457, %vm1458
    %v1460 = vsel %vm1459, %v1452, %v1456
    %v1461 = vand.u32 2147483647, %v1451
    %vm1462 = vcmp.eq.f32.partialorder %v1461, 8.507059e+37
    %v1463 = vand.u32 %v1451, 2147483648
    %v1464 = vor.u32 1.1754944e-38, %v1463
    %v1465 = vsel %vm1462, %v1464, %v1460
    %v1466 = vmul.f32 1.0, %v1465
    %v1467 = vsub.f32 1.0, %v1466
    %v1468 = vmul.f32 %v1467, %v1446
    %v1469 = vmul.f32 %v1466, %v1251
    %v1470 = vadd.f32 %v1468, %v1469
    %v1471 = vpack.c.bf16 %v1470, %v1470
    %v1473 = vsel %vm413, %v1471, 0
    %1475 = vmatpush.bf16.msra.mxu0 0
    %1476 = vmatpush.bf16.msra.mxu0 0
    %1477 = vmatpush.bf16.msra.mxu0 0
    %1478 = vmatpush.bf16.msra.mxu0 0
    %1479 = vmatpush.bf16.msra.mxu0 0
    %1480 = vmatpush.bf16.msra.mxu0 0
    %1481 = vmatpush.bf16.msra.mxu0 %v537
    %1482 = vmatpush.bf16.msra.mxu0 %v536
    %1483 = vmatmul.bf16.gmra.mxu0 %v1473
    %v1484 = vpop.f32.mrf.mxu0
    %v1485 = vadd.f32 %v389, %v1484
    %v1486 = vpop.f32.mrf.mxu0
    %1487 = vdwg.mxu0
    %1488 = vmatpush.bf16.msra.mxu0 0
    %1489 = vmatpush.bf16.msra.mxu0 0
    %1490 = vmatpush.bf16.msra.mxu0 0
    %1491 = vmatpush.bf16.msra.mxu0 0
    %1492 = vmatpush.bf16.msra.mxu0 0
    %1493 = vmatpush.bf16.msra.mxu0 0
    %1494 = vmatpush.bf16.msra.mxu0 %v565
    %1495 = vmatpush.bf16.msra.mxu0 %v564
    %1496 = vmatmul.bf16.gmra.mxu0 %v1473
    %v1497 = vpop.f32.mrf.mxu0
    %v1498 = vadd.f32 %v394, %v1497
    %v1499 = vpop.f32.mrf.mxu0
    %1500 = vdwg.mxu0
    %1501 = vmatpush.bf16.msra.mxu0 0
    %1502 = vmatpush.bf16.msra.mxu0 0
    %1503 = vmatpush.bf16.msra.mxu0 0
    %1504 = vmatpush.bf16.msra.mxu0 0
    %1505 = vmatpush.bf16.msra.mxu0 0
    %1506 = vmatpush.bf16.msra.mxu0 0
    %1507 = vmatpush.bf16.msra.mxu0 %v590
    %1508 = vmatpush.bf16.msra.mxu0 %v589
    %1509 = vmatmul.bf16.gmra.mxu0 %v1473
    %v1510 = vpop.f32.mrf.mxu0
    %v1511 = vadd.f32 %v399, %v1510
    %v1512 = vpop.f32.mrf.mxu0
    %1513 = vdwg.mxu0
    %v1514 = vpack.c.bf16 %v1384, %v1384
    %v1516 = vsel %vm413, %v1514, 0
    %1518 = vmatpush.bf16.msra.mxu0 0
    %1519 = vmatpush.bf16.msra.mxu0 0
    %1520 = vmatpush.bf16.msra.mxu0 0
    %1521 = vmatpush.bf16.msra.mxu0 0
    %1522 = vmatpush.bf16.msra.mxu0 0
    %1523 = vmatpush.bf16.msra.mxu0 0
    %1524 = vmatpush.bf16.msra.mxu0 %v615
    %1525 = vmatpush.bf16.msra.mxu0 %v614
    %1526 = vmatmul.bf16.gmra.mxu0 %v1516
    %v1527 = vpop.f32.mrf.mxu0
    %v1528 = vadd.f32 0.0, %v1527
    %v1529 = vpop.f32.mrf.mxu0
    %1530 = vdwg.mxu0
    %1531 = vmatpush.bf16.msra.mxu0 0
    %1532 = vmatpush.bf16.msra.mxu0 0
    %1533 = vmatpush.bf16.msra.mxu0 0
    %1534 = vmatpush.bf16.msra.mxu0 0
    %1535 = vmatpush.bf16.msra.mxu0 0
    %1536 = vmatpush.bf16.msra.mxu0 0
    %1537 = vmatpush.bf16.msra.mxu0 %v640
    %1538 = vmatpush.bf16.msra.mxu0 %v639
    %1539 = vmatmul.bf16.gmra.mxu0 %v1516
    %v1540 = vpop.f32.mrf.mxu0
    %v1541 = vadd.f32 0.0, %v1540
    %v1542 = vpop.f32.mrf.mxu0
    %1543 = vdwg.mxu0
    %v1544 = vadd.f32 %v1485, %v1528
    %v1545 = vxor.u32 %v1544, 2147483648
    %v1546 = vmul.f32 %v1545, 1.442695
    %v1547 = vpow.pop %v1546
    %v1548 = vadd.f32 %v1547, 1.0
    %v1549 = vrcp.pop %v1548
    %v1550 = vmul.f32 %v1548, %v1549
    %v1551 = vsub.f32 1.0, %v1550
    %v1552 = vmul.f32 %v1549, %v1551
    %v1553 = vadd.f32 %v1549, %v1552
    %vm1554 = vweird.f32 %v1548
    %vm1555 = vweird.f32 %v1549
    %vm1556 = vmor %vm1554, %vm1555
    %v1557 = vsel %vm1556, %v1549, %v1553
    %v1558 = vand.u32 2147483647, %v1548
    %vm1559 = vcmp.eq.f32.partialorder %v1558, 8.507059e+37
    %v1560 = vand.u32 %v1548, 2147483648
    %v1561 = vor.u32 1.1754944e-38, %v1560
    %v1562 = vsel %vm1559, %v1561, %v1557
    %v1563 = vmul.f32 1.0, %v1562
    %1564 = vmatpush.bf16.msra.mxu0 0
    %1565 = vmatpush.bf16.msra.mxu0 0
    %1566 = vmatpush.bf16.msra.mxu0 0
    %1567 = vmatpush.bf16.msra.mxu0 0
    %1568 = vmatpush.bf16.msra.mxu0 0
    %1569 = vmatpush.bf16.msra.mxu0 0
    %1570 = vmatpush.bf16.msra.mxu0 %v685
    %1571 = vmatpush.bf16.msra.mxu0 %v684
    %1572 = vmatmul.bf16.gmra.mxu0 %v1516
    %v1573 = vpop.f32.mrf.mxu0
    %v1574 = vadd.f32 %v384, %v1573
    %v1575 = vpop.f32.mrf.mxu0
    %1576 = vdwg.mxu0
    %v1577 = vmul.f32 %v1563, %v1574
    %v1578 = vadd.f32 %v1511, %v1577
    %v1579 = vtanh.pop %v1578
    %v1580 = vadd.f32 %v1498, %v1541
    %v1581 = vxor.u32 %v1580, 2147483648
    %v1582 = vmul.f32 %v1581, 1.442695
    %v1583 = vpow.pop %v1582
    %v1584 = vadd.f32 %v1583, 1.0
    %v1585 = vrcp.pop %v1584
    %v1586 = vmul.f32 %v1584, %v1585
    %v1587 = vsub.f32 1.0, %v1586
    %v1588 = vmul.f32 %v1585, %v1587
    %v1589 = vadd.f32 %v1585, %v1588
    %vm1590 = vweird.f32 %v1584
    %vm1591 = vweird.f32 %v1585
    %vm1592 = vmor %vm1590, %vm1591
    %v1593 = vsel %vm1592, %v1585, %v1589
    %v1594 = vand.u32 2147483647, %v1584
    %vm1595 = vcmp.eq.f32.partialorder %v1594, 8.507059e+37
    %v1596 = vand.u32 %v1584, 2147483648
    %v1597 = vor.u32 1.1754944e-38, %v1596
    %v1598 = vsel %vm1595, %v1597, %v1593
    %v1599 = vmul.f32 1.0, %v1598
    %v1600 = vsub.f32 1.0, %v1599
    %v1601 = vmul.f32 %v1600, %v1579
    %v1602 = vmul.f32 %v1599, %v1384
    %v1603 = vadd.f32 %v1601, %v1602
    %1604 = vmatpush.bf16.msra.mxu0 0
    %1605 = vmatpush.bf16.msra.mxu0 0
    %1606 = vmatpush.bf16.msra.mxu0 0
    %1607 = vmatpush.bf16.msra.mxu0 0
    %1608 = vmatpush.bf16.msra.mxu0 0
    %1609 = vmatpush.bf16.msra.mxu0 0
    %1610 = vmatpush.bf16.msra.mxu0 %v410
    %1611 = vmatpush.bf16.msra.mxu0 %v409
    %1612 = vmatmul.bf16.gmra.mxu0 %v1473
    %v1613 = vpop.f32.mrf.mxu0
    %v1614 = vadd.f32 0.0, %v1613
    %v1615 = vpop.f32.mrf.mxu0
    %1616 = vdwg.mxu0
    %1617 = vmatpush.bf16.msra.mxu0 0
    %1618 = vmatpush.bf16.msra.mxu0 0
    %1619 = vmatpush.bf16.msra.mxu0 0
    %1620 = vmatpush.bf16.msra.mxu0 0
    %1621 = vmatpush.bf16.msra.mxu0 0
    %1622 = vmatpush.bf16.msra.mxu0 0
    %1623 = vmatpush.bf16.msra.mxu0 %v439
    %1624 = vmatpush.bf16.msra.mxu0 %v438
    %1625 = vmatmul.bf16.gmra.mxu0 %v1473
    %v1626 = vpop.f32.mrf.mxu0
    %v1627 = vadd.f32 0.0, %v1626
    %v1628 = vpop.f32.mrf.mxu0
    %1629 = vdwg.mxu0
    %v1630 = vadd.f32 %v214, %v1614
    %v1631 = vxor.u32 %v1630, 2147483648
    %v1632 = vmul.f32 %v1631, 1.442695
    %v1633 = vpow.pop %v1632
    %v1634 = vadd.f32 %v1633, 1.0
    %v1635 = vrcp.pop %v1634
    %v1636 = vmul.f32 %v1634, %v1635
    %v1637 = vsub.f32 1.0, %v1636
    %v1638 = vmul.f32 %v1635, %v1637
    %v1639 = vadd.f32 %v1635, %v1638
    %vm1640 = vweird.f32 %v1634
    %vm1641 = vweird.f32 %v1635
    %vm1642 = vmor %vm1640, %vm1641
    %v1643 = vsel %vm1642, %v1635, %v1639
    %v1644 = vand.u32 2147483647, %v1634
    %vm1645 = vcmp.eq.f32.partialorder %v1644, 8.507059e+37
    %v1646 = vand.u32 %v1634, 2147483648
    %v1647 = vor.u32 1.1754944e-38, %v1646
    %v1648 = vsel %vm1645, %v1647, %v1643
    %v1649 = vmul.f32 1.0, %v1648
    %1650 = vmatpush.bf16.msra.mxu0 0
    %1651 = vmatpush.bf16.msra.mxu0 0
    %1652 = vmatpush.bf16.msra.mxu0 0
    %1653 = vmatpush.bf16.msra.mxu0 0
    %1654 = vmatpush.bf16.msra.mxu0 0
    %1655 = vmatpush.bf16.msra.mxu0 0
    %1656 = vmatpush.bf16.msra.mxu0 %v484
    %1657 = vmatpush.bf16.msra.mxu0 %v483
    %1658 = vmatmul.bf16.gmra.mxu0 %v1473
    %v1659 = vpop.f32.mrf.mxu0
    %v1660 = vadd.f32 %v379, %v1659
    %v1661 = vpop.f32.mrf.mxu0
    %1662 = vdwg.mxu0
    %v1663 = vmul.f32 %v1649, %v1660
    %v1664 = vadd.f32 %v324, %v1663
    %v1665 = vtanh.pop %v1664
    %v1666 = vadd.f32 %v269, %v1627
    %v1667 = vxor.u32 %v1666, 2147483648
    %v1668 = vmul.f32 %v1667, 1.442695
    %v1669 = vpow.pop %v1668
    %v1670 = vadd.f32 %v1669, 1.0
    %v1671 = vrcp.pop %v1670
    %v1672 = vmul.f32 %v1670, %v1671
    %v1673 = vsub.f32 1.0, %v1672
    %v1674 = vmul.f32 %v1671, %v1673
    %v1675 = vadd.f32 %v1671, %v1674
    %vm1676 = vweird.f32 %v1670
    %vm1677 = vweird.f32 %v1671
    %vm1678 = vmor %vm1676, %vm1677
    %v1679 = vsel %vm1678, %v1671, %v1675
    %v1680 = vand.u32 2147483647, %v1670
    %vm1681 = vcmp.eq.f32.partialorder %v1680, 8.507059e+37
    %v1682 = vand.u32 %v1670, 2147483648
    %v1683 = vor.u32 1.1754944e-38, %v1682
    %v1684 = vsel %vm1681, %v1683, %v1679
    %v1685 = vmul.f32 1.0, %v1684
    %v1686 = vsub.f32 1.0, %v1685
    %v1687 = vmul.f32 %v1686, %v1665
    %v1688 = vmul.f32 %v1685, %v1470
    %v1689 = vadd.f32 %v1687, %v1688
    %v1690 = vpack.c.bf16 %v1689, %v1689
    %v1692 = vsel %vm413, %v1690, 0
    %1694 = vmatpush.bf16.msra.mxu0 0
    %1695 = vmatpush.bf16.msra.mxu0 0
    %1696 = vmatpush.bf16.msra.mxu0 0
    %1697 = vmatpush.bf16.msra.mxu0 0
    %1698 = vmatpush.bf16.msra.mxu0 0
    %1699 = vmatpush.bf16.msra.mxu0 0
    %1700 = vmatpush.bf16.msra.mxu0 %v537
    %1701 = vmatpush.bf16.msra.mxu0 %v536
    %1702 = vmatmul.bf16.gmra.mxu0 %v1692
    %v1703 = vpop.f32.mrf.mxu0
    %v1704 = vadd.f32 %v389, %v1703
    %v1705 = vpop.f32.mrf.mxu0
    %1706 = vdwg.mxu0
    %1707 = vmatpush.bf16.msra.mxu0 0
    %1708 = vmatpush.bf16.msra.mxu0 0
    %1709 = vmatpush.bf16.msra.mxu0 0
    %1710 = vmatpush.bf16.msra.mxu0 0
    %1711 = vmatpush.bf16.msra.mxu0 0
    %1712 = vmatpush.bf16.msra.mxu0 0
    %1713 = vmatpush.bf16.msra.mxu0 %v565
    %1714 = vmatpush.bf16.msra.mxu0 %v564
    %1715 = vmatmul.bf16.gmra.mxu0 %v1692
    %v1716 = vpop.f32.mrf.mxu0
    %v1717 = vadd.f32 %v394, %v1716
    %v1718 = vpop.f32.mrf.mxu0
    %1719 = vdwg.mxu0
    %1720 = vmatpush.bf16.msra.mxu0 0
    %1721 = vmatpush.bf16.msra.mxu0 0
    %1722 = vmatpush.bf16.msra.mxu0 0
    %1723 = vmatpush.bf16.msra.mxu0 0
    %1724 = vmatpush.bf16.msra.mxu0 0
    %1725 = vmatpush.bf16.msra.mxu0 0
    %1726 = vmatpush.bf16.msra.mxu0 %v590
    %1727 = vmatpush.bf16.msra.mxu0 %v589
    %1728 = vmatmul.bf16.gmra.mxu0 %v1692
    %v1729 = vpop.f32.mrf.mxu0
    %v1730 = vadd.f32 %v399, %v1729
    %v1731 = vpop.f32.mrf.mxu0
    %1732 = vdwg.mxu0
    %v1733 = vpack.c.bf16 %v1603, %v1603
    %v1735 = vsel %vm413, %v1733, 0
    %1737 = vmatpush.bf16.msra.mxu0 0
    %1738 = vmatpush.bf16.msra.mxu0 0
    %1739 = vmatpush.bf16.msra.mxu0 0
    %1740 = vmatpush.bf16.msra.mxu0 0
    %1741 = vmatpush.bf16.msra.mxu0 0
    %1742 = vmatpush.bf16.msra.mxu0 0
    %1743 = vmatpush.bf16.msra.mxu0 %v615
    %1744 = vmatpush.bf16.msra.mxu0 %v614
    %1745 = vmatmul.bf16.gmra.mxu0 %v1735
    %v1746 = vpop.f32.mrf.mxu0
    %v1747 = vadd.f32 0.0, %v1746
    %v1748 = vpop.f32.mrf.mxu0
    %1749 = vdwg.mxu0
    %1750 = vmatpush.bf16.msra.mxu0 0
    %1751 = vmatpush.bf16.msra.mxu0 0
    %1752 = vmatpush.bf16.msra.mxu0 0
    %1753 = vmatpush.bf16.msra.mxu0 0
    %1754 = vmatpush.bf16.msra.mxu0 0
    %1755 = vmatpush.bf16.msra.mxu0 0
    %1756 = vmatpush.bf16.msra.mxu0 %v640
    %1757 = vmatpush.bf16.msra.mxu0 %v639
    %1758 = vmatmul.bf16.gmra.mxu0 %v1735
    %v1759 = vpop.f32.mrf.mxu0
    %v1760 = vadd.f32 0.0, %v1759
    %v1761 = vpop.f32.mrf.mxu0
    %1762 = vdwg.mxu0
    %v1763 = vadd.f32 %v1704, %v1747
    %v1764 = vxor.u32 %v1763, 2147483648
    %v1765 = vmul.f32 %v1764, 1.442695
    %v1766 = vpow.pop %v1765
    %v1767 = vadd.f32 %v1766, 1.0
    %v1768 = vrcp.pop %v1767
    %v1769 = vmul.f32 %v1767, %v1768
    %v1770 = vsub.f32 1.0, %v1769
    %v1771 = vmul.f32 %v1768, %v1770
    %v1772 = vadd.f32 %v1768, %v1771
    %vm1773 = vweird.f32 %v1767
    %vm1774 = vweird.f32 %v1768
    %vm1775 = vmor %vm1773, %vm1774
    %v1776 = vsel %vm1775, %v1768, %v1772
    %v1777 = vand.u32 2147483647, %v1767
    %vm1778 = vcmp.eq.f32.partialorder %v1777, 8.507059e+37
    %v1779 = vand.u32 %v1767, 2147483648
    %v1780 = vor.u32 1.1754944e-38, %v1779
    %v1781 = vsel %vm1778, %v1780, %v1776
    %v1782 = vmul.f32 1.0, %v1781
    %1783 = vmatpush.bf16.msra.mxu0 0
    %1784 = vmatpush.bf16.msra.mxu0 0
    %1785 = vmatpush.bf16.msra.mxu0 0
    %1786 = vmatpush.bf16.msra.mxu0 0
    %1787 = vmatpush.bf16.msra.mxu0 0
    %1788 = vmatpush.bf16.msra.mxu0 0
    %1789 = vmatpush.bf16.msra.mxu0 %v685
    %1790 = vmatpush.bf16.msra.mxu0 %v684
    %1791 = vmatmul.bf16.gmra.mxu0 %v1735
    %v1792 = vpop.f32.mrf.mxu0
    %v1793 = vadd.f32 %v384, %v1792
    %v1794 = vpop.f32.mrf.mxu0
    %1795 = vdwg.mxu0
    %v1796 = vmul.f32 %v1782, %v1793
    %v1797 = vadd.f32 %v1730, %v1796
    %v1798 = vtanh.pop %v1797
    %v1799 = vadd.f32 %v1717, %v1760
    %v1800 = vxor.u32 %v1799, 2147483648
    %v1801 = vmul.f32 %v1800, 1.442695
    %v1802 = vpow.pop %v1801
    %v1803 = vadd.f32 %v1802, 1.0
    %v1804 = vrcp.pop %v1803
    %v1805 = vmul.f32 %v1803, %v1804
    %v1806 = vsub.f32 1.0, %v1805
    %v1807 = vmul.f32 %v1804, %v1806
    %v1808 = vadd.f32 %v1804, %v1807
    %vm1809 = vweird.f32 %v1803
    %vm1810 = vweird.f32 %v1804
    %vm1811 = vmor %vm1809, %vm1810
    %v1812 = vsel %vm1811, %v1804, %v1808
    %v1813 = vand.u32 2147483647, %v1803
    %vm1814 = vcmp.eq.f32.partialorder %v1813, 8.507059e+37
    %v1815 = vand.u32 %v1803, 2147483648
    %v1816 = vor.u32 1.1754944e-38, %v1815
    %v1817 = vsel %vm1814, %v1816, %v1812
    %v1818 = vmul.f32 1.0, %v1817
    %v1819 = vsub.f32 1.0, %v1818
    %v1820 = vmul.f32 %v1819, %v1798
    %v1821 = vmul.f32 %v1818, %v1603
    %v1822 = vadd.f32 %v1820, %v1821
    %1823 = vmatpush.bf16.msra.mxu0 0
    %1824 = vmatpush.bf16.msra.mxu0 0
    %1825 = vmatpush.bf16.msra.mxu0 0
    %1826 = vmatpush.bf16.msra.mxu0 0
    %1827 = vmatpush.bf16.msra.mxu0 0
    %1828 = vmatpush.bf16.msra.mxu0 0
    %1829 = vmatpush.bf16.msra.mxu0 %v410
    %1830 = vmatpush.bf16.msra.mxu0 %v409
    %1831 = vmatmul.bf16.gmra.mxu0 %v1692
    %v1832 = vpop.f32.mrf.mxu0
    %v1833 = vadd.f32 0.0, %v1832
    %v1834 = vpop.f32.mrf.mxu0
    %1835 = vdwg.mxu0
    %1836 = vmatpush.bf16.msra.mxu0 0
    %1837 = vmatpush.bf16.msra.mxu0 0
    %1838 = vmatpush.bf16.msra.mxu0 0
    %1839 = vmatpush.bf16.msra.mxu0 0
    %1840 = vmatpush.bf16.msra.mxu0 0
    %1841 = vmatpush.bf16.msra.mxu0 0
    %1842 = vmatpush.bf16.msra.mxu0 %v439
    %1843 = vmatpush.bf16.msra.mxu0 %v438
    %1844 = vmatmul.bf16.gmra.mxu0 %v1692
    %v1845 = vpop.f32.mrf.mxu0
    %v1846 = vadd.f32 0.0, %v1845
    %v1847 = vpop.f32.mrf.mxu0
    %1848 = vdwg.mxu0
    %v1849 = vadd.f32 %v215, %v1833
    %v1850 = vxor.u32 %v1849, 2147483648
    %v1851 = vmul.f32 %v1850, 1.442695
    %v1852 = vpow.pop %v1851
    %v1853 = vadd.f32 %v1852, 1.0
    %v1854 = vrcp.pop %v1853
    %v1855 = vmul.f32 %v1853, %v1854
    %v1856 = vsub.f32 1.0, %v1855
    %v1857 = vmul.f32 %v1854, %v1856
    %v1858 = vadd.f32 %v1854, %v1857
    %vm1859 = vweird.f32 %v1853
    %vm1860 = vweird.f32 %v1854
    %vm1861 = vmor %vm1859, %vm1860
    %v1862 = vsel %vm1861, %v1854, %v1858
    %v1863 = vand.u32 2147483647, %v1853
    %vm1864 = vcmp.eq.f32.partialorder %v1863, 8.507059e+37
    %v1865 = vand.u32 %v1853, 2147483648
    %v1866 = vor.u32 1.1754944e-38, %v1865
    %v1867 = vsel %vm1864, %v1866, %v1862
    %v1868 = vmul.f32 1.0, %v1867
    %1869 = vmatpush.bf16.msra.mxu0 0
    %1870 = vmatpush.bf16.msra.mxu0 0
    %1871 = vmatpush.bf16.msra.mxu0 0
    %1872 = vmatpush.bf16.msra.mxu0 0
    %1873 = vmatpush.bf16.msra.mxu0 0
    %1874 = vmatpush.bf16.msra.mxu0 0
    %1875 = vmatpush.bf16.msra.mxu0 %v484
    %1876 = vmatpush.bf16.msra.mxu0 %v483
    %1877 = vmatmul.bf16.gmra.mxu0 %v1692
    %v1878 = vpop.f32.mrf.mxu0
    %v1879 = vadd.f32 %v379, %v1878
    %v1880 = vpop.f32.mrf.mxu0
    %1881 = vdwg.mxu0
    %v1882 = vmul.f32 %v1868, %v1879
    %v1883 = vadd.f32 %v325, %v1882
    %v1884 = vtanh.pop %v1883
    %v1885 = vadd.f32 %v270, %v1846
    %v1886 = vxor.u32 %v1885, 2147483648
    %v1887 = vmul.f32 %v1886, 1.442695
    %v1888 = vpow.pop %v1887
    %v1889 = vadd.f32 %v1888, 1.0
    %v1890 = vrcp.pop %v1889
    %v1891 = vmul.f32 %v1889, %v1890
    %v1892 = vsub.f32 1.0, %v1891
    %v1893 = vmul.f32 %v1890, %v1892
    %v1894 = vadd.f32 %v1890, %v1893
    %vm1895 = vweird.f32 %v1889
    %vm1896 = vweird.f32 %v1890
    %vm1897 = vmor %vm1895, %vm1896
    %v1898 = vsel %vm1897, %v1890, %v1894
    %v1899 = vand.u32 2147483647, %v1889
    %vm1900 = vcmp.eq.f32.partialorder %v1899, 8.507059e+37
    %v1901 = vand.u32 %v1889, 2147483648
    %v1902 = vor.u32 1.1754944e-38, %v1901
    %v1903 = vsel %vm1900, %v1902, %v1898
    %v1904 = vmul.f32 1.0, %v1903
    %v1905 = vsub.f32 1.0, %v1904
    %v1906 = vmul.f32 %v1905, %v1884
    %v1907 = vmul.f32 %v1904, %v1689
    %v1908 = vadd.f32 %v1906, %v1907
    %v1909 = vpack.c.bf16 %v1908, %v1908
    %v1911 = vsel %vm413, %v1909, 0
    %1913 = vmatpush.bf16.msra.mxu0 0
    %1914 = vmatpush.bf16.msra.mxu0 0
    %1915 = vmatpush.bf16.msra.mxu0 0
    %1916 = vmatpush.bf16.msra.mxu0 0
    %1917 = vmatpush.bf16.msra.mxu0 0
    %1918 = vmatpush.bf16.msra.mxu0 0
    %1919 = vmatpush.bf16.msra.mxu0 %v537
    %1920 = vmatpush.bf16.msra.mxu0 %v536
    %1921 = vmatmul.bf16.gmra.mxu0 %v1911
    %v1922 = vpop.f32.mrf.mxu0
    %v1923 = vadd.f32 %v389, %v1922
    %v1924 = vpop.f32.mrf.mxu0
    %1925 = vdwg.mxu0
    %1926 = vmatpush.bf16.msra.mxu0 0
    %1927 = vmatpush.bf16.msra.mxu0 0
    %1928 = vmatpush.bf16.msra.mxu0 0
    %1929 = vmatpush.bf16.msra.mxu0 0
    %1930 = vmatpush.bf16.msra.mxu0 0
    %1931 = vmatpush.bf16.msra.mxu0 0
    %1932 = vmatpush.bf16.msra.mxu0 %v565
    %1933 = vmatpush.bf16.msra.mxu0 %v564
    %1934 = vmatmul.bf16.gmra.mxu0 %v1911
    %v1935 = vpop.f32.mrf.mxu0
    %v1936 = vadd.f32 %v394, %v1935
    %v1937 = vpop.f32.mrf.mxu0
    %1938 = vdwg.mxu0
    %1939 = vmatpush.bf16.msra.mxu0 0
    %1940 = vmatpush.bf16.msra.mxu0 0
    %1941 = vmatpush.bf16.msra.mxu0 0
    %1942 = vmatpush.bf16.msra.mxu0 0
    %1943 = vmatpush.bf16.msra.mxu0 0
    %1944 = vmatpush.bf16.msra.mxu0 0
    %1945 = vmatpush.bf16.msra.mxu0 %v590
    %1946 = vmatpush.bf16.msra.mxu0 %v589
    %1947 = vmatmul.bf16.gmra.mxu0 %v1911
    %v1948 = vpop.f32.mrf.mxu0
    %v1949 = vadd.f32 %v399, %v1948
    %v1950 = vpop.f32.mrf.mxu0
    %1951 = vdwg.mxu0
    %v1952 = vpack.c.bf16 %v1822, %v1822
    %v1954 = vsel %vm413, %v1952, 0
    %1956 = vmatpush.bf16.msra.mxu0 0
    %1957 = vmatpush.bf16.msra.mxu0 0
    %1958 = vmatpush.bf16.msra.mxu0 0
    %1959 = vmatpush.bf16.msra.mxu0 0
    %1960 = vmatpush.bf16.msra.mxu0 0
    %1961 = vmatpush.bf16.msra.mxu0 0
    %1962 = vmatpush.bf16.msra.mxu0 %v615
    %1963 = vmatpush.bf16.msra.mxu0 %v614
    %1964 = vmatmul.bf16.gmra.mxu0 %v1954
    %v1965 = vpop.f32.mrf.mxu0
    %v1966 = vadd.f32 0.0, %v1965
    %v1967 = vpop.f32.mrf.mxu0
    %1968 = vdwg.mxu0
    %1969 = vmatpush.bf16.msra.mxu0 0
    %1970 = vmatpush.bf16.msra.mxu0 0
    %1971 = vmatpush.bf16.msra.mxu0 0
    %1972 = vmatpush.bf16.msra.mxu0 0
    %1973 = vmatpush.bf16.msra.mxu0 0
    %1974 = vmatpush.bf16.msra.mxu0 0
    %1975 = vmatpush.bf16.msra.mxu0 %v640
    %1976 = vmatpush.bf16.msra.mxu0 %v639
    %1977 = vmatmul.bf16.gmra.mxu0 %v1954
    %v1978 = vpop.f32.mrf.mxu0
    %v1979 = vadd.f32 0.0, %v1978
    %v1980 = vpop.f32.mrf.mxu0
    %1981 = vdwg.mxu0
    %v1982 = vadd.f32 %v1923, %v1966
    %v1983 = vxor.u32 %v1982, 2147483648
    %v1984 = vmul.f32 %v1983, 1.442695
    %v1985 = vpow.pop %v1984
    %v1986 = vadd.f32 %v1985, 1.0
    %v1987 = vrcp.pop %v1986
    %v1988 = vmul.f32 %v1986, %v1987
    %v1989 = vsub.f32 1.0, %v1988
    %v1990 = vmul.f32 %v1987, %v1989
    %v1991 = vadd.f32 %v1987, %v1990
    %vm1992 = vweird.f32 %v1986
    %vm1993 = vweird.f32 %v1987
    %vm1994 = vmor %vm1992, %vm1993
    %v1995 = vsel %vm1994, %v1987, %v1991
    %v1996 = vand.u32 2147483647, %v1986
    %vm1997 = vcmp.eq.f32.partialorder %v1996, 8.507059e+37
    %v1998 = vand.u32 %v1986, 2147483648
    %v1999 = vor.u32 1.1754944e-38, %v1998
    %v2000 = vsel %vm1997, %v1999, %v1995
    %v2001 = vmul.f32 1.0, %v2000
    %2002 = vmatpush.bf16.msra.mxu0 0
    %2003 = vmatpush.bf16.msra.mxu0 0
    %2004 = vmatpush.bf16.msra.mxu0 0
    %2005 = vmatpush.bf16.msra.mxu0 0
    %2006 = vmatpush.bf16.msra.mxu0 0
    %2007 = vmatpush.bf16.msra.mxu0 0
    %2008 = vmatpush.bf16.msra.mxu0 %v685
    %2009 = vmatpush.bf16.msra.mxu0 %v684
    %2010 = vmatmul.bf16.gmra.mxu0 %v1954
    %v2011 = vpop.f32.mrf.mxu0
    %v2012 = vadd.f32 %v384, %v2011
    %v2013 = vpop.f32.mrf.mxu0
    %2014 = vdwg.mxu0
    %v2015 = vmul.f32 %v2001, %v2012
    %v2016 = vadd.f32 %v1949, %v2015
    %v2017 = vtanh.pop %v2016
    %v2018 = vadd.f32 %v1936, %v1979
    %v2019 = vxor.u32 %v2018, 2147483648
    %v2020 = vmul.f32 %v2019, 1.442695
    %v2021 = vpow.pop %v2020
    %v2022 = vadd.f32 %v2021, 1.0
    %v2023 = vrcp.pop %v2022
    %v2024 = vmul.f32 %v2022, %v2023
    %v2025 = vsub.f32 1.0, %v2024
    %v2026 = vmul.f32 %v2023, %v2025
    %v2027 = vadd.f32 %v2023, %v2026
    %vm2028 = vweird.f32 %v2022
    %vm2029 = vweird.f32 %v2023
    %vm2030 = vmor %vm2028, %vm2029
    %v2031 = vsel %vm2030, %v2023, %v2027
    %v2032 = vand.u32 2147483647, %v2022
    %vm2033 = vcmp.eq.f32.partialorder %v2032, 8.507059e+37
    %v2034 = vand.u32 %v2022, 2147483648
    %v2035 = vor.u32 1.1754944e-38, %v2034
    %v2036 = vsel %vm2033, %v2035, %v2031
    %v2037 = vmul.f32 1.0, %v2036
    %v2038 = vsub.f32 1.0, %v2037
    %v2039 = vmul.f32 %v2038, %v2017
    %v2040 = vmul.f32 %v2037, %v1822
    %v2041 = vadd.f32 %v2039, %v2040
    %2042 = vmatpush.bf16.msra.mxu0 0
    %2043 = vmatpush.bf16.msra.mxu0 0
    %2044 = vmatpush.bf16.msra.mxu0 0
    %2045 = vmatpush.bf16.msra.mxu0 0
    %2046 = vmatpush.bf16.msra.mxu0 0
    %2047 = vmatpush.bf16.msra.mxu0 0
    %2048 = vmatpush.bf16.msra.mxu0 %v410
    %2049 = vmatpush.bf16.msra.mxu0 %v409
    %2050 = vmatmul.bf16.gmra.mxu0 %v1911
    %v2051 = vpop.f32.mrf.mxu0
    %v2052 = vadd.f32 0.0, %v2051
    %v2053 = vpop.f32.mrf.mxu0
    %2054 = vdwg.mxu0
    %2055 = vmatpush.bf16.msra.mxu0 0
    %2056 = vmatpush.bf16.msra.mxu0 0
    %2057 = vmatpush.bf16.msra.mxu0 0
    %2058 = vmatpush.bf16.msra.mxu0 0
    %2059 = vmatpush.bf16.msra.mxu0 0
    %2060 = vmatpush.bf16.msra.mxu0 0
    %2061 = vmatpush.bf16.msra.mxu0 %v439
    %2062 = vmatpush.bf16.msra.mxu0 %v438
    %2063 = vmatmul.bf16.gmra.mxu0 %v1911
    %v2064 = vpop.f32.mrf.mxu0
    %v2065 = vadd.f32 0.0, %v2064
    %v2066 = vpop.f32.mrf.mxu0
    %2067 = vdwg.mxu0
    %v2068 = vadd.f32 %v216, %v2052
    %v2069 = vxor.u32 %v2068, 2147483648
    %v2070 = vmul.f32 %v2069, 1.442695
    %v2071 = vpow.pop %v2070
    %v2072 = vadd.f32 %v2071, 1.0
    %v2073 = vrcp.pop %v2072
    %v2074 = vmul.f32 %v2072, %v2073
    %v2075 = vsub.f32 1.0, %v2074
    %v2076 = vmul.f32 %v2073, %v2075
    %v2077 = vadd.f32 %v2073, %v2076
    %vm2078 = vweird.f32 %v2072
    %vm2079 = vweird.f32 %v2073
    %vm2080 = vmor %vm2078, %vm2079
    %v2081 = vsel %vm2080, %v2073, %v2077
    %v2082 = vand.u32 2147483647, %v2072
    %vm2083 = vcmp.eq.f32.partialorder %v2082, 8.507059e+37
    %v2084 = vand.u32 %v2072, 2147483648
    %v2085 = vor.u32 1.1754944e-38, %v2084
    %v2086 = vsel %vm2083, %v2085, %v2081
    %v2087 = vmul.f32 1.0, %v2086
    %2088 = vmatpush.bf16.msra.mxu0 0
    %2089 = vmatpush.bf16.msra.mxu0 0
    %2090 = vmatpush.bf16.msra.mxu0 0
    %2091 = vmatpush.bf16.msra.mxu0 0
    %2092 = vmatpush.bf16.msra.mxu0 0
    %2093 = vmatpush.bf16.msra.mxu0 0
    %2094 = vmatpush.bf16.msra.mxu0 %v484
    %2095 = vmatpush.bf16.msra.mxu0 %v483
    %2096 = vmatmul.bf16.gmra.mxu0 %v1911
    %v2097 = vpop.f32.mrf.mxu0
    %v2098 = vadd.f32 %v379, %v2097
    %v2099 = vpop.f32.mrf.mxu0
    %2100 = vdwg.mxu0
    %v2101 = vmul.f32 %v2087, %v2098
    %v2102 = vadd.f32 %v326, %v2101
    %v2103 = vtanh.pop %v2102
    %v2104 = vadd.f32 %v271, %v2065
    %v2105 = vxor.u32 %v2104, 2147483648
    %v2106 = vmul.f32 %v2105, 1.442695
    %v2107 = vpow.pop %v2106
    %v2108 = vadd.f32 %v2107, 1.0
    %v2109 = vrcp.pop %v2108
    %v2110 = vmul.f32 %v2108, %v2109
    %v2111 = vsub.f32 1.0, %v2110
    %v2112 = vmul.f32 %v2109, %v2111
    %v2113 = vadd.f32 %v2109, %v2112
    %vm2114 = vweird.f32 %v2108
    %vm2115 = vweird.f32 %v2109
    %vm2116 = vmor %vm2114, %vm2115
    %v2117 = vsel %vm2116, %v2109, %v2113
    %v2118 = vand.u32 2147483647, %v2108
    %vm2119 = vcmp.eq.f32.partialorder %v2118, 8.507059e+37
    %v2120 = vand.u32 %v2108, 2147483648
    %v2121 = vor.u32 1.1754944e-38, %v2120
    %v2122 = vsel %vm2119, %v2121, %v2117
    %v2123 = vmul.f32 1.0, %v2122
    %v2124 = vsub.f32 1.0, %v2123
    %v2125 = vmul.f32 %v2124, %v2103
    %v2126 = vmul.f32 %v2123, %v1908
    %v2127 = vadd.f32 %v2125, %v2126
    %v2128 = vpack.c.bf16 %v2127, %v2127
    %v2130 = vsel %vm413, %v2128, 0
    %2132 = vmatpush.bf16.msra.mxu0 0
    %2133 = vmatpush.bf16.msra.mxu0 0
    %2134 = vmatpush.bf16.msra.mxu0 0
    %2135 = vmatpush.bf16.msra.mxu0 0
    %2136 = vmatpush.bf16.msra.mxu0 0
    %2137 = vmatpush.bf16.msra.mxu0 0
    %2138 = vmatpush.bf16.msra.mxu0 %v537
    %2139 = vmatpush.bf16.msra.mxu0 %v536
    %2140 = vmatmul.bf16.gmra.mxu0 %v2130
    %v2141 = vpop.f32.mrf.mxu0
    %v2142 = vadd.f32 %v389, %v2141
    %v2143 = vpop.f32.mrf.mxu0
    %2144 = vdwg.mxu0
    %2145 = vmatpush.bf16.msra.mxu0 0
    %2146 = vmatpush.bf16.msra.mxu0 0
    %2147 = vmatpush.bf16.msra.mxu0 0
    %2148 = vmatpush.bf16.msra.mxu0 0
    %2149 = vmatpush.bf16.msra.mxu0 0
    %2150 = vmatpush.bf16.msra.mxu0 0
    %2151 = vmatpush.bf16.msra.mxu0 %v565
    %2152 = vmatpush.bf16.msra.mxu0 %v564
    %2153 = vmatmul.bf16.gmra.mxu0 %v2130
    %v2154 = vpop.f32.mrf.mxu0
    %v2155 = vadd.f32 %v394, %v2154
    %v2156 = vpop.f32.mrf.mxu0
    %2157 = vdwg.mxu0
    %2158 = vmatpush.bf16.msra.mxu0 0
    %2159 = vmatpush.bf16.msra.mxu0 0
    %2160 = vmatpush.bf16.msra.mxu0 0
    %2161 = vmatpush.bf16.msra.mxu0 0
    %2162 = vmatpush.bf16.msra.mxu0 0
    %2163 = vmatpush.bf16.msra.mxu0 0
    %2164 = vmatpush.bf16.msra.mxu0 %v590
    %2165 = vmatpush.bf16.msra.mxu0 %v589
    %2166 = vmatmul.bf16.gmra.mxu0 %v2130
    %v2167 = vpop.f32.mrf.mxu0
    %v2168 = vadd.f32 %v399, %v2167
    %v2169 = vpop.f32.mrf.mxu0
    %2170 = vdwg.mxu0
    %v2171 = vpack.c.bf16 %v2041, %v2041
    %v2173 = vsel %vm413, %v2171, 0
    %2175 = vmatpush.bf16.msra.mxu0 0
    %2176 = vmatpush.bf16.msra.mxu0 0
    %2177 = vmatpush.bf16.msra.mxu0 0
    %2178 = vmatpush.bf16.msra.mxu0 0
    %2179 = vmatpush.bf16.msra.mxu0 0
    %2180 = vmatpush.bf16.msra.mxu0 0
    %2181 = vmatpush.bf16.msra.mxu0 %v615
    %2182 = vmatpush.bf16.msra.mxu0 %v614
    %2183 = vmatmul.bf16.gmra.mxu0 %v2173
    %v2184 = vpop.f32.mrf.mxu0
    %v2185 = vadd.f32 0.0, %v2184
    %v2186 = vpop.f32.mrf.mxu0
    %2187 = vdwg.mxu0
    %2188 = vmatpush.bf16.msra.mxu0 0
    %2189 = vmatpush.bf16.msra.mxu0 0
    %2190 = vmatpush.bf16.msra.mxu0 0
    %2191 = vmatpush.bf16.msra.mxu0 0
    %2192 = vmatpush.bf16.msra.mxu0 0
    %2193 = vmatpush.bf16.msra.mxu0 0
    %2194 = vmatpush.bf16.msra.mxu0 %v640
    %2195 = vmatpush.bf16.msra.mxu0 %v639
    %2196 = vmatmul.bf16.gmra.mxu0 %v2173
    %v2197 = vpop.f32.mrf.mxu0
    %v2198 = vadd.f32 0.0, %v2197
    %v2199 = vpop.f32.mrf.mxu0
    %2200 = vdwg.mxu0
    %v2201 = vadd.f32 %v2142, %v2185
    %v2202 = vxor.u32 %v2201, 2147483648
    %v2203 = vmul.f32 %v2202, 1.442695
    %v2204 = vpow.pop %v2203
    %v2205 = vadd.f32 %v2204, 1.0
    %v2206 = vrcp.pop %v2205
    %v2207 = vmul.f32 %v2205, %v2206
    %v2208 = vsub.f32 1.0, %v2207
    %v2209 = vmul.f32 %v2206, %v2208
    %v2210 = vadd.f32 %v2206, %v2209
    %vm2211 = vweird.f32 %v2205
    %vm2212 = vweird.f32 %v2206
    %vm2213 = vmor %vm2211, %vm2212
    %v2214 = vsel %vm2213, %v2206, %v2210
    %v2215 = vand.u32 2147483647, %v2205
    %vm2216 = vcmp.eq.f32.partialorder %v2215, 8.507059e+37
    %v2217 = vand.u32 %v2205, 2147483648
    %v2218 = vor.u32 1.1754944e-38, %v2217
    %v2219 = vsel %vm2216, %v2218, %v2214
    %v2220 = vmul.f32 1.0, %v2219
    %2221 = vmatpush.bf16.msra.mxu0 0
    %2222 = vmatpush.bf16.msra.mxu0 0
    %2223 = vmatpush.bf16.msra.mxu0 0
    %2224 = vmatpush.bf16.msra.mxu0 0
    %2225 = vmatpush.bf16.msra.mxu0 0
    %2226 = vmatpush.bf16.msra.mxu0 0
    %2227 = vmatpush.bf16.msra.mxu0 %v685
    %2228 = vmatpush.bf16.msra.mxu0 %v684
    %2229 = vmatmul.bf16.gmra.mxu0 %v2173
    %v2230 = vpop.f32.mrf.mxu0
    %v2231 = vadd.f32 %v384, %v2230
    %v2232 = vpop.f32.mrf.mxu0
    %2233 = vdwg.mxu0
    %v2234 = vmul.f32 %v2220, %v2231
    %v2235 = vadd.f32 %v2168, %v2234
    %v2236 = vtanh.pop %v2235
    %v2237 = vadd.f32 %v2155, %v2198
    %v2238 = vxor.u32 %v2237, 2147483648
    %v2239 = vmul.f32 %v2238, 1.442695
    %v2240 = vpow.pop %v2239
    %v2241 = vadd.f32 %v2240, 1.0
    %v2242 = vrcp.pop %v2241
    %v2243 = vmul.f32 %v2241, %v2242
    %v2244 = vsub.f32 1.0, %v2243
    %v2245 = vmul.f32 %v2242, %v2244
    %v2246 = vadd.f32 %v2242, %v2245
    %vm2247 = vweird.f32 %v2241
    %vm2248 = vweird.f32 %v2242
    %vm2249 = vmor %vm2247, %vm2248
    %v2250 = vsel %vm2249, %v2242, %v2246
    %v2251 = vand.u32 2147483647, %v2241
    %vm2252 = vcmp.eq.f32.partialorder %v2251, 8.507059e+37
    %v2253 = vand.u32 %v2241, 2147483648
    %v2254 = vor.u32 1.1754944e-38, %v2253
    %v2255 = vsel %vm2252, %v2254, %v2250
    %v2256 = vmul.f32 1.0, %v2255
    %v2257 = vsub.f32 1.0, %v2256
    %v2258 = vmul.f32 %v2257, %v2236
    %v2259 = vmul.f32 %v2256, %v2041
    %v2260 = vadd.f32 %v2258, %v2259
    %vm2261 = vcmask 254976
    %2262 = vst.msk [vmem:[#allocation8] sm:$0x3] %vm2261, %v2127
    %s2263 = scalar_lea.vmem [#allocation8], 2
    %2264 = vst.msk [vmem:[%s2263] sm:$0x3] %vm2261, %v2260
    // Predicated region
    $region34: #{encoder_forward.1} parent=1 // pred_check
      _
    $region35: #{encoder_forward.1} parent=1 // pred_check_branch
      %2266 = sbr.rel (0) target = $region37
    $region36: #{encoder_forward.1} parent=1 // pred_region
      %2268 = vsyncadd [#allocation4], 0
      %s2269 = sshll.u32 [#allocation8], 4
      %s2270 = int_to_ptr.vmem [resolvable:$true] %s2269
      %s2271 = sshll.u32 %s5, 4
      %s2272 = int_to_ptr.hbm [resolvable:$true] %s2271
      %2277 = dma.vmem_to_hbm [thread:$0]  %s2270, 64, %s2272, [#allocation4], 32, 32, 2
    $region37: #{encoder_forward.1} parent=1 // pred_fallthru
      _
    // Predicated region
    $region38: #{encoder_forward.1} parent=1 // pred_check
      _
    $region39: #{encoder_forward.1} parent=1 // pred_check_branch
      %2279 = sbr.rel (0) target = $region41
    $region40: #{encoder_forward.1} parent=1 // pred_region
      %2281 = dma.done [#allocation4], 64
    $region41: #{encoder_forward.1} parent=1 // pred_fallthru
      _
    %2282 = vsyncpa [#allocation3], 1
    %2283 = vsyncpa [#allocation6], 1
    %2284 = vsyncpa [#allocation4], 1

</llo_original>
